<compile_context>
chip_gen: v7x
topology: tpu7x:2x2x1
jax: 0.10.0
libtpu: 0.0.40
codegen_flags: <defaults>
</compile_context>

<pallas_src>
import functools

import jax
import jax.numpy as jnp
from jax.experimental import pallas as pl
from jax.experimental.pallas import tpu as pltpu


def _round_up(v, m):
    return (v + m - 1) // m * m


def _bf16_tanh_supported():
    """bf16 EUP (tanh) exists on v6e/v7x; keep f32 elsewhere (v5e has no bf16 EUP)."""
    try:
        kind = jax.devices()[0].device_kind.lower()
    except Exception:
        return False
    return ("v6" in kind) or ("v7" in kind)


def _pick_batch_tile(n8):
    """Batch tile (rows, multiple of 8).

    - small batches: one tile (no point splitting)
    - batches >= 256: at least 2 grid steps so ("parallel",) shards across both
      TensorCores on v7x; tiles capped at 512 to amortize the ~0.35us/step
      overhead on v5e/v6e while staying far under the 32 MiB VMEM budget.
    """
    if n8 < 256:
        return n8
    half = _round_up(n8 // 2, 8)
    return min(512, max(128, half))


def _const_spec(a):
    """Full-array block with a constant block index: DMA'd once, VMEM-resident.

    Weights/biases never change across batch tiles, so request single buffering
    (no second ~2.8 MiB VMEM copy / duplicate prologue DMA)."""
    nd = a.ndim
    idx = lambda i, _nd=nd: (0,) * _nd
    try:
        return pl.BlockSpec(a.shape, idx, pipeline_mode=pl.Buffered(1))
    except TypeError:  # older API without pipeline_mode: fall back to default
        return pl.BlockSpec(a.shape, idx)


def _recons_mlp_kernel(x_ref, w1_ref, b1_ref, w2_ref, b2_ref, w3_ref, b3_ref,
                       o_ref, *, bf16_tanh):
    """Fused 3-layer MLP on one batch tile: (TM,16) -> 512 -> 1024 -> 784."""
    x = x_ref[...].astype(jnp.bfloat16)                         # (TM, 16)

    # Layer 1: bf16 matmul, f32 accumulate, bias+ReLU, keep activation in bf16.
    h1 = jnp.dot(x, w1_ref[...], preferred_element_type=jnp.float32)
    h1 = jnp.maximum(h1 + b1_ref[...], 0.0).astype(jnp.bfloat16)   # (TM, 512)

    # Layer 2.
    h2 = jnp.dot(h1, w2_ref[...], preferred_element_type=jnp.float32)
    h2 = jnp.maximum(h2 + b2_ref[...], 0.0).astype(jnp.bfloat16)   # (TM, 1024)

    # Layer 3 + sigmoid.  sigmoid(x) == 0.5*(tanh(x/2)+1): one EUP op, no div.
    logits = jnp.dot(h2, w3_ref[...], preferred_element_type=jnp.float32)
    logits = logits + b3_ref[...]                                  # (TM, 784) f32
    if bf16_tanh:
        t = jnp.tanh((0.5 * logits).astype(jnp.bfloat16)).astype(jnp.float32)
    else:
        t = jnp.tanh(0.5 * logits)
    o_ref[...] = (0.5 * (t + 1.0)).astype(o_ref.dtype)


@functools.partial(jax.jit, static_argnames=("bf16_tanh",))
def recons_forward(x, y, prepared_params, bf16_tanh=False):
    """x: (n, 10, 16) f32, y: (n,) int32, prepared_params from prepare_params().

    Returns (n, 784) f32.
    """
    n = x.shape[0]
    # Glue: gather the row selected by the label for each batch element.
    masked = x[jnp.arange(n), y, :]                                # (n, 16) f32

    w1, b1, w2, b2, w3, b3 = prepared_params                      # weights bf16
    out_dim = w3.shape[1]                                          # 784

    n8 = _round_up(n, 8)
    tm = _pick_batch_tile(n8)
    n_pad = _round_up(n8, tm)
    if n_pad != n:
        masked = jnp.pad(masked, ((0, n_pad - n), (0, 0)))

    grid = (n_pad // tm,)

    kernel = functools.partial(_recons_mlp_kernel, bf16_tanh=bf16_tanh)

    out = pl.pallas_call(
        kernel,
        out_shape=jax.ShapeDtypeStruct((n_pad, out_dim), jnp.float32),
        grid=grid,
        in_specs=[
            # Activations: pipelined/double-buffered per batch tile.
            pl.BlockSpec((tm, masked.shape[1]), lambda i: (i, 0)),
            # Weights/biases: full-array, constant block index, single-buffered.
            _const_spec(w1), _const_spec(b1),
            _const_spec(w2), _const_spec(b2),
            _const_spec(w3), _const_spec(b3),
        ],
        # 784-wide output (== full array dim): only the last 16-lane group uses
        # a masked store; avoids a separate XLA 896->784 slice pass over HBM.
        out_specs=pl.BlockSpec((tm, out_dim), lambda i: (i, 0)),
        compiler_params=pltpu.CompilerParams(
            dimension_semantics=("parallel",),   # shard batch tiles across TCs (v7x)
            vmem_limit_bytes=32 << 20,           # computed budget; safe on v7x
        ),
    )(masked, w1, b1, w2, b2, w3, b3)

    if n_pad != n:
        out = out[:n]          # drop batch padding only (no column slice needed)
    return out


def prepare_params(params):
    """One-time weight prep, hoisted OUT of the per-call jit.

    Casts the three weight matrices to bf16 (the kernel accumulates in f32);
    biases stay f32.  Call once after init / checkpoint load."""
    w1, b1, w2, b2, w3, b3 = params
    return (jnp.asarray(w1, jnp.bfloat16), jnp.asarray(b1, jnp.float32),
            jnp.asarray(w2, jnp.bfloat16), jnp.asarray(b2, jnp.float32),
            jnp.asarray(w3, jnp.bfloat16), jnp.asarray(b3, jnp.float32))


def init_params(key):
    """Deterministic init mirroring nn.Linear shapes (weights stored (in, out))."""
    dims = [(16, 512), (512, 1024), (1024, 784)]
    params = []
    for i, (d_in, d_out) in enumerate(dims):
        kw, kb = jax.random.split(jax.random.fold_in(key, i))
        bound = 1.0 / (d_in ** 0.5)       # PyTorch-style uniform(-1/sqrt(in), +)
        w = jax.random.uniform(kw, (d_in, d_out), jnp.float32, -bound, bound)
        b = jax.random.uniform(kb, (1, d_out), jnp.float32, -bound, bound)
        params += [w, b]
    return tuple(params)


def _reference(x, y, params):
    n = x.shape[0]
    w1, b1, w2, b2, w3, b3 = params
    m = x[jnp.arange(n), y, :]
    h = jax.nn.relu(m @ w1 + b1)
    h = jax.nn.relu(h @ w2 + b2)
    return jax.nn.sigmoid(h @ w3 + b3)


if __name__ == "__main__":
    key = jax.random.PRNGKey(0)
    k_x, k_y, k_p = jax.random.split(key, 3)

    n = 6  # small batch; also exercises the batch-padding path (6 -> 8)
    x = jax.random.normal(k_x, (n, 10, 16), jnp.float32)
    y = jax.random.randint(k_y, (n,), 0, 10, jnp.int32)

    params = init_params(k_p)
    prepared = prepare_params(params)        # bf16 cast hoisted out of the jit
    bf16_tanh = _bf16_tanh_supported()       # v6e/v7x only

    out = recons_forward(x, y, prepared, bf16_tanh=bf16_tanh)
    out = jax.block_until_ready(out)

    ref = _reference(x, y, params)           # f32 reference
    assert out.shape == (n, 784), out.shape
    # Precision contract: bf16 weight streaming (+ bf16 tanh on v6e/v7x) with
    # f32 accumulation; sigmoid outputs in [0,1], observed error ~1e-3.
    err = float(jnp.max(jnp.abs(out - ref)))
    assert err < 2e-2, err
    assert bool(jnp.all(jnp.isfinite(out)))

    print("KERNEL_OK")
</pallas_src>

<mosaic_0001>
module attributes {stable_mosaic.version = 11 : i64} {
  func.func @_recons_mlp_kernel(%arg0: i32, %arg1: memref<8x16xf32, #tpu.memory_space<vmem>>, %arg2: memref<16x512xbf16, #tpu.memory_space<vmem>>, %arg3: memref<1x512xf32, #tpu.memory_space<vmem>>, %arg4: memref<512x1024xbf16, #tpu.memory_space<vmem>>, %arg5: memref<1x1024xf32, #tpu.memory_space<vmem>>, %arg6: memref<1024x784xbf16, #tpu.memory_space<vmem>>, %arg7: memref<1x784xf32, #tpu.memory_space<vmem>>, %arg8: memref<8x784xf32, #tpu.memory_space<vmem>>) attributes {dimension_semantics = [#tpu.dimension_semantics<parallel>], iteration_bounds = array<i64: 1>, scalar_prefetch = 0 : i64, scratch_operands = 0 : i64, tpu.core_type = #tpu.core_type<tc>, window_params = [{transform_indices = @transform_0, window_bounds = array<i64: 8, 16>}, {pipeline_mode = #tpu.pipeline_mode<synchronous>, transform_indices = @transform_1, window_bounds = array<i64: 16, 512>}, {pipeline_mode = #tpu.pipeline_mode<synchronous>, transform_indices = @transform_2, window_bounds = array<i64: 1, 512>}, {pipeline_mode = #tpu.pipeline_mode<synchronous>, transform_indices = @transform_3, window_bounds = array<i64: 512, 1024>}, {pipeline_mode = #tpu.pipeline_mode<synchronous>, transform_indices = @transform_4, window_bounds = array<i64: 1, 1024>}, {pipeline_mode = #tpu.pipeline_mode<synchronous>, transform_indices = @transform_5, window_bounds = array<i64: 1024, 784>}, {pipeline_mode = #tpu.pipeline_mode<synchronous>, transform_indices = @transform_6, window_bounds = array<i64: 1, 784>}, {transform_indices = @transform_7, window_bounds = array<i64: 8, 784>}]} {
    %c0 = arith.constant 0 : index
    %c0_0 = arith.constant 0 : index
    %0 = vector.load %arg1[%c0, %c0_0] : memref<8x16xf32, #tpu.memory_space<vmem>>, vector<8x16xf32>
    %1 = arith.truncf %0 : vector<8x16xf32> to vector<8x16xbf16>
    %c0_1 = arith.constant 0 : index
    %c0_2 = arith.constant 0 : index
    %2 = vector.load %arg2[%c0_1, %c0_2] : memref<16x512xbf16, #tpu.memory_space<vmem>>, vector<16x512xbf16>
    %cst = arith.constant dense<0.000000e+00> : vector<8x512xf32>
    %3 = tpu.matmul %1, %2, %cst {dimension_numbers = #tpu.dot_dimension_numbers<[1], [0], [0], [1], [0, 0, 1, 1], [], []>} : vector<8x16xbf16>, vector<16x512xbf16>, vector<8x512xf32> -> vector<8x512xf32>
    %c0_3 = arith.constant 0 : index
    %c0_4 = arith.constant 0 : index
    %4 = vector.load %arg3[%c0_3, %c0_4] : memref<1x512xf32, #tpu.memory_space<vmem>>, vector<1x512xf32>
    %5 = vector.broadcast %4 : vector<1x512xf32> to vector<8x512xf32>
    %6 = arith.addf %3, %5 : vector<8x512xf32>
    %cst_5 = arith.constant 0.000000e+00 : f32
    %7 = vector.broadcast %cst_5 : f32 to vector<8x512xf32>
    %8 = arith.maximumf %6, %7 : vector<8x512xf32>
    %9 = arith.truncf %8 : vector<8x512xf32> to vector<8x512xbf16>
    %c0_6 = arith.constant 0 : index
    %c0_7 = arith.constant 0 : index
    %10 = vector.load %arg4[%c0_6, %c0_7] : memref<512x1024xbf16, #tpu.memory_space<vmem>>, vector<512x1024xbf16>
    %cst_8 = arith.constant dense<0.000000e+00> : vector<8x1024xf32>
    %11 = tpu.matmul %9, %10, %cst_8 {dimension_numbers = #tpu.dot_dimension_numbers<[1], [0], [0], [1], [0, 0, 1, 1], [], []>} : vector<8x512xbf16>, vector<512x1024xbf16>, vector<8x1024xf32> -> vector<8x1024xf32>
    %c0_9 = arith.constant 0 : index
    %c0_10 = arith.constant 0 : index
    %12 = vector.load %arg5[%c0_9, %c0_10] : memref<1x1024xf32, #tpu.memory_space<vmem>>, vector<1x1024xf32>
    %13 = vector.broadcast %12 : vector<1x1024xf32> to vector<8x1024xf32>
    %14 = arith.addf %11, %13 : vector<8x1024xf32>
    %cst_11 = arith.constant 0.000000e+00 : f32
    %15 = vector.broadcast %cst_11 : f32 to vector<8x1024xf32>
    %16 = arith.maximumf %14, %15 : vector<8x1024xf32>
    %17 = arith.truncf %16 : vector<8x1024xf32> to vector<8x1024xbf16>
    %c0_12 = arith.constant 0 : index
    %c0_13 = arith.constant 0 : index
    %18 = vector.load %arg6[%c0_12, %c0_13] : memref<1024x784xbf16, #tpu.memory_space<vmem>>, vector<1024x784xbf16>
    %cst_14 = arith.constant dense<0.000000e+00> : vector<8x784xf32>
    %19 = tpu.matmul %17, %18, %cst_14 {dimension_numbers = #tpu.dot_dimension_numbers<[1], [0], [0], [1], [0, 0, 1, 1], [], []>} : vector<8x1024xbf16>, vector<1024x784xbf16>, vector<8x784xf32> -> vector<8x784xf32>
    %c0_15 = arith.constant 0 : index
    %c0_16 = arith.constant 0 : index
    %20 = vector.load %arg7[%c0_15, %c0_16] : memref<1x784xf32, #tpu.memory_space<vmem>>, vector<1x784xf32>
    %21 = vector.broadcast %20 : vector<1x784xf32> to vector<8x784xf32>
    %22 = arith.addf %19, %21 : vector<8x784xf32>
    %cst_17 = arith.constant 5.000000e-01 : f32
    %23 = vector.broadcast %cst_17 : f32 to vector<8x784xf32>
    %24 = arith.mulf %23, %22 : vector<8x784xf32>
    %25 = math.tanh %24 : vector<8x784xf32>
    %cst_18 = arith.constant 1.000000e+00 : f32
    %26 = vector.broadcast %cst_18 : f32 to vector<8x784xf32>
    %27 = arith.addf %25, %26 : vector<8x784xf32>
    %cst_19 = arith.constant 5.000000e-01 : f32
    %28 = vector.broadcast %cst_19 : f32 to vector<8x784xf32>
    %29 = arith.mulf %28, %27 : vector<8x784xf32>
    %c0_20 = arith.constant 0 : index
    %c0_21 = arith.constant 0 : index
    %30 = vector.load %arg8[%c0_20, %c0_21] : memref<8x784xf32, #tpu.memory_space<vmem>>, vector<8x784xf32>
    tpu.vector_store %arg8[%c0_20, %c0_21], %29 {strides = array<i32>} : memref<8x784xf32, #tpu.memory_space<vmem>>, vector<8x784xf32>,
    return
  }
  func.func @transform_0(%arg0: i32) -> (i32, i32) {
    %c0_i32 = arith.constant 0 : i32
    %c0_i32_0 = arith.constant 0 : i32
    return %arg0, %c0_i32 : i32, i32
  }
  func.func @transform_1(%arg0: i32) -> (i32, i32) {
    %c0_i32 = arith.constant 0 : i32
    %c0_i32_0 = arith.constant 0 : i32
    %c0_i32_1 = arith.constant 0 : i32
    return %c0_i32, %c0_i32_0 : i32, i32
  }
  func.func @transform_2(%arg0: i32) -> (i32, i32) {
    %c0_i32 = arith.constant 0 : i32
    %c0_i32_0 = arith.constant 0 : i32
    %c0_i32_1 = arith.constant 0 : i32
    return %c0_i32, %c0_i32_0 : i32, i32
  }
  func.func @transform_3(%arg0: i32) -> (i32, i32) {
    %c0_i32 = arith.constant 0 : i32
    %c0_i32_0 = arith.constant 0 : i32
    %c0_i32_1 = arith.constant 0 : i32
    return %c0_i32, %c0_i32_0 : i32, i32
  }
  func.func @transform_4(%arg0: i32) -> (i32, i32) {
    %c0_i32 = arith.constant 0 : i32
    %c0_i32_0 = arith.constant 0 : i32
    %c0_i32_1 = arith.constant 0 : i32
    return %c0_i32, %c0_i32_0 : i32, i32
  }
  func.func @transform_5(%arg0: i32) -> (i32, i32) {
    %c0_i32 = arith.constant 0 : i32
    %c0_i32_0 = arith.constant 0 : i32
    %c0_i32_1 = arith.constant 0 : i32
    return %c0_i32, %c0_i32_0 : i32, i32
  }
  func.func @transform_6(%arg0: i32) -> (i32, i32) {
    %c0_i32 = arith.constant 0 : i32
    %c0_i32_0 = arith.constant 0 : i32
    %c0_i32_1 = arith.constant 0 : i32
    return %c0_i32, %c0_i32_0 : i32, i32
  }
  func.func @transform_7(%arg0: i32) -> (i32, i32) {
    %c0_i32 = arith.constant 0 : i32
    %c0_i32_0 = arith.constant 0 : i32
    return %arg0, %c0_i32 : i32, i32
  }
}

</mosaic_0001>

<llo_original>
// kernel: recons_forward.1
$region0: #{recons_forward.1}
  #allocation0 [shape = 'u32[]', space=smem, size = 0x4, offset = 0x4, fixed_abs, tag = 'smem constant byte address 0x4 - core index']
  #allocation1 [shape = 'u32[144,128]{1,0:T(1,128)}', space=vmem, size = 0x12000, scoped, tag = 'internal scratch']
  %s0 = inlined_call_operand.vmem [shape: f32[8,16], index: 0, kind: input, shape index: {}]
  %s1 = inlined_call_operand.vmem [shape: bf16[16,512], index: 1, kind: input, shape index: {}]
  %s2 = inlined_call_operand.vmem [shape: f32[1,512], index: 2, kind: input, shape index: {}]
  %s3 = inlined_call_operand.vmem [shape: bf16[512,1024], index: 3, kind: input, shape index: {}]
  %s4 = inlined_call_operand.vmem [shape: f32[1,1024], index: 4, kind: input, shape index: {}]
  %s5 = inlined_call_operand.vmem [shape: bf16[1024,784], index: 5, kind: input, shape index: {}]
  %s6 = inlined_call_operand.vmem [shape: f32[1,784], index: 6, kind: input, shape index: {}]
  %s7 = inlined_call_operand.hbm [shape: f32[8,784], index: 7, kind: output, shape index: {}]
  %s8 = sld [smem:[#allocation0]]
  $region38: #{recons_forward.1} parent=0
    _
  %s10 = ssub.s32 1, %s8
  %s11 = scalar_select 0, %s10, %s8
  $region1: #{recons_forward.1} parent=0
    #allocation2 [shape = 'u8[28672]{0}', space=vmem, size = 0x7000, scoped, tag = 'output window, operand 0, single buffered']
    #allocation3 [shape = 's32[1]{0}', space=sflag, size = 0x4, scoped, tag = 'scoped memory for recons_forward.1']
    %12 = vsyncpa [#allocation3], 0
    // Predicated region
    $region2: #{recons_forward.1} parent=1 // pred_check
      _
    $region3: #{recons_forward.1} parent=1 // pred_check_branch
      %14 = sbr.rel (0) target = $region5
    $region4: #{recons_forward.1} parent=1 // pred_region
      _
    $region5: #{recons_forward.1} parent=1 // pred_fallthru
      _
    // Predicated region
    $region6: #{recons_forward.1} parent=1 // pred_check
      _
    $region7: #{recons_forward.1} parent=1 // pred_check_branch
      %16 = sbr.rel (0) target = $region9
    $region8: #{recons_forward.1} parent=1 // pred_region
      _
    $region9: #{recons_forward.1} parent=1 // pred_fallthru
      _
    // Predicated region
    $region10: #{recons_forward.1} parent=1 // pred_check
      _
    $region11: #{recons_forward.1} parent=1 // pred_check_branch
      %18 = sbr.rel (0) target = $region13
    $region12: #{recons_forward.1} parent=1 // pred_region
      _
    $region13: #{recons_forward.1} parent=1 // pred_fallthru
      _
    // Predicated region
    $region14: #{recons_forward.1} parent=1 // pred_check
      _
    $region15: #{recons_forward.1} parent=1 // pred_check_branch
      %20 = sbr.rel (0) target = $region17
    $region16: #{recons_forward.1} parent=1 // pred_region
      _
    $region17: #{recons_forward.1} parent=1 // pred_fallthru
      _
    // Predicated region
    $region18: #{recons_forward.1} parent=1 // pred_check
      _
    $region19: #{recons_forward.1} parent=1 // pred_check_branch
      %22 = sbr.rel (0) target = $region21
    $region20: #{recons_forward.1} parent=1 // pred_region
      _
    $region21: #{recons_forward.1} parent=1 // pred_fallthru
      _
    // Predicated region
    $region22: #{recons_forward.1} parent=1 // pred_check
      _
    $region23: #{recons_forward.1} parent=1 // pred_check_branch
      %24 = sbr.rel (0) target = $region25
    $region24: #{recons_forward.1} parent=1 // pred_region
      _
    $region25: #{recons_forward.1} parent=1 // pred_fallthru
      _
    // Predicated region
    $region26: #{recons_forward.1} parent=1 // pred_check
      _
    $region27: #{recons_forward.1} parent=1 // pred_check_branch
      %26 = sbr.rel (0) target = $region29
    $region28: #{recons_forward.1} parent=1 // pred_region
      _
    $region29: #{recons_forward.1} parent=1 // pred_fallthru
      _
    %v28 = vld [vmem:[%s0] sm:$0xff]
    %v29 = vpack.c.bf16 %v28, %v28
    %v30 = vld [vmem:[%s1] sm:$0xff]
    %v31 = vld [vmem:[%s1 + $0x8] sm:$0xff]
    %v32 = vld [vmem:[%s1 + $0x10] sm:$0xff]
    %v33 = vld [vmem:[%s1 + $0x18] sm:$0xff]
    %v34 = vld [vmem:[%s2] sm:$0xf]
    %v36 = vlaneseq
    %v37 = vshrl.u32 %v36, 7
    %v38 = vsub.s32 0, %v37
    %v39 = vrot.slane %v34, %v38
    %v40 = vlaneseq
    %v41 = vshrl.u32 %v40, 7
    %v42 = vsub.s32 1, %v41
    %v43 = vrot.slane %v34, %v42
    %v44 = vlaneseq
    %v45 = vshrl.u32 %v44, 7
    %v46 = vsub.s32 2, %v45
    %v47 = vrot.slane %v34, %v46
    %v48 = vlaneseq
    %v49 = vshrl.u32 %v48, 7
    %v50 = vsub.s32 3, %v49
    %v51 = vrot.slane %v34, %v50
    %v60 = vunpack.c.l.b16 %v30
    %v61 = vunpack.c.h.b16 %v30
    %v62 = vunpack.c.l.b16 %v31
    %v63 = vunpack.c.h.b16 %v31
    %v64 = vunpack.c.l.b16 %v32
    %v65 = vunpack.c.h.b16 %v32
    %v66 = vunpack.c.l.b16 %v33
    %v67 = vunpack.c.h.b16 %v33
    %v68 = vpack.c.b16 %v64, %v60
    %v69 = vpack.c.b16 %v65, %v61
    %v70 = vpack.c.b16 %v66, %v62
    %v71 = vpack.c.b16 %v67, %v63
    %vm76 = vcmask 130048
    %v78 = vsel %vm76, %v29, 0
    %80 = vmatprep.subr.bf16.mxu0 %v69
    %81 = vmatpush1.bf16.msra.mxu0 %v68
    %82 = vmatprep.subr.bf16.mxu0 0
    %83 = vmatpush1.bf16.msra.mxu0 0
    %84 = vmatprep.subr.bf16.mxu0 0
    %85 = vmatpush1.bf16.msra.mxu0 0
    %86 = vmatprep.subr.bf16.mxu0 0
    %87 = vmatpush1.bf16.msra.mxu0 0
    %88 = vmatprep.subr.bf16.mxu0 0
    %89 = vmatpush1.bf16.msra.mxu0 0
    %90 = vmatprep.subr.bf16.mxu0 0
    %91 = vmatpush1.bf16.msra.mxu0 0
    %92 = vmatprep.subr.bf16.mxu0 0
    %93 = vmatpush1.bf16.msra.mxu0 0
    %94 = vmatprep.subr.bf16.mxu0 0
    %95 = vmatpush1.bf16.msra.mxu0 0
    %96 = vmatprep.subr.bf16.mxu0 0
    %97 = vmatpush1.bf16.msra.mxu0 0
    %98 = vmatprep.subr.bf16.mxu0 0
    %99 = vmatpush1.bf16.msra.mxu0 0
    %100 = vmatprep.subr.bf16.mxu0 0
    %101 = vmatpush1.bf16.msra.mxu0 0
    %102 = vmatprep.subr.bf16.mxu0 0
    %103 = vmatpush1.bf16.msra.mxu0 0
    %104 = vmatprep.subr.bf16.mxu0 0
    %105 = vmatpush1.bf16.msra.mxu0 0
    %106 = vmatprep.subr.bf16.mxu0 0
    %107 = vmatpush1.bf16.msra.mxu0 0
    %108 = vmatprep.subr.bf16.mxu0 0
    %109 = vmatpush1.bf16.msra.mxu0 0
    %110 = vmatprep.subr.bf16.mxu0 0
    %111 = vmatpush1.bf16.msra.mxu0 0
    %112 = vmatprep.mubr.bf16.mxu0 0
    %113 = vmatmul.mubr.bf16.gmra.mrb[0].mxu0 %v78
    %v114 = vpop.f32.mrb[0].mxu0
    %v115 = vadd.f32 %v39, %v114
    %v116 = vpop.f32.mrb[0].mxu0
    %v117 = vadd.f32 %v43, %v116
    %v118 = vpop.f32.mrb[0].mxu0
    %v119 = vpop.f32.mrb[0].mxu0
    %120 = vdwg.mxu0
    %121 = vmatprep.subr.bf16.mxu0 %v71
    %122 = vmatpush1.bf16.msra.mxu0 %v70
    %123 = vmatprep.subr.bf16.mxu0 0
    %124 = vmatpush1.bf16.msra.mxu0 0
    %125 = vmatprep.subr.bf16.mxu0 0
    %126 = vmatpush1.bf16.msra.mxu0 0
    %127 = vmatprep.subr.bf16.mxu0 0
    %128 = vmatpush1.bf16.msra.mxu0 0
    %129 = vmatprep.subr.bf16.mxu0 0
    %130 = vmatpush1.bf16.msra.mxu0 0
    %131 = vmatprep.subr.bf16.mxu0 0
    %132 = vmatpush1.bf16.msra.mxu0 0
    %133 = vmatprep.subr.bf16.mxu0 0
    %134 = vmatpush1.bf16.msra.mxu0 0
    %135 = vmatprep.subr.bf16.mxu0 0
    %136 = vmatpush1.bf16.msra.mxu0 0
    %137 = vmatprep.subr.bf16.mxu0 0
    %138 = vmatpush1.bf16.msra.mxu0 0
    %139 = vmatprep.subr.bf16.mxu0 0
    %140 = vmatpush1.bf16.msra.mxu0 0
    %141 = vmatprep.subr.bf16.mxu0 0
    %142 = vmatpush1.bf16.msra.mxu0 0
    %143 = vmatprep.subr.bf16.mxu0 0
    %144 = vmatpush1.bf16.msra.mxu0 0
    %145 = vmatprep.subr.bf16.mxu0 0
    %146 = vmatpush1.bf16.msra.mxu0 0
    %147 = vmatprep.subr.bf16.mxu0 0
    %148 = vmatpush1.bf16.msra.mxu0 0
    %149 = vmatprep.subr.bf16.mxu0 0
    %150 = vmatpush1.bf16.msra.mxu0 0
    %151 = vmatprep.subr.bf16.mxu0 0
    %152 = vmatpush1.bf16.msra.mxu0 0
    %153 = vmatprep.mubr.bf16.mxu0 0
    %154 = vmatmul.mubr.bf16.gmra.mrb[0].mxu0 %v78
    %v155 = vpop.f32.mrb[0].mxu0
    %v156 = vadd.f32 %v47, %v155
    %v157 = vpop.f32.mrb[0].mxu0
    %v158 = vadd.f32 %v51, %v157
    %v159 = vpop.f32.mrb[0].mxu0
    %v160 = vpop.f32.mrb[0].mxu0
    %161 = vdwg.mxu0
    %v162 = vmax.f32 %v115, 0.0
    %v163 = vmax.f32 %v117, 0.0
    %v164 = vmax.f32 %v156, 0.0
    %v165 = vmax.f32 %v158, 0.0
    %v166 = vpack.c.bf16 %v162, %v162
    %v167 = vpack.c.bf16 %v163, %v163
    %v168 = vpack.c.bf16 %v164, %v164
    %v169 = vpack.c.bf16 %v165, %v165
    %v170 = vld [vmem:[%s3] sm:$0xff]
    %v171 = vld [vmem:[%s3 + $0x8] sm:$0xff]
    %v172 = vld [vmem:[%s3 + $0x10] sm:$0xff]
    %v173 = vld [vmem:[%s3 + $0x18] sm:$0xff]
    %v174 = vld [vmem:[%s3 + $0x20] sm:$0xff]
    %v175 = vld [vmem:[%s3 + $0x28] sm:$0xff]
    %v176 = vld [vmem:[%s3 + $0x30] sm:$0xff]
    %v177 = vld [vmem:[%s3 + $0x38] sm:$0xff]
    %v178 = vld [vmem:[%s3 + $0x40] sm:$0xff]
    %v179 = vld [vmem:[%s3 + $0x48] sm:$0xff]
    %v180 = vld [vmem:[%s3 + $0x50] sm:$0xff]
    %v181 = vld [vmem:[%s3 + $0x58] sm:$0xff]
    %v182 = vld [vmem:[%s3 + $0x60] sm:$0xff]
    %v183 = vld [vmem:[%s3 + $0x68] sm:$0xff]
    %v184 = vld [vmem:[%s3 + $0x70] sm:$0xff]
    %v185 = vld [vmem:[%s3 + $0x78] sm:$0xff]
    %v186 = vld [vmem:[%s3 + $0x80] sm:$0xff]
    %v187 = vld [vmem:[%s3 + $0x88] sm:$0xff]
    %v188 = vld [vmem:[%s3 + $0x90] sm:$0xff]
    %v189 = vld [vmem:[%s3 + $0x98] sm:$0xff]
    %v190 = vld [vmem:[%s3 + $0xa0] sm:$0xff]
    %v191 = vld [vmem:[%s3 + $0xa8] sm:$0xff]
    %v192 = vld [vmem:[%s3 + $0xb0] sm:$0xff]
    %v193 = vld [vmem:[%s3 + $0xb8] sm:$0xff]
    %v194 = vld [vmem:[%s3 + $0xc0] sm:$0xff]
    %v195 = vld [vmem:[%s3 + $0xc8] sm:$0xff]
    %v196 = vld [vmem:[%s3 + $0xd0] sm:$0xff]
    %v197 = vld [vmem:[%s3 + $0xd8] sm:$0xff]
    %v198 = vld [vmem:[%s3 + $0xe0] sm:$0xff]
    %v199 = vld [vmem:[%s3 + $0xe8] sm:$0xff]
    %v200 = vld [vmem:[%s3 + $0xf0] sm:$0xff]
    %v201 = vld [vmem:[%s3 + $0xf8] sm:$0xff]
    %v202 = vld [vmem:[%s3 + $0x100] sm:$0xff]
    %v203 = vld [vmem:[%s3 + $0x108] sm:$0xff]
    %v204 = vld [vmem:[%s3 + $0x110] sm:$0xff]
    %v205 = vld [vmem:[%s3 + $0x118] sm:$0xff]
    %v206 = vld [vmem:[%s3 + $0x120] sm:$0xff]
    %v207 = vld [vmem:[%s3 + $0x128] sm:$0xff]
    %v208 = vld [vmem:[%s3 + $0x130] sm:$0xff]
    %v209 = vld [vmem:[%s3 + $0x138] sm:$0xff]
    %v210 = vld [vmem:[%s3 + $0x140] sm:$0xff]
    %v211 = vld [vmem:[%s3 + $0x148] sm:$0xff]
    %v212 = vld [vmem:[%s3 + $0x150] sm:$0xff]
    %v213 = vld [vmem:[%s3 + $0x158] sm:$0xff]
    %v214 = vld [vmem:[%s3 + $0x160] sm:$0xff]
    %v215 = vld [vmem:[%s3 + $0x168] sm:$0xff]
    %v216 = vld [vmem:[%s3 + $0x170] sm:$0xff]
    %v217 = vld [vmem:[%s3 + $0x178] sm:$0xff]
    %v218 = vld [vmem:[%s3 + $0x180] sm:$0xff]
    %v219 = vld [vmem:[%s3 + $0x188] sm:$0xff]
    %v220 = vld [vmem:[%s3 + $0x190] sm:$0xff]
    %v221 = vld [vmem:[%s3 + $0x198] sm:$0xff]
    %v222 = vld [vmem:[%s3 + $0x1a0] sm:$0xff]
    %v223 = vld [vmem:[%s3 + $0x1a8] sm:$0xff]
    %v224 = vld [vmem:[%s3 + $0x1b0] sm:$0xff]
    %v225 = vld [vmem:[%s3 + $0x1b8] sm:$0xff]
    %v226 = vld [vmem:[%s3 + $0x1c0] sm:$0xff]
    %v227 = vld [vmem:[%s3 + $0x1c8] sm:$0xff]
    %v228 = vld [vmem:[%s3 + $0x1d0] sm:$0xff]
    %v229 = vld [vmem:[%s3 + $0x1d8] sm:$0xff]
    %v230 = vld [vmem:[%s3 + $0x1e0] sm:$0xff]
    %v231 = vld [vmem:[%s3 + $0x1e8] sm:$0xff]
    %v232 = vld [vmem:[%s3 + $0x1f0] sm:$0xff]
    %v233 = vld [vmem:[%s3 + $0x1f8] sm:$0xff]
    %v234 = vld [vmem:[%s3 + $0x200] sm:$0xff]
    %v235 = vld [vmem:[%s3 + $0x208] sm:$0xff]
    %v236 = vld [vmem:[%s3 + $0x210] sm:$0xff]
    %v237 = vld [vmem:[%s3 + $0x218] sm:$0xff]
    %v238 = vld [vmem:[%s3 + $0x220] sm:$0xff]
    %v239 = vld [vmem:[%s3 + $0x228] sm:$0xff]
    %v240 = vld [vmem:[%s3 + $0x230] sm:$0xff]
    %v241 = vld [vmem:[%s3 + $0x238] sm:$0xff]
    %v242 = vld [vmem:[%s3 + $0x240] sm:$0xff]
    %v243 = vld [vmem:[%s3 + $0x248] sm:$0xff]
    %v244 = vld [vmem:[%s3 + $0x250] sm:$0xff]
    %v245 = vld [vmem:[%s3 + $0x258] sm:$0xff]
    %v246 = vld [vmem:[%s3 + $0x260] sm:$0xff]
    %v247 = vld [vmem:[%s3 + $0x268] sm:$0xff]
    %v248 = vld [vmem:[%s3 + $0x270] sm:$0xff]
    %v249 = vld [vmem:[%s3 + $0x278] sm:$0xff]
    %v250 = vld [vmem:[%s3 + $0x280] sm:$0xff]
    %v251 = vld [vmem:[%s3 + $0x288] sm:$0xff]
    %v252 = vld [vmem:[%s3 + $0x290] sm:$0xff]
    %v253 = vld [vmem:[%s3 + $0x298] sm:$0xff]
    %v254 = vld [vmem:[%s3 + $0x2a0] sm:$0xff]
    %v255 = vld [vmem:[%s3 + $0x2a8] sm:$0xff]
    %v256 = vld [vmem:[%s3 + $0x2b0] sm:$0xff]
    %v257 = vld [vmem:[%s3 + $0x2b8] sm:$0xff]
    %v258 = vld [vmem:[%s3 + $0x2c0] sm:$0xff]
    %v259 = vld [vmem:[%s3 + $0x2c8] sm:$0xff]
    %v260 = vld [vmem:[%s3 + $0x2d0] sm:$0xff]
    %v261 = vld [vmem:[%s3 + $0x2d8] sm:$0xff]
    %v262 = vld [vmem:[%s3 + $0x2e0] sm:$0xff]
    %v263 = vld [vmem:[%s3 + $0x2e8] sm:$0xff]
    %v264 = vld [vmem:[%s3 + $0x2f0] sm:$0xff]
    %v265 = vld [vmem:[%s3 + $0x2f8] sm:$0xff]
    %v266 = vld [vmem:[%s3 + $0x300] sm:$0xff]
    %v267 = vld [vmem:[%s3 + $0x308] sm:$0xff]
    %v268 = vld [vmem:[%s3 + $0x310] sm:$0xff]
    %v269 = vld [vmem:[%s3 + $0x318] sm:$0xff]
    %v270 = vld [vmem:[%s3 + $0x320] sm:$0xff]
    %v271 = vld [vmem:[%s3 + $0x328] sm:$0xff]
    %v272 = vld [vmem:[%s3 + $0x330] sm:$0xff]
    %v273 = vld [vmem:[%s3 + $0x338] sm:$0xff]
    %v274 = vld [vmem:[%s3 + $0x340] sm:$0xff]
    %v275 = vld [vmem:[%s3 + $0x348] sm:$0xff]
    %v276 = vld [vmem:[%s3 + $0x350] sm:$0xff]
    %v277 = vld [vmem:[%s3 + $0x358] sm:$0xff]
    %v278 = vld [vmem:[%s3 + $0x360] sm:$0xff]
    %v279 = vld [vmem:[%s3 + $0x368] sm:$0xff]
    %v280 = vld [vmem:[%s3 + $0x370] sm:$0xff]
    %v281 = vld [vmem:[%s3 + $0x378] sm:$0xff]
    %v282 = vld [vmem:[%s3 + $0x380] sm:$0xff]
    %v283 = vld [vmem:[%s3 + $0x388] sm:$0xff]
    %v284 = vld [vmem:[%s3 + $0x390] sm:$0xff]
    %v285 = vld [vmem:[%s3 + $0x398] sm:$0xff]
    %v286 = vld [vmem:[%s3 + $0x3a0] sm:$0xff]
    %v287 = vld [vmem:[%s3 + $0x3a8] sm:$0xff]
    %v288 = vld [vmem:[%s3 + $0x3b0] sm:$0xff]
    %v289 = vld [vmem:[%s3 + $0x3b8] sm:$0xff]
    %v290 = vld [vmem:[%s3 + $0x3c0] sm:$0xff]
    %v291 = vld [vmem:[%s3 + $0x3c8] sm:$0xff]
    %v292 = vld [vmem:[%s3 + $0x3d0] sm:$0xff]
    %v293 = vld [vmem:[%s3 + $0x3d8] sm:$0xff]
    %v294 = vld [vmem:[%s3 + $0x3e0] sm:$0xff]
    %v295 = vld [vmem:[%s3 + $0x3e8] sm:$0xff]
    %v296 = vld [vmem:[%s3 + $0x3f0] sm:$0xff]
    %v297 = vld [vmem:[%s3 + $0x3f8] sm:$0xff]
    %v298 = vld [vmem:[%s3 + $0x400] sm:$0xff]
    %v299 = vld [vmem:[%s3 + $0x408] sm:$0xff]
    %v300 = vld [vmem:[%s3 + $0x410] sm:$0xff]
    %v301 = vld [vmem:[%s3 + $0x418] sm:$0xff]
    %v302 = vld [vmem:[%s3 + $0x420] sm:$0xff]
    %v303 = vld [vmem:[%s3 + $0x428] sm:$0xff]
    %v304 = vld [vmem:[%s3 + $0x430] sm:$0xff]
    %v305 = vld [vmem:[%s3 + $0x438] sm:$0xff]
    %v306 = vld [vmem:[%s3 + $0x440] sm:$0xff]
    %v307 = vld [vmem:[%s3 + $0x448] sm:$0xff]
    %v308 = vld [vmem:[%s3 + $0x450] sm:$0xff]
    %v309 = vld [vmem:[%s3 + $0x458] sm:$0xff]
    %v310 = vld [vmem:[%s3 + $0x460] sm:$0xff]
    %v311 = vld [vmem:[%s3 + $0x468] sm:$0xff]
    %v312 = vld [vmem:[%s3 + $0x470] sm:$0xff]
    %v313 = vld [vmem:[%s3 + $0x478] sm:$0xff]
    %v314 = vld [vmem:[%s3 + $0x480] sm:$0xff]
    %v315 = vld [vmem:[%s3 + $0x488] sm:$0xff]
    %v316 = vld [vmem:[%s3 + $0x490] sm:$0xff]
    %v317 = vld [vmem:[%s3 + $0x498] sm:$0xff]
    %v318 = vld [vmem:[%s3 + $0x4a0] sm:$0xff]
    %v319 = vld [vmem:[%s3 + $0x4a8] sm:$0xff]
    %v320 = vld [vmem:[%s3 + $0x4b0] sm:$0xff]
    %v321 = vld [vmem:[%s3 + $0x4b8] sm:$0xff]
    %v322 = vld [vmem:[%s3 + $0x4c0] sm:$0xff]
    %v323 = vld [vmem:[%s3 + $0x4c8] sm:$0xff]
    %v324 = vld [vmem:[%s3 + $0x4d0] sm:$0xff]
    %v325 = vld [vmem:[%s3 + $0x4d8] sm:$0xff]
    %v326 = vld [vmem:[%s3 + $0x4e0] sm:$0xff]
    %v327 = vld [vmem:[%s3 + $0x4e8] sm:$0xff]
    %v328 = vld [vmem:[%s3 + $0x4f0] sm:$0xff]
    %v329 = vld [vmem:[%s3 + $0x4f8] sm:$0xff]
    %v330 = vld [vmem:[%s3 + $0x500] sm:$0xff]
    %v331 = vld [vmem:[%s3 + $0x508] sm:$0xff]
    %v332 = vld [vmem:[%s3 + $0x510] sm:$0xff]
    %v333 = vld [vmem:[%s3 + $0x518] sm:$0xff]
    %v334 = vld [vmem:[%s3 + $0x520] sm:$0xff]
    %v335 = vld [vmem:[%s3 + $0x528] sm:$0xff]
    %v336 = vld [vmem:[%s3 + $0x530] sm:$0xff]
    %v337 = vld [vmem:[%s3 + $0x538] sm:$0xff]
    %v338 = vld [vmem:[%s3 + $0x540] sm:$0xff]
    %v339 = vld [vmem:[%s3 + $0x548] sm:$0xff]
    %v340 = vld [vmem:[%s3 + $0x550] sm:$0xff]
    %v341 = vld [vmem:[%s3 + $0x558] sm:$0xff]
    %v342 = vld [vmem:[%s3 + $0x560] sm:$0xff]
    %v343 = vld [vmem:[%s3 + $0x568] sm:$0xff]
    %v344 = vld [vmem:[%s3 + $0x570] sm:$0xff]
    %v345 = vld [vmem:[%s3 + $0x578] sm:$0xff]
    %v346 = vld [vmem:[%s3 + $0x580] sm:$0xff]
    %v347 = vld [vmem:[%s3 + $0x588] sm:$0xff]
    %v348 = vld [vmem:[%s3 + $0x590] sm:$0xff]
    %v349 = vld [vmem:[%s3 + $0x598] sm:$0xff]
    %v350 = vld [vmem:[%s3 + $0x5a0] sm:$0xff]
    %v351 = vld [vmem:[%s3 + $0x5a8] sm:$0xff]
    %v352 = vld [vmem:[%s3 + $0x5b0] sm:$0xff]
    %v353 = vld [vmem:[%s3 + $0x5b8] sm:$0xff]
    %v354 = vld [vmem:[%s3 + $0x5c0] sm:$0xff]
    %v355 = vld [vmem:[%s3 + $0x5c8] sm:$0xff]
    %v356 = vld [vmem:[%s3 + $0x5d0] sm:$0xff]
    %v357 = vld [vmem:[%s3 + $0x5d8] sm:$0xff]
    %v358 = vld [vmem:[%s3 + $0x5e0] sm:$0xff]
    %v359 = vld [vmem:[%s3 + $0x5e8] sm:$0xff]
    %v360 = vld [vmem:[%s3 + $0x5f0] sm:$0xff]
    %v361 = vld [vmem:[%s3 + $0x5f8] sm:$0xff]
    %v362 = vld [vmem:[%s3 + $0x600] sm:$0xff]
    %v363 = vld [vmem:[%s3 + $0x608] sm:$0xff]
    %v364 = vld [vmem:[%s3 + $0x610] sm:$0xff]
    %v365 = vld [vmem:[%s3 + $0x618] sm:$0xff]
    %v366 = vld [vmem:[%s3 + $0x620] sm:$0xff]
    %v367 = vld [vmem:[%s3 + $0x628] sm:$0xff]
    %v368 = vld [vmem:[%s3 + $0x630] sm:$0xff]
    %v369 = vld [vmem:[%s3 + $0x638] sm:$0xff]
    %v370 = vld [vmem:[%s3 + $0x640] sm:$0xff]
    %v371 = vld [vmem:[%s3 + $0x648] sm:$0xff]
    %v372 = vld [vmem:[%s3 + $0x650] sm:$0xff]
    %v373 = vld [vmem:[%s3 + $0x658] sm:$0xff]
    %v374 = vld [vmem:[%s3 + $0x660] sm:$0xff]
    %v375 = vld [vmem:[%s3 + $0x668] sm:$0xff]
    %v376 = vld [vmem:[%s3 + $0x670] sm:$0xff]
    %v377 = vld [vmem:[%s3 + $0x678] sm:$0xff]
    %v378 = vld [vmem:[%s3 + $0x680] sm:$0xff]
    %v379 = vld [vmem:[%s3 + $0x688] sm:$0xff]
    %v380 = vld [vmem:[%s3 + $0x690] sm:$0xff]
    %v381 = vld [vmem:[%s3 + $0x698] sm:$0xff]
    %v382 = vld [vmem:[%s3 + $0x6a0] sm:$0xff]
    %v383 = vld [vmem:[%s3 + $0x6a8] sm:$0xff]
    %v384 = vld [vmem:[%s3 + $0x6b0] sm:$0xff]
    %v385 = vld [vmem:[%s3 + $0x6b8] sm:$0xff]
    %v386 = vld [vmem:[%s3 + $0x6c0] sm:$0xff]
    %v387 = vld [vmem:[%s3 + $0x6c8] sm:$0xff]
    %v388 = vld [vmem:[%s3 + $0x6d0] sm:$0xff]
    %v389 = vld [vmem:[%s3 + $0x6d8] sm:$0xff]
    %v390 = vld [vmem:[%s3 + $0x6e0] sm:$0xff]
    %v391 = vld [vmem:[%s3 + $0x6e8] sm:$0xff]
    %v392 = vld [vmem:[%s3 + $0x6f0] sm:$0xff]
    %v393 = vld [vmem:[%s3 + $0x6f8] sm:$0xff]
    %v394 = vld [vmem:[%s3 + $0x700] sm:$0xff]
    %v395 = vld [vmem:[%s3 + $0x708] sm:$0xff]
    %v396 = vld [vmem:[%s3 + $0x710] sm:$0xff]
    %v397 = vld [vmem:[%s3 + $0x718] sm:$0xff]
    %v398 = vld [vmem:[%s3 + $0x720] sm:$0xff]
    %v399 = vld [vmem:[%s3 + $0x728] sm:$0xff]
    %v400 = vld [vmem:[%s3 + $0x730] sm:$0xff]
    %v401 = vld [vmem:[%s3 + $0x738] sm:$0xff]
    %v402 = vld [vmem:[%s3 + $0x740] sm:$0xff]
    %v403 = vld [vmem:[%s3 + $0x748] sm:$0xff]
    %v404 = vld [vmem:[%s3 + $0x750] sm:$0xff]
    %v405 = vld [vmem:[%s3 + $0x758] sm:$0xff]
    %v406 = vld [vmem:[%s3 + $0x760] sm:$0xff]
    %v407 = vld [vmem:[%s3 + $0x768] sm:$0xff]
    %v408 = vld [vmem:[%s3 + $0x770] sm:$0xff]
    %v409 = vld [vmem:[%s3 + $0x778] sm:$0xff]
    %v410 = vld [vmem:[%s3 + $0x780] sm:$0xff]
    %v411 = vld [vmem:[%s3 + $0x788] sm:$0xff]
    %v412 = vld [vmem:[%s3 + $0x790] sm:$0xff]
    %v413 = vld [vmem:[%s3 + $0x798] sm:$0xff]
    %v414 = vld [vmem:[%s3 + $0x7a0] sm:$0xff]
    %v415 = vld [vmem:[%s3 + $0x7a8] sm:$0xff]
    %v416 = vld [vmem:[%s3 + $0x7b0] sm:$0xff]
    %v417 = vld [vmem:[%s3 + $0x7b8] sm:$0xff]
    %v418 = vld [vmem:[%s3 + $0x7c0] sm:$0xff]
    %v419 = vld [vmem:[%s3 + $0x7c8] sm:$0xff]
    %v420 = vld [vmem:[%s3 + $0x7d0] sm:$0xff]
    %v421 = vld [vmem:[%s3 + $0x7d8] sm:$0xff]
    %v422 = vld [vmem:[%s3 + $0x7e0] sm:$0xff]
    %v423 = vld [vmem:[%s3 + $0x7e8] sm:$0xff]
    %v424 = vld [vmem:[%s3 + $0x7f0] sm:$0xff]
    %v425 = vld [vmem:[%s3 + $0x7f8] sm:$0xff]
    %v426 = vld [vmem:[%s4] sm:$0xff]
    %v428 = vlaneseq
    %v429 = vshrl.u32 %v428, 7
    %v430 = vsub.s32 0, %v429
    %v431 = vrot.slane %v426, %v430
    %v432 = vlaneseq
    %v433 = vshrl.u32 %v432, 7
    %v434 = vsub.s32 1, %v433
    %v435 = vrot.slane %v426, %v434
    %v436 = vlaneseq
    %v437 = vshrl.u32 %v436, 7
    %v438 = vsub.s32 2, %v437
    %v439 = vrot.slane %v426, %v438
    %v440 = vlaneseq
    %v441 = vshrl.u32 %v440, 7
    %v442 = vsub.s32 3, %v441
    %v443 = vrot.slane %v426, %v442
    %v444 = vlaneseq
    %v445 = vshrl.u32 %v444, 7
    %v446 = vsub.s32 4, %v445
    %v447 = vrot.slane %v426, %v446
    %v448 = vlaneseq
    %v449 = vshrl.u32 %v448, 7
    %v450 = vsub.s32 5, %v449
    %v451 = vrot.slane %v426, %v450
    %v452 = vlaneseq
    %v453 = vshrl.u32 %v452, 7
    %v454 = vsub.s32 6, %v453
    %v455 = vrot.slane %v426, %v454
    %v456 = vlaneseq
    %v457 = vshrl.u32 %v456, 7
    %v458 = vsub.s32 7, %v457
    %v459 = vrot.slane %v426, %v458
    %v724 = vunpack.c.l.b16 %v170
    %v725 = vunpack.c.h.b16 %v170
    %v726 = vunpack.c.l.b16 %v171
    %v727 = vunpack.c.h.b16 %v171
    %v728 = vunpack.c.l.b16 %v172
    %v729 = vunpack.c.h.b16 %v172
    %v730 = vunpack.c.l.b16 %v173
    %v731 = vunpack.c.h.b16 %v173
    %v732 = vunpack.c.l.b16 %v174
    %v733 = vunpack.c.h.b16 %v174
    %v734 = vunpack.c.l.b16 %v175
    %v735 = vunpack.c.h.b16 %v175
    %v736 = vunpack.c.l.b16 %v176
    %v737 = vunpack.c.h.b16 %v176
    %v738 = vunpack.c.l.b16 %v177
    %v739 = vunpack.c.h.b16 %v177
    %v740 = vunpack.c.l.b16 %v178
    %v741 = vunpack.c.h.b16 %v178
    %v742 = vunpack.c.l.b16 %v179
    %v743 = vunpack.c.h.b16 %v179
    %v744 = vunpack.c.l.b16 %v180
    %v745 = vunpack.c.h.b16 %v180
    %v746 = vunpack.c.l.b16 %v181
    %v747 = vunpack.c.h.b16 %v181
    %v748 = vunpack.c.l.b16 %v182
    %v749 = vunpack.c.h.b16 %v182
    %v750 = vunpack.c.l.b16 %v183
    %v751 = vunpack.c.h.b16 %v183
    %v752 = vunpack.c.l.b16 %v184
    %v753 = vunpack.c.h.b16 %v184
    %v754 = vunpack.c.l.b16 %v185
    %v755 = vunpack.c.h.b16 %v185
    %v756 = vunpack.c.l.b16 %v186
    %v757 = vunpack.c.h.b16 %v186
    %v758 = vunpack.c.l.b16 %v187
    %v759 = vunpack.c.h.b16 %v187
    %v760 = vunpack.c.l.b16 %v188
    %v761 = vunpack.c.h.b16 %v188
    %v762 = vunpack.c.l.b16 %v189
    %v763 = vunpack.c.h.b16 %v189
    %v764 = vunpack.c.l.b16 %v190
    %v765 = vunpack.c.h.b16 %v190
    %v766 = vunpack.c.l.b16 %v191
    %v767 = vunpack.c.h.b16 %v191
    %v768 = vunpack.c.l.b16 %v192
    %v769 = vunpack.c.h.b16 %v192
    %v770 = vunpack.c.l.b16 %v193
    %v771 = vunpack.c.h.b16 %v193
    %v772 = vunpack.c.l.b16 %v194
    %v773 = vunpack.c.h.b16 %v194
    %v774 = vunpack.c.l.b16 %v195
    %v775 = vunpack.c.h.b16 %v195
    %v776 = vunpack.c.l.b16 %v196
    %v777 = vunpack.c.h.b16 %v196
    %v778 = vunpack.c.l.b16 %v197
    %v779 = vunpack.c.h.b16 %v197
    %v780 = vunpack.c.l.b16 %v198
    %v781 = vunpack.c.h.b16 %v198
    %v782 = vunpack.c.l.b16 %v199
    %v783 = vunpack.c.h.b16 %v199
    %v784 = vunpack.c.l.b16 %v200
    %v785 = vunpack.c.h.b16 %v200
    %v786 = vunpack.c.l.b16 %v201
    %v787 = vunpack.c.h.b16 %v201
    %v788 = vunpack.c.l.b16 %v202
    %v789 = vunpack.c.h.b16 %v202
    %v790 = vunpack.c.l.b16 %v203
    %v791 = vunpack.c.h.b16 %v203
    %v792 = vunpack.c.l.b16 %v204
    %v793 = vunpack.c.h.b16 %v204
    %v794 = vunpack.c.l.b16 %v205
    %v795 = vunpack.c.h.b16 %v205
    %v796 = vunpack.c.l.b16 %v206
    %v797 = vunpack.c.h.b16 %v206
    %v798 = vunpack.c.l.b16 %v207
    %v799 = vunpack.c.h.b16 %v207
    %v800 = vunpack.c.l.b16 %v208
    %v801 = vunpack.c.h.b16 %v208
    %v802 = vunpack.c.l.b16 %v209
    %v803 = vunpack.c.h.b16 %v209
    %v804 = vunpack.c.l.b16 %v210
    %v805 = vunpack.c.h.b16 %v210
    %v806 = vunpack.c.l.b16 %v211
    %v807 = vunpack.c.h.b16 %v211
    %v808 = vunpack.c.l.b16 %v212
    %v809 = vunpack.c.h.b16 %v212
    %v810 = vunpack.c.l.b16 %v213
    %v811 = vunpack.c.h.b16 %v213
    %v812 = vunpack.c.l.b16 %v214
    %v813 = vunpack.c.h.b16 %v214
    %v814 = vunpack.c.l.b16 %v215
    %v815 = vunpack.c.h.b16 %v215
    %v816 = vunpack.c.l.b16 %v216
    %v817 = vunpack.c.h.b16 %v216
    %v818 = vunpack.c.l.b16 %v217
    %v819 = vunpack.c.h.b16 %v217
    %v820 = vunpack.c.l.b16 %v218
    %v821 = vunpack.c.h.b16 %v218
    %v822 = vunpack.c.l.b16 %v219
    %v823 = vunpack.c.h.b16 %v219
    %v824 = vunpack.c.l.b16 %v220
    %v825 = vunpack.c.h.b16 %v220
    %v826 = vunpack.c.l.b16 %v221
    %v827 = vunpack.c.h.b16 %v221
    %v828 = vunpack.c.l.b16 %v222
    %v829 = vunpack.c.h.b16 %v222
    %v830 = vunpack.c.l.b16 %v223
    %v831 = vunpack.c.h.b16 %v223
    %v832 = vunpack.c.l.b16 %v224
    %v833 = vunpack.c.h.b16 %v224
    %v834 = vunpack.c.l.b16 %v225
    %v835 = vunpack.c.h.b16 %v225
    %v836 = vunpack.c.l.b16 %v226
    %v837 = vunpack.c.h.b16 %v226
    %v838 = vunpack.c.l.b16 %v227
    %v839 = vunpack.c.h.b16 %v227
    %v840 = vunpack.c.l.b16 %v228
    %v841 = vunpack.c.h.b16 %v228
    %v842 = vunpack.c.l.b16 %v229
    %v843 = vunpack.c.h.b16 %v229
    %v844 = vunpack.c.l.b16 %v230
    %v845 = vunpack.c.h.b16 %v230
    %v846 = vunpack.c.l.b16 %v231
    %v847 = vunpack.c.h.b16 %v231
    %v848 = vunpack.c.l.b16 %v232
    %v849 = vunpack.c.h.b16 %v232
    %v850 = vunpack.c.l.b16 %v233
    %v851 = vunpack.c.h.b16 %v233
    %v852 = vunpack.c.l.b16 %v234
    %v853 = vunpack.c.h.b16 %v234
    %v854 = vunpack.c.l.b16 %v235
    %v855 = vunpack.c.h.b16 %v235
    %v856 = vunpack.c.l.b16 %v236
    %v857 = vunpack.c.h.b16 %v236
    %v858 = vunpack.c.l.b16 %v237
    %v859 = vunpack.c.h.b16 %v237
    %v860 = vunpack.c.l.b16 %v238
    %v861 = vunpack.c.h.b16 %v238
    %v862 = vunpack.c.l.b16 %v239
    %v863 = vunpack.c.h.b16 %v239
    %v864 = vunpack.c.l.b16 %v240
    %v865 = vunpack.c.h.b16 %v240
    %v866 = vunpack.c.l.b16 %v241
    %v867 = vunpack.c.h.b16 %v241
    %v868 = vunpack.c.l.b16 %v242
    %v869 = vunpack.c.h.b16 %v242
    %v870 = vunpack.c.l.b16 %v243
    %v871 = vunpack.c.h.b16 %v243
    %v872 = vunpack.c.l.b16 %v244
    %v873 = vunpack.c.h.b16 %v244
    %v874 = vunpack.c.l.b16 %v245
    %v875 = vunpack.c.h.b16 %v245
    %v876 = vunpack.c.l.b16 %v246
    %v877 = vunpack.c.h.b16 %v246
    %v878 = vunpack.c.l.b16 %v247
    %v879 = vunpack.c.h.b16 %v247
    %v880 = vunpack.c.l.b16 %v248
    %v881 = vunpack.c.h.b16 %v248
    %v882 = vunpack.c.l.b16 %v249
    %v883 = vunpack.c.h.b16 %v249
    %v884 = vunpack.c.l.b16 %v250
    %v885 = vunpack.c.h.b16 %v250
    %v886 = vunpack.c.l.b16 %v251
    %v887 = vunpack.c.h.b16 %v251
    %v888 = vunpack.c.l.b16 %v252
    %v889 = vunpack.c.h.b16 %v252
    %v890 = vunpack.c.l.b16 %v253
    %v891 = vunpack.c.h.b16 %v253
    %v892 = vunpack.c.l.b16 %v254
    %v893 = vunpack.c.h.b16 %v254
    %v894 = vunpack.c.l.b16 %v255
    %v895 = vunpack.c.h.b16 %v255
    %v896 = vunpack.c.l.b16 %v256
    %v897 = vunpack.c.h.b16 %v256
    %v898 = vunpack.c.l.b16 %v257
    %v899 = vunpack.c.h.b16 %v257
    %v900 = vunpack.c.l.b16 %v258
    %v901 = vunpack.c.h.b16 %v258
    %v902 = vunpack.c.l.b16 %v259
    %v903 = vunpack.c.h.b16 %v259
    %v904 = vunpack.c.l.b16 %v260
    %v905 = vunpack.c.h.b16 %v260
    %v906 = vunpack.c.l.b16 %v261
    %v907 = vunpack.c.h.b16 %v261
    %v908 = vunpack.c.l.b16 %v262
    %v909 = vunpack.c.h.b16 %v262
    %v910 = vunpack.c.l.b16 %v263
    %v911 = vunpack.c.h.b16 %v263
    %v912 = vunpack.c.l.b16 %v264
    %v913 = vunpack.c.h.b16 %v264
    %v914 = vunpack.c.l.b16 %v265
    %v915 = vunpack.c.h.b16 %v265
    %v916 = vunpack.c.l.b16 %v266
    %v917 = vunpack.c.h.b16 %v266
    %v918 = vunpack.c.l.b16 %v267
    %v919 = vunpack.c.h.b16 %v267
    %v920 = vunpack.c.l.b16 %v268
    %v921 = vunpack.c.h.b16 %v268
    %v922 = vunpack.c.l.b16 %v269
    %v923 = vunpack.c.h.b16 %v269
    %v924 = vunpack.c.l.b16 %v270
    %v925 = vunpack.c.h.b16 %v270
    %v926 = vunpack.c.l.b16 %v271
    %v927 = vunpack.c.h.b16 %v271
    %v928 = vunpack.c.l.b16 %v272
    %v929 = vunpack.c.h.b16 %v272
    %v930 = vunpack.c.l.b16 %v273
    %v931 = vunpack.c.h.b16 %v273
    %v932 = vunpack.c.l.b16 %v274
    %v933 = vunpack.c.h.b16 %v274
    %v934 = vunpack.c.l.b16 %v275
    %v935 = vunpack.c.h.b16 %v275
    %v936 = vunpack.c.l.b16 %v276
    %v937 = vunpack.c.h.b16 %v276
    %v938 = vunpack.c.l.b16 %v277
    %v939 = vunpack.c.h.b16 %v277
    %v940 = vunpack.c.l.b16 %v278
    %v941 = vunpack.c.h.b16 %v278
    %v942 = vunpack.c.l.b16 %v279
    %v943 = vunpack.c.h.b16 %v279
    %v944 = vunpack.c.l.b16 %v280
    %v945 = vunpack.c.h.b16 %v280
    %v946 = vunpack.c.l.b16 %v281
    %v947 = vunpack.c.h.b16 %v281
    %v948 = vunpack.c.l.b16 %v282
    %v949 = vunpack.c.h.b16 %v282
    %v950 = vunpack.c.l.b16 %v283
    %v951 = vunpack.c.h.b16 %v283
    %v952 = vunpack.c.l.b16 %v284
    %v953 = vunpack.c.h.b16 %v284
    %v954 = vunpack.c.l.b16 %v285
    %v955 = vunpack.c.h.b16 %v285
    %v956 = vunpack.c.l.b16 %v286
    %v957 = vunpack.c.h.b16 %v286
    %v958 = vunpack.c.l.b16 %v287
    %v959 = vunpack.c.h.b16 %v287
    %v960 = vunpack.c.l.b16 %v288
    %v961 = vunpack.c.h.b16 %v288
    %v962 = vunpack.c.l.b16 %v289
    %v963 = vunpack.c.h.b16 %v289
    %v964 = vunpack.c.l.b16 %v290
    %v965 = vunpack.c.h.b16 %v290
    %v966 = vunpack.c.l.b16 %v291
    %v967 = vunpack.c.h.b16 %v291
    %v968 = vunpack.c.l.b16 %v292
    %v969 = vunpack.c.h.b16 %v292
    %v970 = vunpack.c.l.b16 %v293
    %v971 = vunpack.c.h.b16 %v293
    %v972 = vunpack.c.l.b16 %v294
    %v973 = vunpack.c.h.b16 %v294
    %v974 = vunpack.c.l.b16 %v295
    %v975 = vunpack.c.h.b16 %v295
    %v976 = vunpack.c.l.b16 %v296
    %v977 = vunpack.c.h.b16 %v296
    %v978 = vunpack.c.l.b16 %v297
    %v979 = vunpack.c.h.b16 %v297
    %v980 = vunpack.c.l.b16 %v298
    %v981 = vunpack.c.h.b16 %v298
    %v982 = vunpack.c.l.b16 %v299
    %v983 = vunpack.c.h.b16 %v299
    %v984 = vunpack.c.l.b16 %v300
    %v985 = vunpack.c.h.b16 %v300
    %v986 = vunpack.c.l.b16 %v301
    %v987 = vunpack.c.h.b16 %v301
    %v988 = vunpack.c.l.b16 %v302
    %v989 = vunpack.c.h.b16 %v302
    %v990 = vunpack.c.l.b16 %v303
    %v991 = vunpack.c.h.b16 %v303
    %v992 = vunpack.c.l.b16 %v304
    %v993 = vunpack.c.h.b16 %v304
    %v994 = vunpack.c.l.b16 %v305
    %v995 = vunpack.c.h.b16 %v305
    %v996 = vunpack.c.l.b16 %v306
    %v997 = vunpack.c.h.b16 %v306
    %v998 = vunpack.c.l.b16 %v307
    %v999 = vunpack.c.h.b16 %v307
    %v1000 = vunpack.c.l.b16 %v308
    %v1001 = vunpack.c.h.b16 %v308
    %v1002 = vunpack.c.l.b16 %v309
    %v1003 = vunpack.c.h.b16 %v309
    %v1004 = vunpack.c.l.b16 %v310
    %v1005 = vunpack.c.h.b16 %v310
    %v1006 = vunpack.c.l.b16 %v311
    %v1007 = vunpack.c.h.b16 %v311
    %v1008 = vunpack.c.l.b16 %v312
    %v1009 = vunpack.c.h.b16 %v312
    %v1010 = vunpack.c.l.b16 %v313
    %v1011 = vunpack.c.h.b16 %v313
    %v1012 = vunpack.c.l.b16 %v314
    %v1013 = vunpack.c.h.b16 %v314
    %v1014 = vunpack.c.l.b16 %v315
    %v1015 = vunpack.c.h.b16 %v315
    %v1016 = vunpack.c.l.b16 %v316
    %v1017 = vunpack.c.h.b16 %v316
    %v1018 = vunpack.c.l.b16 %v317
    %v1019 = vunpack.c.h.b16 %v317
    %v1020 = vunpack.c.l.b16 %v318
    %v1021 = vunpack.c.h.b16 %v318
    %v1022 = vunpack.c.l.b16 %v319
    %v1023 = vunpack.c.h.b16 %v319
    %v1024 = vunpack.c.l.b16 %v320
    %v1025 = vunpack.c.h.b16 %v320
    %v1026 = vunpack.c.l.b16 %v321
    %v1027 = vunpack.c.h.b16 %v321
    %v1028 = vunpack.c.l.b16 %v322
    %v1029 = vunpack.c.h.b16 %v322
    %v1030 = vunpack.c.l.b16 %v323
    %v1031 = vunpack.c.h.b16 %v323
    %v1032 = vunpack.c.l.b16 %v324
    %v1033 = vunpack.c.h.b16 %v324
    %v1034 = vunpack.c.l.b16 %v325
    %v1035 = vunpack.c.h.b16 %v325
    %v1036 = vunpack.c.l.b16 %v326
    %v1037 = vunpack.c.h.b16 %v326
    %v1038 = vunpack.c.l.b16 %v327
    %v1039 = vunpack.c.h.b16 %v327
    %v1040 = vunpack.c.l.b16 %v328
    %v1041 = vunpack.c.h.b16 %v328
    %v1042 = vunpack.c.l.b16 %v329
    %v1043 = vunpack.c.h.b16 %v329
    %v1044 = vunpack.c.l.b16 %v330
    %v1045 = vunpack.c.h.b16 %v330
    %v1046 = vunpack.c.l.b16 %v331
    %v1047 = vunpack.c.h.b16 %v331
    %v1048 = vunpack.c.l.b16 %v332
    %v1049 = vunpack.c.h.b16 %v332
    %v1050 = vunpack.c.l.b16 %v333
    %v1051 = vunpack.c.h.b16 %v333
    %v1052 = vunpack.c.l.b16 %v334
    %v1053 = vunpack.c.h.b16 %v334
    %v1054 = vunpack.c.l.b16 %v335
    %v1055 = vunpack.c.h.b16 %v335
    %v1056 = vunpack.c.l.b16 %v336
    %v1057 = vunpack.c.h.b16 %v336
    %v1058 = vunpack.c.l.b16 %v337
    %v1059 = vunpack.c.h.b16 %v337
    %v1060 = vunpack.c.l.b16 %v338
    %v1061 = vunpack.c.h.b16 %v338
    %v1062 = vunpack.c.l.b16 %v339
    %v1063 = vunpack.c.h.b16 %v339
    %v1064 = vunpack.c.l.b16 %v340
    %v1065 = vunpack.c.h.b16 %v340
    %v1066 = vunpack.c.l.b16 %v341
    %v1067 = vunpack.c.h.b16 %v341
    %v1068 = vunpack.c.l.b16 %v342
    %v1069 = vunpack.c.h.b16 %v342
    %v1070 = vunpack.c.l.b16 %v343
    %v1071 = vunpack.c.h.b16 %v343
    %v1072 = vunpack.c.l.b16 %v344
    %v1073 = vunpack.c.h.b16 %v344
    %v1074 = vunpack.c.l.b16 %v345
    %v1075 = vunpack.c.h.b16 %v345
    %v1076 = vunpack.c.l.b16 %v346
    %v1077 = vunpack.c.h.b16 %v346
    %v1078 = vunpack.c.l.b16 %v347
    %v1079 = vunpack.c.h.b16 %v347
    %v1080 = vunpack.c.l.b16 %v348
    %v1081 = vunpack.c.h.b16 %v348
    %v1082 = vunpack.c.l.b16 %v349
    %v1083 = vunpack.c.h.b16 %v349
    %v1084 = vunpack.c.l.b16 %v350
    %v1085 = vunpack.c.h.b16 %v350
    %v1086 = vunpack.c.l.b16 %v351
    %v1087 = vunpack.c.h.b16 %v351
    %v1088 = vunpack.c.l.b16 %v352
    %v1089 = vunpack.c.h.b16 %v352
    %v1090 = vunpack.c.l.b16 %v353
    %v1091 = vunpack.c.h.b16 %v353
    %v1092 = vunpack.c.l.b16 %v354
    %v1093 = vunpack.c.h.b16 %v354
    %v1094 = vunpack.c.l.b16 %v355
    %v1095 = vunpack.c.h.b16 %v355
    %v1096 = vunpack.c.l.b16 %v356
    %v1097 = vunpack.c.h.b16 %v356
    %v1098 = vunpack.c.l.b16 %v357
    %v1099 = vunpack.c.h.b16 %v357
    %v1100 = vunpack.c.l.b16 %v358
    %v1101 = vunpack.c.h.b16 %v358
    %v1102 = vunpack.c.l.b16 %v359
    %v1103 = vunpack.c.h.b16 %v359
    %v1104 = vunpack.c.l.b16 %v360
    %v1105 = vunpack.c.h.b16 %v360
    %v1106 = vunpack.c.l.b16 %v361
    %v1107 = vunpack.c.h.b16 %v361
    %v1108 = vunpack.c.l.b16 %v362
    %v1109 = vunpack.c.h.b16 %v362
    %v1110 = vunpack.c.l.b16 %v363
    %v1111 = vunpack.c.h.b16 %v363
    %v1112 = vunpack.c.l.b16 %v364
    %v1113 = vunpack.c.h.b16 %v364
    %v1114 = vunpack.c.l.b16 %v365
    %v1115 = vunpack.c.h.b16 %v365
    %v1116 = vunpack.c.l.b16 %v366
    %v1117 = vunpack.c.h.b16 %v366
    %v1118 = vunpack.c.l.b16 %v367
    %v1119 = vunpack.c.h.b16 %v367
    %v1120 = vunpack.c.l.b16 %v368
    %v1121 = vunpack.c.h.b16 %v368
    %v1122 = vunpack.c.l.b16 %v369
    %v1123 = vunpack.c.h.b16 %v369
    %v1124 = vunpack.c.l.b16 %v370
    %v1125 = vunpack.c.h.b16 %v370
    %v1126 = vunpack.c.l.b16 %v371
    %v1127 = vunpack.c.h.b16 %v371
    %v1128 = vunpack.c.l.b16 %v372
    %v1129 = vunpack.c.h.b16 %v372
    %v1130 = vunpack.c.l.b16 %v373
    %v1131 = vunpack.c.h.b16 %v373
    %v1132 = vunpack.c.l.b16 %v374
    %v1133 = vunpack.c.h.b16 %v374
    %v1134 = vunpack.c.l.b16 %v375
    %v1135 = vunpack.c.h.b16 %v375
    %v1136 = vunpack.c.l.b16 %v376
    %v1137 = vunpack.c.h.b16 %v376
    %v1138 = vunpack.c.l.b16 %v377
    %v1139 = vunpack.c.h.b16 %v377
    %v1140 = vunpack.c.l.b16 %v378
    %v1141 = vunpack.c.h.b16 %v378
    %v1142 = vunpack.c.l.b16 %v379
    %v1143 = vunpack.c.h.b16 %v379
    %v1144 = vunpack.c.l.b16 %v380
    %v1145 = vunpack.c.h.b16 %v380
    %v1146 = vunpack.c.l.b16 %v381
    %v1147 = vunpack.c.h.b16 %v381
    %v1148 = vunpack.c.l.b16 %v382
    %v1149 = vunpack.c.h.b16 %v382
    %v1150 = vunpack.c.l.b16 %v383
    %v1151 = vunpack.c.h.b16 %v383
    %v1152 = vunpack.c.l.b16 %v384
    %v1153 = vunpack.c.h.b16 %v384
    %v1154 = vunpack.c.l.b16 %v385
    %v1155 = vunpack.c.h.b16 %v385
    %v1156 = vunpack.c.l.b16 %v386
    %v1157 = vunpack.c.h.b16 %v386
    %v1158 = vunpack.c.l.b16 %v387
    %v1159 = vunpack.c.h.b16 %v387
    %v1160 = vunpack.c.l.b16 %v388
    %v1161 = vunpack.c.h.b16 %v388
    %v1162 = vunpack.c.l.b16 %v389
    %v1163 = vunpack.c.h.b16 %v389
    %v1164 = vunpack.c.l.b16 %v390
    %v1165 = vunpack.c.h.b16 %v390
    %v1166 = vunpack.c.l.b16 %v391
    %v1167 = vunpack.c.h.b16 %v391
    %v1168 = vunpack.c.l.b16 %v392
    %v1169 = vunpack.c.h.b16 %v392
    %v1170 = vunpack.c.l.b16 %v393
    %v1171 = vunpack.c.h.b16 %v393
    %v1172 = vunpack.c.l.b16 %v394
    %v1173 = vunpack.c.h.b16 %v394
    %v1174 = vunpack.c.l.b16 %v395
    %v1175 = vunpack.c.h.b16 %v395
    %v1176 = vunpack.c.l.b16 %v396
    %v1177 = vunpack.c.h.b16 %v396
    %v1178 = vunpack.c.l.b16 %v397
    %v1179 = vunpack.c.h.b16 %v397
    %v1180 = vunpack.c.l.b16 %v398
    %v1181 = vunpack.c.h.b16 %v398
    %v1182 = vunpack.c.l.b16 %v399
    %v1183 = vunpack.c.h.b16 %v399
    %v1184 = vunpack.c.l.b16 %v400
    %v1185 = vunpack.c.h.b16 %v400
    %v1186 = vunpack.c.l.b16 %v401
    %v1187 = vunpack.c.h.b16 %v401
    %v1188 = vunpack.c.l.b16 %v402
    %v1189 = vunpack.c.h.b16 %v402
    %v1190 = vunpack.c.l.b16 %v403
    %v1191 = vunpack.c.h.b16 %v403
    %v1192 = vunpack.c.l.b16 %v404
    %v1193 = vunpack.c.h.b16 %v404
    %v1194 = vunpack.c.l.b16 %v405
    %v1195 = vunpack.c.h.b16 %v405
    %v1196 = vunpack.c.l.b16 %v406
    %v1197 = vunpack.c.h.b16 %v406
    %v1198 = vunpack.c.l.b16 %v407
    %v1199 = vunpack.c.h.b16 %v407
    %v1200 = vunpack.c.l.b16 %v408
    %v1201 = vunpack.c.h.b16 %v408
    %v1202 = vunpack.c.l.b16 %v409
    %v1203 = vunpack.c.h.b16 %v409
    %v1204 = vunpack.c.l.b16 %v410
    %v1205 = vunpack.c.h.b16 %v410
    %v1206 = vunpack.c.l.b16 %v411
    %v1207 = vunpack.c.h.b16 %v411
    %v1208 = vunpack.c.l.b16 %v412
    %v1209 = vunpack.c.h.b16 %v412
    %v1210 = vunpack.c.l.b16 %v413
    %v1211 = vunpack.c.h.b16 %v413
    %v1212 = vunpack.c.l.b16 %v414
    %v1213 = vunpack.c.h.b16 %v414
    %v1214 = vunpack.c.l.b16 %v415
    %v1215 = vunpack.c.h.b16 %v415
    %v1216 = vunpack.c.l.b16 %v416
    %v1217 = vunpack.c.h.b16 %v416
    %v1218 = vunpack.c.l.b16 %v417
    %v1219 = vunpack.c.h.b16 %v417
    %v1220 = vunpack.c.l.b16 %v418
    %v1221 = vunpack.c.h.b16 %v418
    %v1222 = vunpack.c.l.b16 %v419
    %v1223 = vunpack.c.h.b16 %v419
    %v1224 = vunpack.c.l.b16 %v420
    %v1225 = vunpack.c.h.b16 %v420
    %v1226 = vunpack.c.l.b16 %v421
    %v1227 = vunpack.c.h.b16 %v421
    %v1228 = vunpack.c.l.b16 %v422
    %v1229 = vunpack.c.h.b16 %v422
    %v1230 = vunpack.c.l.b16 %v423
    %v1231 = vunpack.c.h.b16 %v423
    %v1232 = vunpack.c.l.b16 %v424
    %v1233 = vunpack.c.h.b16 %v424
    %v1234 = vunpack.c.l.b16 %v425
    %v1235 = vunpack.c.h.b16 %v425
    %v1236 = vpack.c.b16 %v732, %v724
    %v1237 = vpack.c.b16 %v733, %v725
    %v1238 = vpack.c.b16 %v734, %v726
    %v1239 = vpack.c.b16 %v735, %v727
    %v1240 = vpack.c.b16 %v736, %v728
    %v1241 = vpack.c.b16 %v737, %v729
    %v1242 = vpack.c.b16 %v738, %v730
    %v1243 = vpack.c.b16 %v739, %v731
    %v1244 = vpack.c.b16 %v748, %v740
    %v1245 = vpack.c.b16 %v749, %v741
    %v1246 = vpack.c.b16 %v750, %v742
    %v1247 = vpack.c.b16 %v751, %v743
    %v1248 = vpack.c.b16 %v752, %v744
    %v1249 = vpack.c.b16 %v753, %v745
    %v1250 = vpack.c.b16 %v754, %v746
    %v1251 = vpack.c.b16 %v755, %v747
    %v1252 = vpack.c.b16 %v764, %v756
    %v1253 = vpack.c.b16 %v765, %v757
    %v1254 = vpack.c.b16 %v766, %v758
    %v1255 = vpack.c.b16 %v767, %v759
    %v1256 = vpack.c.b16 %v768, %v760
    %v1257 = vpack.c.b16 %v769, %v761
    %v1258 = vpack.c.b16 %v770, %v762
    %v1259 = vpack.c.b16 %v771, %v763
    %v1260 = vpack.c.b16 %v780, %v772
    %v1261 = vpack.c.b16 %v781, %v773
    %v1262 = vpack.c.b16 %v782, %v774
    %v1263 = vpack.c.b16 %v783, %v775
    %v1264 = vpack.c.b16 %v784, %v776
    %v1265 = vpack.c.b16 %v785, %v777
    %v1266 = vpack.c.b16 %v786, %v778
    %v1267 = vpack.c.b16 %v787, %v779
    %v1268 = vpack.c.b16 %v796, %v788
    %v1269 = vpack.c.b16 %v797, %v789
    %v1270 = vpack.c.b16 %v798, %v790
    %v1271 = vpack.c.b16 %v799, %v791
    %v1272 = vpack.c.b16 %v800, %v792
    %v1273 = vpack.c.b16 %v801, %v793
    %v1274 = vpack.c.b16 %v802, %v794
    %v1275 = vpack.c.b16 %v803, %v795
    %v1276 = vpack.c.b16 %v812, %v804
    %v1277 = vpack.c.b16 %v813, %v805
    %v1278 = vpack.c.b16 %v814, %v806
    %v1279 = vpack.c.b16 %v815, %v807
    %v1280 = vpack.c.b16 %v816, %v808
    %v1281 = vpack.c.b16 %v817, %v809
    %v1282 = vpack.c.b16 %v818, %v810
    %v1283 = vpack.c.b16 %v819, %v811
    %v1284 = vpack.c.b16 %v828, %v820
    %v1285 = vpack.c.b16 %v829, %v821
    %v1286 = vpack.c.b16 %v830, %v822
    %v1287 = vpack.c.b16 %v831, %v823
    %v1288 = vpack.c.b16 %v832, %v824
    %v1289 = vpack.c.b16 %v833, %v825
    %v1290 = vpack.c.b16 %v834, %v826
    %v1291 = vpack.c.b16 %v835, %v827
    %v1292 = vpack.c.b16 %v844, %v836
    %v1293 = vpack.c.b16 %v845, %v837
    %v1294 = vpack.c.b16 %v846, %v838
    %v1295 = vpack.c.b16 %v847, %v839
    %v1296 = vpack.c.b16 %v848, %v840
    %v1297 = vpack.c.b16 %v849, %v841
    %v1298 = vpack.c.b16 %v850, %v842
    %v1299 = vpack.c.b16 %v851, %v843
    %v1300 = vpack.c.b16 %v860, %v852
    %v1301 = vpack.c.b16 %v861, %v853
    %v1302 = vpack.c.b16 %v862, %v854
    %v1303 = vpack.c.b16 %v863, %v855
    %v1304 = vpack.c.b16 %v864, %v856
    %v1305 = vpack.c.b16 %v865, %v857
    %v1306 = vpack.c.b16 %v866, %v858
    %v1307 = vpack.c.b16 %v867, %v859
    %v1308 = vpack.c.b16 %v876, %v868
    %v1309 = vpack.c.b16 %v877, %v869
    %v1310 = vpack.c.b16 %v878, %v870
    %v1311 = vpack.c.b16 %v879, %v871
    %v1312 = vpack.c.b16 %v880, %v872
    %v1313 = vpack.c.b16 %v881, %v873
    %v1314 = vpack.c.b16 %v882, %v874
    %v1315 = vpack.c.b16 %v883, %v875
    %v1316 = vpack.c.b16 %v892, %v884
    %v1317 = vpack.c.b16 %v893, %v885
    %v1318 = vpack.c.b16 %v894, %v886
    %v1319 = vpack.c.b16 %v895, %v887
    %v1320 = vpack.c.b16 %v896, %v888
    %v1321 = vpack.c.b16 %v897, %v889
    %v1322 = vpack.c.b16 %v898, %v890
    %v1323 = vpack.c.b16 %v899, %v891
    %v1324 = vpack.c.b16 %v908, %v900
    %v1325 = vpack.c.b16 %v909, %v901
    %v1326 = vpack.c.b16 %v910, %v902
    %v1327 = vpack.c.b16 %v911, %v903
    %v1328 = vpack.c.b16 %v912, %v904
    %v1329 = vpack.c.b16 %v913, %v905
    %v1330 = vpack.c.b16 %v914, %v906
    %v1331 = vpack.c.b16 %v915, %v907
    %v1332 = vpack.c.b16 %v924, %v916
    %v1333 = vpack.c.b16 %v925, %v917
    %v1334 = vpack.c.b16 %v926, %v918
    %v1335 = vpack.c.b16 %v927, %v919
    %v1336 = vpack.c.b16 %v928, %v920
    %v1337 = vpack.c.b16 %v929, %v921
    %v1338 = vpack.c.b16 %v930, %v922
    %v1339 = vpack.c.b16 %v931, %v923
    %v1340 = vpack.c.b16 %v940, %v932
    %v1341 = vpack.c.b16 %v941, %v933
    %v1342 = vpack.c.b16 %v942, %v934
    %v1343 = vpack.c.b16 %v943, %v935
    %v1344 = vpack.c.b16 %v944, %v936
    %v1345 = vpack.c.b16 %v945, %v937
    %v1346 = vpack.c.b16 %v946, %v938
    %v1347 = vpack.c.b16 %v947, %v939
    %v1348 = vpack.c.b16 %v956, %v948
    %v1349 = vpack.c.b16 %v957, %v949
    %v1350 = vpack.c.b16 %v958, %v950
    %v1351 = vpack.c.b16 %v959, %v951
    %v1352 = vpack.c.b16 %v960, %v952
    %v1353 = vpack.c.b16 %v961, %v953
    %v1354 = vpack.c.b16 %v962, %v954
    %v1355 = vpack.c.b16 %v963, %v955
    %v1356 = vpack.c.b16 %v972, %v964
    %v1357 = vpack.c.b16 %v973, %v965
    %v1358 = vpack.c.b16 %v974, %v966
    %v1359 = vpack.c.b16 %v975, %v967
    %v1360 = vpack.c.b16 %v976, %v968
    %v1361 = vpack.c.b16 %v977, %v969
    %v1362 = vpack.c.b16 %v978, %v970
    %v1363 = vpack.c.b16 %v979, %v971
    %v1364 = vpack.c.b16 %v988, %v980
    %v1365 = vpack.c.b16 %v989, %v981
    %v1366 = vpack.c.b16 %v990, %v982
    %v1367 = vpack.c.b16 %v991, %v983
    %v1368 = vpack.c.b16 %v992, %v984
    %v1369 = vpack.c.b16 %v993, %v985
    %v1370 = vpack.c.b16 %v994, %v986
    %v1371 = vpack.c.b16 %v995, %v987
    %v1372 = vpack.c.b16 %v1004, %v996
    %v1373 = vpack.c.b16 %v1005, %v997
    %v1374 = vpack.c.b16 %v1006, %v998
    %v1375 = vpack.c.b16 %v1007, %v999
    %v1376 = vpack.c.b16 %v1008, %v1000
    %v1377 = vpack.c.b16 %v1009, %v1001
    %v1378 = vpack.c.b16 %v1010, %v1002
    %v1379 = vpack.c.b16 %v1011, %v1003
    %v1380 = vpack.c.b16 %v1020, %v1012
    %v1381 = vpack.c.b16 %v1021, %v1013
    %v1382 = vpack.c.b16 %v1022, %v1014
    %v1383 = vpack.c.b16 %v1023, %v1015
    %v1384 = vpack.c.b16 %v1024, %v1016
    %v1385 = vpack.c.b16 %v1025, %v1017
    %v1386 = vpack.c.b16 %v1026, %v1018
    %v1387 = vpack.c.b16 %v1027, %v1019
    %v1388 = vpack.c.b16 %v1036, %v1028
    %v1389 = vpack.c.b16 %v1037, %v1029
    %v1390 = vpack.c.b16 %v1038, %v1030
    %v1391 = vpack.c.b16 %v1039, %v1031
    %v1392 = vpack.c.b16 %v1040, %v1032
    %v1393 = vpack.c.b16 %v1041, %v1033
    %v1394 = vpack.c.b16 %v1042, %v1034
    %v1395 = vpack.c.b16 %v1043, %v1035
    %v1396 = vpack.c.b16 %v1052, %v1044
    %v1397 = vpack.c.b16 %v1053, %v1045
    %v1398 = vpack.c.b16 %v1054, %v1046
    %v1399 = vpack.c.b16 %v1055, %v1047
    %v1400 = vpack.c.b16 %v1056, %v1048
    %v1401 = vpack.c.b16 %v1057, %v1049
    %v1402 = vpack.c.b16 %v1058, %v1050
    %v1403 = vpack.c.b16 %v1059, %v1051
    %v1404 = vpack.c.b16 %v1068, %v1060
    %v1405 = vpack.c.b16 %v1069, %v1061
    %v1406 = vpack.c.b16 %v1070, %v1062
    %v1407 = vpack.c.b16 %v1071, %v1063
    %v1408 = vpack.c.b16 %v1072, %v1064
    %v1409 = vpack.c.b16 %v1073, %v1065
    %v1410 = vpack.c.b16 %v1074, %v1066
    %v1411 = vpack.c.b16 %v1075, %v1067
    %v1412 = vpack.c.b16 %v1084, %v1076
    %v1413 = vpack.c.b16 %v1085, %v1077
    %v1414 = vpack.c.b16 %v1086, %v1078
    %v1415 = vpack.c.b16 %v1087, %v1079
    %v1416 = vpack.c.b16 %v1088, %v1080
    %v1417 = vpack.c.b16 %v1089, %v1081
    %v1418 = vpack.c.b16 %v1090, %v1082
    %v1419 = vpack.c.b16 %v1091, %v1083
    %v1420 = vpack.c.b16 %v1100, %v1092
    %v1421 = vpack.c.b16 %v1101, %v1093
    %v1422 = vpack.c.b16 %v1102, %v1094
    %v1423 = vpack.c.b16 %v1103, %v1095
    %v1424 = vpack.c.b16 %v1104, %v1096
    %v1425 = vpack.c.b16 %v1105, %v1097
    %v1426 = vpack.c.b16 %v1106, %v1098
    %v1427 = vpack.c.b16 %v1107, %v1099
    %v1428 = vpack.c.b16 %v1116, %v1108
    %v1429 = vpack.c.b16 %v1117, %v1109
    %v1430 = vpack.c.b16 %v1118, %v1110
    %v1431 = vpack.c.b16 %v1119, %v1111
    %v1432 = vpack.c.b16 %v1120, %v1112
    %v1433 = vpack.c.b16 %v1121, %v1113
    %v1434 = vpack.c.b16 %v1122, %v1114
    %v1435 = vpack.c.b16 %v1123, %v1115
    %v1436 = vpack.c.b16 %v1132, %v1124
    %v1437 = vpack.c.b16 %v1133, %v1125
    %v1438 = vpack.c.b16 %v1134, %v1126
    %v1439 = vpack.c.b16 %v1135, %v1127
    %v1440 = vpack.c.b16 %v1136, %v1128
    %v1441 = vpack.c.b16 %v1137, %v1129
    %v1442 = vpack.c.b16 %v1138, %v1130
    %v1443 = vpack.c.b16 %v1139, %v1131
    %v1444 = vpack.c.b16 %v1148, %v1140
    %v1445 = vpack.c.b16 %v1149, %v1141
    %v1446 = vpack.c.b16 %v1150, %v1142
    %v1447 = vpack.c.b16 %v1151, %v1143
    %v1448 = vpack.c.b16 %v1152, %v1144
    %v1449 = vpack.c.b16 %v1153, %v1145
    %v1450 = vpack.c.b16 %v1154, %v1146
    %v1451 = vpack.c.b16 %v1155, %v1147
    %v1452 = vpack.c.b16 %v1164, %v1156
    %v1453 = vpack.c.b16 %v1165, %v1157
    %v1454 = vpack.c.b16 %v1166, %v1158
    %v1455 = vpack.c.b16 %v1167, %v1159
    %v1456 = vpack.c.b16 %v1168, %v1160
    %v1457 = vpack.c.b16 %v1169, %v1161
    %v1458 = vpack.c.b16 %v1170, %v1162
    %v1459 = vpack.c.b16 %v1171, %v1163
    %v1460 = vpack.c.b16 %v1180, %v1172
    %v1461 = vpack.c.b16 %v1181, %v1173
    %v1462 = vpack.c.b16 %v1182, %v1174
    %v1463 = vpack.c.b16 %v1183, %v1175
    %v1464 = vpack.c.b16 %v1184, %v1176
    %v1465 = vpack.c.b16 %v1185, %v1177
    %v1466 = vpack.c.b16 %v1186, %v1178
    %v1467 = vpack.c.b16 %v1187, %v1179
    %v1468 = vpack.c.b16 %v1196, %v1188
    %v1469 = vpack.c.b16 %v1197, %v1189
    %v1470 = vpack.c.b16 %v1198, %v1190
    %v1471 = vpack.c.b16 %v1199, %v1191
    %v1472 = vpack.c.b16 %v1200, %v1192
    %v1473 = vpack.c.b16 %v1201, %v1193
    %v1474 = vpack.c.b16 %v1202, %v1194
    %v1475 = vpack.c.b16 %v1203, %v1195
    %v1476 = vpack.c.b16 %v1212, %v1204
    %v1477 = vpack.c.b16 %v1213, %v1205
    %v1478 = vpack.c.b16 %v1214, %v1206
    %v1479 = vpack.c.b16 %v1215, %v1207
    %v1480 = vpack.c.b16 %v1216, %v1208
    %v1481 = vpack.c.b16 %v1217, %v1209
    %v1482 = vpack.c.b16 %v1218, %v1210
    %v1483 = vpack.c.b16 %v1219, %v1211
    %v1484 = vpack.c.b16 %v1228, %v1220
    %v1485 = vpack.c.b16 %v1229, %v1221
    %v1486 = vpack.c.b16 %v1230, %v1222
    %v1487 = vpack.c.b16 %v1231, %v1223
    %v1488 = vpack.c.b16 %v1232, %v1224
    %v1489 = vpack.c.b16 %v1233, %v1225
    %v1490 = vpack.c.b16 %v1234, %v1226
    %v1491 = vpack.c.b16 %v1235, %v1227
    %1748 = vmatprep.subr.bf16.mxu0 %v1237
    %1749 = vmatpush1.bf16.msra.mxu0 %v1236
    %1750 = vmatprep.subr.bf16.mxu0 %v1245
    %1751 = vmatpush1.bf16.msra.mxu0 %v1244
    %1752 = vmatprep.subr.bf16.mxu0 %v1253
    %1753 = vmatpush1.bf16.msra.mxu0 %v1252
    %1754 = vmatprep.subr.bf16.mxu0 %v1261
    %1755 = vmatpush1.bf16.msra.mxu0 %v1260
    %1756 = vmatprep.subr.bf16.mxu0 %v1269
    %1757 = vmatpush1.bf16.msra.mxu0 %v1268
    %1758 = vmatprep.subr.bf16.mxu0 %v1277
    %1759 = vmatpush1.bf16.msra.mxu0 %v1276
    %1760 = vmatprep.subr.bf16.mxu0 %v1285
    %1761 = vmatpush1.bf16.msra.mxu0 %v1284
    %1762 = vmatprep.subr.bf16.mxu0 %v1293
    %1763 = vmatpush1.bf16.msra.mxu0 %v1292
    %1764 = vmatprep.subr.bf16.mxu0 %v1301
    %1765 = vmatpush1.bf16.msra.mxu0 %v1300
    %1766 = vmatprep.subr.bf16.mxu0 %v1309
    %1767 = vmatpush1.bf16.msra.mxu0 %v1308
    %1768 = vmatprep.subr.bf16.mxu0 %v1317
    %1769 = vmatpush1.bf16.msra.mxu0 %v1316
    %1770 = vmatprep.subr.bf16.mxu0 %v1325
    %1771 = vmatpush1.bf16.msra.mxu0 %v1324
    %1772 = vmatprep.subr.bf16.mxu0 %v1333
    %1773 = vmatpush1.bf16.msra.mxu0 %v1332
    %1774 = vmatprep.subr.bf16.mxu0 %v1341
    %1775 = vmatpush1.bf16.msra.mxu0 %v1340
    %1776 = vmatprep.subr.bf16.mxu0 %v1349
    %1777 = vmatpush1.bf16.msra.mxu0 %v1348
    %1778 = vmatprep.subr.bf16.mxu0 %v1357
    %1779 = vmatpush1.bf16.msra.mxu0 %v1356
    %1780 = vmatprep.mubr.bf16.mxu0 %v167
    %1781 = vmatmul.mubr.bf16.gmra.mrb[0].mxu0 %v166
    %v1782 = vpop.f32.mrb[0].mxu0
    %v1783 = vadd.f32 %v431, %v1782
    %v1784 = vpop.f32.mrb[0].mxu0
    %v1785 = vadd.f32 %v435, %v1784
    %v1786 = vpop.f32.mrb[0].mxu0
    %v1787 = vpop.f32.mrb[0].mxu0
    %1788 = vdwg.mxu0
    %1789 = vmatprep.subr.bf16.mxu0 %v1365
    %1790 = vmatpush1.bf16.msra.mxu0 %v1364
    %1791 = vmatprep.subr.bf16.mxu0 %v1373
    %1792 = vmatpush1.bf16.msra.mxu0 %v1372
    %1793 = vmatprep.subr.bf16.mxu0 %v1381
    %1794 = vmatpush1.bf16.msra.mxu0 %v1380
    %1795 = vmatprep.subr.bf16.mxu0 %v1389
    %1796 = vmatpush1.bf16.msra.mxu0 %v1388
    %1797 = vmatprep.subr.bf16.mxu0 %v1397
    %1798 = vmatpush1.bf16.msra.mxu0 %v1396
    %1799 = vmatprep.subr.bf16.mxu0 %v1405
    %1800 = vmatpush1.bf16.msra.mxu0 %v1404
    %1801 = vmatprep.subr.bf16.mxu0 %v1413
    %1802 = vmatpush1.bf16.msra.mxu0 %v1412
    %1803 = vmatprep.subr.bf16.mxu0 %v1421
    %1804 = vmatpush1.bf16.msra.mxu0 %v1420
    %1805 = vmatprep.subr.bf16.mxu0 %v1429
    %1806 = vmatpush1.bf16.msra.mxu0 %v1428
    %1807 = vmatprep.subr.bf16.mxu0 %v1437
    %1808 = vmatpush1.bf16.msra.mxu0 %v1436
    %1809 = vmatprep.subr.bf16.mxu0 %v1445
    %1810 = vmatpush1.bf16.msra.mxu0 %v1444
    %1811 = vmatprep.subr.bf16.mxu0 %v1453
    %1812 = vmatpush1.bf16.msra.mxu0 %v1452
    %1813 = vmatprep.subr.bf16.mxu0 %v1461
    %1814 = vmatpush1.bf16.msra.mxu0 %v1460
    %1815 = vmatprep.subr.bf16.mxu0 %v1469
    %1816 = vmatpush1.bf16.msra.mxu0 %v1468
    %1817 = vmatprep.subr.bf16.mxu0 %v1477
    %1818 = vmatpush1.bf16.msra.mxu0 %v1476
    %1819 = vmatprep.subr.bf16.mxu0 %v1485
    %1820 = vmatpush1.bf16.msra.mxu0 %v1484
    %1821 = vmatprep.mubr.bf16.mxu0 %v169
    %1822 = vmatmul.mubr.bf16.gmra.mrb[0].mxu0 %v168
    %v1823 = vpop.f32.mrb[0].mxu0
    %v1824 = vadd.f32 %v1783, %v1823
    %v1825 = vpop.f32.mrb[0].mxu0
    %v1826 = vadd.f32 %v1785, %v1825
    %v1827 = vpop.f32.mrb[0].mxu0
    %v1828 = vpop.f32.mrb[0].mxu0
    %1829 = vdwg.mxu0
    %1830 = vmatprep.subr.bf16.mxu0 %v1239
    %1831 = vmatpush1.bf16.msra.mxu0 %v1238
    %1832 = vmatprep.subr.bf16.mxu0 %v1247
    %1833 = vmatpush1.bf16.msra.mxu0 %v1246
    %1834 = vmatprep.subr.bf16.mxu0 %v1255
    %1835 = vmatpush1.bf16.msra.mxu0 %v1254
    %1836 = vmatprep.subr.bf16.mxu0 %v1263
    %1837 = vmatpush1.bf16.msra.mxu0 %v1262
    %1838 = vmatprep.subr.bf16.mxu0 %v1271
    %1839 = vmatpush1.bf16.msra.mxu0 %v1270
    %1840 = vmatprep.subr.bf16.mxu0 %v1279
    %1841 = vmatpush1.bf16.msra.mxu0 %v1278
    %1842 = vmatprep.subr.bf16.mxu0 %v1287
    %1843 = vmatpush1.bf16.msra.mxu0 %v1286
    %1844 = vmatprep.subr.bf16.mxu0 %v1295
    %1845 = vmatpush1.bf16.msra.mxu0 %v1294
    %1846 = vmatprep.subr.bf16.mxu0 %v1303
    %1847 = vmatpush1.bf16.msra.mxu0 %v1302
    %1848 = vmatprep.subr.bf16.mxu0 %v1311
    %1849 = vmatpush1.bf16.msra.mxu0 %v1310
    %1850 = vmatprep.subr.bf16.mxu0 %v1319
    %1851 = vmatpush1.bf16.msra.mxu0 %v1318
    %1852 = vmatprep.subr.bf16.mxu0 %v1327
    %1853 = vmatpush1.bf16.msra.mxu0 %v1326
    %1854 = vmatprep.subr.bf16.mxu0 %v1335
    %1855 = vmatpush1.bf16.msra.mxu0 %v1334
    %1856 = vmatprep.subr.bf16.mxu0 %v1343
    %1857 = vmatpush1.bf16.msra.mxu0 %v1342
    %1858 = vmatprep.subr.bf16.mxu0 %v1351
    %1859 = vmatpush1.bf16.msra.mxu0 %v1350
    %1860 = vmatprep.subr.bf16.mxu0 %v1359
    %1861 = vmatpush1.bf16.msra.mxu0 %v1358
    %1862 = vmatprep.mubr.bf16.mxu0 %v167
    %1863 = vmatmul.mubr.bf16.gmra.mrb[0].mxu0 %v166
    %v1864 = vpop.f32.mrb[0].mxu0
    %v1865 = vadd.f32 %v439, %v1864
    %v1866 = vpop.f32.mrb[0].mxu0
    %v1867 = vadd.f32 %v443, %v1866
    %v1868 = vpop.f32.mrb[0].mxu0
    %v1869 = vpop.f32.mrb[0].mxu0
    %1870 = vdwg.mxu0
    %1871 = vmatprep.subr.bf16.mxu0 %v1367
    %1872 = vmatpush1.bf16.msra.mxu0 %v1366
    %1873 = vmatprep.subr.bf16.mxu0 %v1375
    %1874 = vmatpush1.bf16.msra.mxu0 %v1374
    %1875 = vmatprep.subr.bf16.mxu0 %v1383
    %1876 = vmatpush1.bf16.msra.mxu0 %v1382
    %1877 = vmatprep.subr.bf16.mxu0 %v1391
    %1878 = vmatpush1.bf16.msra.mxu0 %v1390
    %1879 = vmatprep.subr.bf16.mxu0 %v1399
    %1880 = vmatpush1.bf16.msra.mxu0 %v1398
    %1881 = vmatprep.subr.bf16.mxu0 %v1407
    %1882 = vmatpush1.bf16.msra.mxu0 %v1406
    %1883 = vmatprep.subr.bf16.mxu0 %v1415
    %1884 = vmatpush1.bf16.msra.mxu0 %v1414
    %1885 = vmatprep.subr.bf16.mxu0 %v1423
    %1886 = vmatpush1.bf16.msra.mxu0 %v1422
    %1887 = vmatprep.subr.bf16.mxu0 %v1431
    %1888 = vmatpush1.bf16.msra.mxu0 %v1430
    %1889 = vmatprep.subr.bf16.mxu0 %v1439
    %1890 = vmatpush1.bf16.msra.mxu0 %v1438
    %1891 = vmatprep.subr.bf16.mxu0 %v1447
    %1892 = vmatpush1.bf16.msra.mxu0 %v1446
    %1893 = vmatprep.subr.bf16.mxu0 %v1455
    %1894 = vmatpush1.bf16.msra.mxu0 %v1454
    %1895 = vmatprep.subr.bf16.mxu0 %v1463
    %1896 = vmatpush1.bf16.msra.mxu0 %v1462
    %1897 = vmatprep.subr.bf16.mxu0 %v1471
    %1898 = vmatpush1.bf16.msra.mxu0 %v1470
    %1899 = vmatprep.subr.bf16.mxu0 %v1479
    %1900 = vmatpush1.bf16.msra.mxu0 %v1478
    %1901 = vmatprep.subr.bf16.mxu0 %v1487
    %1902 = vmatpush1.bf16.msra.mxu0 %v1486
    %1903 = vmatprep.mubr.bf16.mxu0 %v169
    %1904 = vmatmul.mubr.bf16.gmra.mrb[0].mxu0 %v168
    %v1905 = vpop.f32.mrb[0].mxu0
    %v1906 = vadd.f32 %v1865, %v1905
    %v1907 = vpop.f32.mrb[0].mxu0
    %v1908 = vadd.f32 %v1867, %v1907
    %v1909 = vpop.f32.mrb[0].mxu0
    %v1910 = vpop.f32.mrb[0].mxu0
    %1911 = vdwg.mxu0
    %1912 = vmatprep.subr.bf16.mxu0 %v1241
    %1913 = vmatpush1.bf16.msra.mxu0 %v1240
    %1914 = vmatprep.subr.bf16.mxu0 %v1249
    %1915 = vmatpush1.bf16.msra.mxu0 %v1248
    %1916 = vmatprep.subr.bf16.mxu0 %v1257
    %1917 = vmatpush1.bf16.msra.mxu0 %v1256
    %1918 = vmatprep.subr.bf16.mxu0 %v1265
    %1919 = vmatpush1.bf16.msra.mxu0 %v1264
    %1920 = vmatprep.subr.bf16.mxu0 %v1273
    %1921 = vmatpush1.bf16.msra.mxu0 %v1272
    %1922 = vmatprep.subr.bf16.mxu0 %v1281
    %1923 = vmatpush1.bf16.msra.mxu0 %v1280
    %1924 = vmatprep.subr.bf16.mxu0 %v1289
    %1925 = vmatpush1.bf16.msra.mxu0 %v1288
    %1926 = vmatprep.subr.bf16.mxu0 %v1297
    %1927 = vmatpush1.bf16.msra.mxu0 %v1296
    %1928 = vmatprep.subr.bf16.mxu0 %v1305
    %1929 = vmatpush1.bf16.msra.mxu0 %v1304
    %1930 = vmatprep.subr.bf16.mxu0 %v1313
    %1931 = vmatpush1.bf16.msra.mxu0 %v1312
    %1932 = vmatprep.subr.bf16.mxu0 %v1321
    %1933 = vmatpush1.bf16.msra.mxu0 %v1320
    %1934 = vmatprep.subr.bf16.mxu0 %v1329
    %1935 = vmatpush1.bf16.msra.mxu0 %v1328
    %1936 = vmatprep.subr.bf16.mxu0 %v1337
    %1937 = vmatpush1.bf16.msra.mxu0 %v1336
    %1938 = vmatprep.subr.bf16.mxu0 %v1345
    %1939 = vmatpush1.bf16.msra.mxu0 %v1344
    %1940 = vmatprep.subr.bf16.mxu0 %v1353
    %1941 = vmatpush1.bf16.msra.mxu0 %v1352
    %1942 = vmatprep.subr.bf16.mxu0 %v1361
    %1943 = vmatpush1.bf16.msra.mxu0 %v1360
    %1944 = vmatprep.mubr.bf16.mxu0 %v167
    %1945 = vmatmul.mubr.bf16.gmra.mrb[0].mxu0 %v166
    %v1946 = vpop.f32.mrb[0].mxu0
    %v1947 = vadd.f32 %v447, %v1946
    %v1948 = vpop.f32.mrb[0].mxu0
    %v1949 = vadd.f32 %v451, %v1948
    %v1950 = vpop.f32.mrb[0].mxu0
    %v1951 = vpop.f32.mrb[0].mxu0
    %1952 = vdwg.mxu0
    %1953 = vmatprep.subr.bf16.mxu0 %v1369
    %1954 = vmatpush1.bf16.msra.mxu0 %v1368
    %1955 = vmatprep.subr.bf16.mxu0 %v1377
    %1956 = vmatpush1.bf16.msra.mxu0 %v1376
    %1957 = vmatprep.subr.bf16.mxu0 %v1385
    %1958 = vmatpush1.bf16.msra.mxu0 %v1384
    %1959 = vmatprep.subr.bf16.mxu0 %v1393
    %1960 = vmatpush1.bf16.msra.mxu0 %v1392
    %1961 = vmatprep.subr.bf16.mxu0 %v1401
    %1962 = vmatpush1.bf16.msra.mxu0 %v1400
    %1963 = vmatprep.subr.bf16.mxu0 %v1409
    %1964 = vmatpush1.bf16.msra.mxu0 %v1408
    %1965 = vmatprep.subr.bf16.mxu0 %v1417
    %1966 = vmatpush1.bf16.msra.mxu0 %v1416
    %1967 = vmatprep.subr.bf16.mxu0 %v1425
    %1968 = vmatpush1.bf16.msra.mxu0 %v1424
    %1969 = vmatprep.subr.bf16.mxu0 %v1433
    %1970 = vmatpush1.bf16.msra.mxu0 %v1432
    %1971 = vmatprep.subr.bf16.mxu0 %v1441
    %1972 = vmatpush1.bf16.msra.mxu0 %v1440
    %1973 = vmatprep.subr.bf16.mxu0 %v1449
    %1974 = vmatpush1.bf16.msra.mxu0 %v1448
    %1975 = vmatprep.subr.bf16.mxu0 %v1457
    %1976 = vmatpush1.bf16.msra.mxu0 %v1456
    %1977 = vmatprep.subr.bf16.mxu0 %v1465
    %1978 = vmatpush1.bf16.msra.mxu0 %v1464
    %1979 = vmatprep.subr.bf16.mxu0 %v1473
    %1980 = vmatpush1.bf16.msra.mxu0 %v1472
    %1981 = vmatprep.subr.bf16.mxu0 %v1481
    %1982 = vmatpush1.bf16.msra.mxu0 %v1480
    %1983 = vmatprep.subr.bf16.mxu0 %v1489
    %1984 = vmatpush1.bf16.msra.mxu0 %v1488
    %1985 = vmatprep.mubr.bf16.mxu0 %v169
    %1986 = vmatmul.mubr.bf16.gmra.mrb[0].mxu0 %v168
    %v1987 = vpop.f32.mrb[0].mxu0
    %v1988 = vadd.f32 %v1947, %v1987
    %v1989 = vpop.f32.mrb[0].mxu0
    %v1990 = vadd.f32 %v1949, %v1989
    %v1991 = vpop.f32.mrb[0].mxu0
    %v1992 = vpop.f32.mrb[0].mxu0
    %1993 = vdwg.mxu0
    %1994 = vmatprep.subr.bf16.mxu0 %v1243
    %1995 = vmatpush1.bf16.msra.mxu0 %v1242
    %1996 = vmatprep.subr.bf16.mxu0 %v1251
    %1997 = vmatpush1.bf16.msra.mxu0 %v1250
    %1998 = vmatprep.subr.bf16.mxu0 %v1259
    %1999 = vmatpush1.bf16.msra.mxu0 %v1258
    %2000 = vmatprep.subr.bf16.mxu0 %v1267
    %2001 = vmatpush1.bf16.msra.mxu0 %v1266
    %2002 = vmatprep.subr.bf16.mxu0 %v1275
    %2003 = vmatpush1.bf16.msra.mxu0 %v1274
    %2004 = vmatprep.subr.bf16.mxu0 %v1283
    %2005 = vmatpush1.bf16.msra.mxu0 %v1282
    %2006 = vmatprep.subr.bf16.mxu0 %v1291
    %2007 = vmatpush1.bf16.msra.mxu0 %v1290
    %2008 = vmatprep.subr.bf16.mxu0 %v1299
    %2009 = vmatpush1.bf16.msra.mxu0 %v1298
    %2010 = vmatprep.subr.bf16.mxu0 %v1307
    %2011 = vmatpush1.bf16.msra.mxu0 %v1306
    %2012 = vmatprep.subr.bf16.mxu0 %v1315
    %2013 = vmatpush1.bf16.msra.mxu0 %v1314
    %2014 = vmatprep.subr.bf16.mxu0 %v1323
    %2015 = vmatpush1.bf16.msra.mxu0 %v1322
    %2016 = vmatprep.subr.bf16.mxu0 %v1331
    %2017 = vmatpush1.bf16.msra.mxu0 %v1330
    %2018 = vmatprep.subr.bf16.mxu0 %v1339
    %2019 = vmatpush1.bf16.msra.mxu0 %v1338
    %2020 = vmatprep.subr.bf16.mxu0 %v1347
    %2021 = vmatpush1.bf16.msra.mxu0 %v1346
    %2022 = vmatprep.subr.bf16.mxu0 %v1355
    %2023 = vmatpush1.bf16.msra.mxu0 %v1354
    %2024 = vmatprep.subr.bf16.mxu0 %v1363
    %2025 = vmatpush1.bf16.msra.mxu0 %v1362
    %2026 = vmatprep.mubr.bf16.mxu0 %v167
    %2027 = vmatmul.mubr.bf16.gmra.mrb[0].mxu0 %v166
    %v2028 = vpop.f32.mrb[0].mxu0
    %v2029 = vadd.f32 %v455, %v2028
    %v2030 = vpop.f32.mrb[0].mxu0
    %v2031 = vadd.f32 %v459, %v2030
    %v2032 = vpop.f32.mrb[0].mxu0
    %v2033 = vpop.f32.mrb[0].mxu0
    %2034 = vdwg.mxu0
    %2035 = vmatprep.subr.bf16.mxu0 %v1371
    %2036 = vmatpush1.bf16.msra.mxu0 %v1370
    %2037 = vmatprep.subr.bf16.mxu0 %v1379
    %2038 = vmatpush1.bf16.msra.mxu0 %v1378
    %2039 = vmatprep.subr.bf16.mxu0 %v1387
    %2040 = vmatpush1.bf16.msra.mxu0 %v1386
    %2041 = vmatprep.subr.bf16.mxu0 %v1395
    %2042 = vmatpush1.bf16.msra.mxu0 %v1394
    %2043 = vmatprep.subr.bf16.mxu0 %v1403
    %2044 = vmatpush1.bf16.msra.mxu0 %v1402
    %2045 = vmatprep.subr.bf16.mxu0 %v1411
    %2046 = vmatpush1.bf16.msra.mxu0 %v1410
    %2047 = vmatprep.subr.bf16.mxu0 %v1419
    %2048 = vmatpush1.bf16.msra.mxu0 %v1418
    %2049 = vmatprep.subr.bf16.mxu0 %v1427
    %2050 = vmatpush1.bf16.msra.mxu0 %v1426
    %2051 = vmatprep.subr.bf16.mxu0 %v1435
    %2052 = vmatpush1.bf16.msra.mxu0 %v1434
    %2053 = vmatprep.subr.bf16.mxu0 %v1443
    %2054 = vmatpush1.bf16.msra.mxu0 %v1442
    %2055 = vmatprep.subr.bf16.mxu0 %v1451
    %2056 = vmatpush1.bf16.msra.mxu0 %v1450
    %2057 = vmatprep.subr.bf16.mxu0 %v1459
    %2058 = vmatpush1.bf16.msra.mxu0 %v1458
    %2059 = vmatprep.subr.bf16.mxu0 %v1467
    %2060 = vmatpush1.bf16.msra.mxu0 %v1466
    %2061 = vmatprep.subr.bf16.mxu0 %v1475
    %2062 = vmatpush1.bf16.msra.mxu0 %v1474
    %2063 = vmatprep.subr.bf16.mxu0 %v1483
    %2064 = vmatpush1.bf16.msra.mxu0 %v1482
    %2065 = vmatprep.subr.bf16.mxu0 %v1491
    %2066 = vmatpush1.bf16.msra.mxu0 %v1490
    %2067 = vmatprep.mubr.bf16.mxu0 %v169
    %2068 = vmatmul.mubr.bf16.gmra.mrb[0].mxu0 %v168
    %v2069 = vpop.f32.mrb[0].mxu0
    %v2070 = vadd.f32 %v2029, %v2069
    %v2071 = vpop.f32.mrb[0].mxu0
    %v2072 = vadd.f32 %v2031, %v2071
    %v2073 = vpop.f32.mrb[0].mxu0
    %v2074 = vpop.f32.mrb[0].mxu0
    %2075 = vdwg.mxu0
    %v2076 = vmax.f32 %v1824, 0.0
    %v2077 = vmax.f32 %v1826, 0.0
    %v2078 = vmax.f32 %v1906, 0.0
    %v2079 = vmax.f32 %v1908, 0.0
    %v2080 = vmax.f32 %v1988, 0.0
    %v2081 = vmax.f32 %v1990, 0.0
    %v2082 = vmax.f32 %v2070, 0.0
    %v2083 = vmax.f32 %v2072, 0.0
    %v2084 = vpack.c.bf16 %v2076, %v2076
    %v2085 = vpack.c.bf16 %v2077, %v2077
    %v2086 = vpack.c.bf16 %v2078, %v2078
    %v2087 = vpack.c.bf16 %v2079, %v2079
    %v2088 = vpack.c.bf16 %v2080, %v2080
    %v2089 = vpack.c.bf16 %v2081, %v2081
    %v2090 = vpack.c.bf16 %v2082, %v2082
    %v2091 = vpack.c.bf16 %v2083, %v2083
    %v2092 = vld [vmem:[%s5] sm:$0xff]
    %v2093 = vld [vmem:[%s5 + $0x8] sm:$0xff]
    %v2094 = vld [vmem:[%s5 + $0x10] sm:$0xff]
    %v2095 = vld [vmem:[%s5 + $0x18] sm:$0xf]
    %v2096 = vld [vmem:[%s5 + $0x1c] sm:$0xff]
    %v2097 = vld [vmem:[%s5 + $0x24] sm:$0xff]
    %v2098 = vld [vmem:[%s5 + $0x2c] sm:$0xff]
    %v2099 = vld [vmem:[%s5 + $0x34] sm:$0xf]
    %v2100 = vld [vmem:[%s5 + $0x38] sm:$0xff]
    %v2101 = vld [vmem:[%s5 + $0x40] sm:$0xff]
    %v2102 = vld [vmem:[%s5 + $0x48] sm:$0xff]
    %v2103 = vld [vmem:[%s5 + $0x50] sm:$0xf]
    %v2104 = vld [vmem:[%s5 + $0x54] sm:$0xff]
    %v2105 = vld [vmem:[%s5 + $0x5c] sm:$0xff]
    %v2106 = vld [vmem:[%s5 + $0x64] sm:$0xff]
    %v2107 = vld [vmem:[%s5 + $0x6c] sm:$0xf]
    %v2108 = vld [vmem:[%s5 + $0x70] sm:$0xff]
    %v2109 = vld [vmem:[%s5 + $0x78] sm:$0xff]
    %v2110 = vld [vmem:[%s5 + $0x80] sm:$0xff]
    %v2111 = vld [vmem:[%s5 + $0x88] sm:$0xf]
    %v2112 = vld [vmem:[%s5 + $0x8c] sm:$0xff]
    %v2113 = vld [vmem:[%s5 + $0x94] sm:$0xff]
    %v2114 = vld [vmem:[%s5 + $0x9c] sm:$0xff]
    %v2115 = vld [vmem:[%s5 + $0xa4] sm:$0xf]
    %v2116 = vld [vmem:[%s5 + $0xa8] sm:$0xff]
    %v2117 = vld [vmem:[%s5 + $0xb0] sm:$0xff]
    %v2118 = vld [vmem:[%s5 + $0xb8] sm:$0xff]
    %v2119 = vld [vmem:[%s5 + $0xc0] sm:$0xf]
    %v2120 = vld [vmem:[%s5 + $0xc4] sm:$0xff]
    %v2121 = vld [vmem:[%s5 + $0xcc] sm:$0xff]
    %v2122 = vld [vmem:[%s5 + $0xd4] sm:$0xff]
    %v2123 = vld [vmem:[%s5 + $0xdc] sm:$0xf]
    %v2124 = vld [vmem:[%s5 + $0xe0] sm:$0xff]
    %v2125 = vld [vmem:[%s5 + $0xe8] sm:$0xff]
    %v2126 = vld [vmem:[%s5 + $0xf0] sm:$0xff]
    %v2127 = vld [vmem:[%s5 + $0xf8] sm:$0xf]
    %v2128 = vld [vmem:[%s5 + $0xfc] sm:$0xff]
    %v2129 = vld [vmem:[%s5 + $0x104] sm:$0xff]
    %v2130 = vld [vmem:[%s5 + $0x10c] sm:$0xff]
    %v2131 = vld [vmem:[%s5 + $0x114] sm:$0xf]
    %v2132 = vld [vmem:[%s5 + $0x118] sm:$0xff]
    %v2133 = vld [vmem:[%s5 + $0x120] sm:$0xff]
    %v2134 = vld [vmem:[%s5 + $0x128] sm:$0xff]
    %v2135 = vld [vmem:[%s5 + $0x130] sm:$0xf]
    %v2136 = vld [vmem:[%s5 + $0x134] sm:$0xff]
    %v2137 = vld [vmem:[%s5 + $0x13c] sm:$0xff]
    %v2138 = vld [vmem:[%s5 + $0x144] sm:$0xff]
    %v2139 = vld [vmem:[%s5 + $0x14c] sm:$0xf]
    %v2140 = vld [vmem:[%s5 + $0x150] sm:$0xff]
    %v2141 = vld [vmem:[%s5 + $0x158] sm:$0xff]
    %v2142 = vld [vmem:[%s5 + $0x160] sm:$0xff]
    %v2143 = vld [vmem:[%s5 + $0x168] sm:$0xf]
    %v2144 = vld [vmem:[%s5 + $0x16c] sm:$0xff]
    %v2145 = vld [vmem:[%s5 + $0x174] sm:$0xff]
    %v2146 = vld [vmem:[%s5 + $0x17c] sm:$0xff]
    %v2147 = vld [vmem:[%s5 + $0x184] sm:$0xf]
    %v2148 = vld [vmem:[%s5 + $0x188] sm:$0xff]
    %v2149 = vld [vmem:[%s5 + $0x190] sm:$0xff]
    %v2150 = vld [vmem:[%s5 + $0x198] sm:$0xff]
    %v2151 = vld [vmem:[%s5 + $0x1a0] sm:$0xf]
    %v2152 = vld [vmem:[%s5 + $0x1a4] sm:$0xff]
    %v2153 = vld [vmem:[%s5 + $0x1ac] sm:$0xff]
    %v2154 = vld [vmem:[%s5 + $0x1b4] sm:$0xff]
    %v2155 = vld [vmem:[%s5 + $0x1bc] sm:$0xf]
    %v2156 = vld [vmem:[%s5 + $0x1c0] sm:$0xff]
    %v2157 = vld [vmem:[%s5 + $0x1c8] sm:$0xff]
    %v2158 = vld [vmem:[%s5 + $0x1d0] sm:$0xff]
    %v2159 = vld [vmem:[%s5 + $0x1d8] sm:$0xf]
    %v2160 = vld [vmem:[%s5 + $0x1dc] sm:$0xff]
    %v2161 = vld [vmem:[%s5 + $0x1e4] sm:$0xff]
    %v2162 = vld [vmem:[%s5 + $0x1ec] sm:$0xff]
    %v2163 = vld [vmem:[%s5 + $0x1f4] sm:$0xf]
    %v2164 = vld [vmem:[%s5 + $0x1f8] sm:$0xff]
    %v2165 = vld [vmem:[%s5 + $0x200] sm:$0xff]
    %v2166 = vld [vmem:[%s5 + $0x208] sm:$0xff]
    %v2167 = vld [vmem:[%s5 + $0x210] sm:$0xf]
    %v2168 = vld [vmem:[%s5 + $0x214] sm:$0xff]
    %v2169 = vld [vmem:[%s5 + $0x21c] sm:$0xff]
    %v2170 = vld [vmem:[%s5 + $0x224] sm:$0xff]
    %v2171 = vld [vmem:[%s5 + $0x22c] sm:$0xf]
    %v2172 = vld [vmem:[%s5 + $0x230] sm:$0xff]
    %v2173 = vld [vmem:[%s5 + $0x238] sm:$0xff]
    %v2174 = vld [vmem:[%s5 + $0x240] sm:$0xff]
    %v2175 = vld [vmem:[%s5 + $0x248] sm:$0xf]
    %v2176 = vld [vmem:[%s5 + $0x24c] sm:$0xff]
    %v2177 = vld [vmem:[%s5 + $0x254] sm:$0xff]
    %v2178 = vld [vmem:[%s5 + $0x25c] sm:$0xff]
    %v2179 = vld [vmem:[%s5 + $0x264] sm:$0xf]
    %v2180 = vld [vmem:[%s5 + $0x268] sm:$0xff]
    %v2181 = vld [vmem:[%s5 + $0x270] sm:$0xff]
    %v2182 = vld [vmem:[%s5 + $0x278] sm:$0xff]
    %v2183 = vld [vmem:[%s5 + $0x280] sm:$0xf]
    %v2184 = vld [vmem:[%s5 + $0x284] sm:$0xff]
    %v2185 = vld [vmem:[%s5 + $0x28c] sm:$0xff]
    %v2186 = vld [vmem:[%s5 + $0x294] sm:$0xff]
    %v2187 = vld [vmem:[%s5 + $0x29c] sm:$0xf]
    %v2188 = vld [vmem:[%s5 + $0x2a0] sm:$0xff]
    %v2189 = vld [vmem:[%s5 + $0x2a8] sm:$0xff]
    %v2190 = vld [vmem:[%s5 + $0x2b0] sm:$0xff]
    %v2191 = vld [vmem:[%s5 + $0x2b8] sm:$0xf]
    %v2192 = vld [vmem:[%s5 + $0x2bc] sm:$0xff]
    %v2193 = vld [vmem:[%s5 + $0x2c4] sm:$0xff]
    %v2194 = vld [vmem:[%s5 + $0x2cc] sm:$0xff]
    %v2195 = vld [vmem:[%s5 + $0x2d4] sm:$0xf]
    %v2196 = vld [vmem:[%s5 + $0x2d8] sm:$0xff]
    %v2197 = vld [vmem:[%s5 + $0x2e0] sm:$0xff]
    %v2198 = vld [vmem:[%s5 + $0x2e8] sm:$0xff]
    %v2199 = vld [vmem:[%s5 + $0x2f0] sm:$0xf]
    %v2200 = vld [vmem:[%s5 + $0x2f4] sm:$0xff]
    %v2201 = vld [vmem:[%s5 + $0x2fc] sm:$0xff]
    %v2202 = vld [vmem:[%s5 + $0x304] sm:$0xff]
    %v2203 = vld [vmem:[%s5 + $0x30c] sm:$0xf]
    %v2204 = vld [vmem:[%s5 + $0x310] sm:$0xff]
    %v2205 = vld [vmem:[%s5 + $0x318] sm:$0xff]
    %v2206 = vld [vmem:[%s5 + $0x320] sm:$0xff]
    %v2207 = vld [vmem:[%s5 + $0x328] sm:$0xf]
    %v2208 = vld [vmem:[%s5 + $0x32c] sm:$0xff]
    %v2209 = vld [vmem:[%s5 + $0x334] sm:$0xff]
    %v2210 = vld [vmem:[%s5 + $0x33c] sm:$0xff]
    %v2211 = vld [vmem:[%s5 + $0x344] sm:$0xf]
    %v2212 = vld [vmem:[%s5 + $0x348] sm:$0xff]
    %v2213 = vld [vmem:[%s5 + $0x350] sm:$0xff]
    %v2214 = vld [vmem:[%s5 + $0x358] sm:$0xff]
    %v2215 = vld [vmem:[%s5 + $0x360] sm:$0xf]
    %v2216 = vld [vmem:[%s5 + $0x364] sm:$0xff]
    %v2217 = vld [vmem:[%s5 + $0x36c] sm:$0xff]
    %v2218 = vld [vmem:[%s5 + $0x374] sm:$0xff]
    %v2219 = vld [vmem:[%s5 + $0x37c] sm:$0xf]
    %v2220 = vld [vmem:[%s5 + $0x380] sm:$0xff]
    %v2221 = vld [vmem:[%s5 + $0x388] sm:$0xff]
    %v2222 = vld [vmem:[%s5 + $0x390] sm:$0xff]
    %v2223 = vld [vmem:[%s5 + $0x398] sm:$0xf]
    %v2224 = vld [vmem:[%s5 + $0x39c] sm:$0xff]
    %v2225 = vld [vmem:[%s5 + $0x3a4] sm:$0xff]
    %v2226 = vld [vmem:[%s5 + $0x3ac] sm:$0xff]
    %v2227 = vld [vmem:[%s5 + $0x3b4] sm:$0xf]
    %v2228 = vld [vmem:[%s5 + $0x3b8] sm:$0xff]
    %v2229 = vld [vmem:[%s5 + $0x3c0] sm:$0xff]
    %v2230 = vld [vmem:[%s5 + $0x3c8] sm:$0xff]
    %v2231 = vld [vmem:[%s5 + $0x3d0] sm:$0xf]
    %v2232 = vld [vmem:[%s5 + $0x3d4] sm:$0xff]
    %v2233 = vld [vmem:[%s5 + $0x3dc] sm:$0xff]
    %v2234 = vld [vmem:[%s5 + $0x3e4] sm:$0xff]
    %v2235 = vld [vmem:[%s5 + $0x3ec] sm:$0xf]
    %v2236 = vld [vmem:[%s5 + $0x3f0] sm:$0xff]
    %v2237 = vld [vmem:[%s5 + $0x3f8] sm:$0xff]
    %v2238 = vld [vmem:[%s5 + $0x400] sm:$0xff]
    %v2239 = vld [vmem:[%s5 + $0x408] sm:$0xf]
    %v2240 = vld [vmem:[%s5 + $0x40c] sm:$0xff]
    %v2241 = vld [vmem:[%s5 + $0x414] sm:$0xff]
    %v2242 = vld [vmem:[%s5 + $0x41c] sm:$0xff]
    %v2243 = vld [vmem:[%s5 + $0x424] sm:$0xf]
    %v2244 = vld [vmem:[%s5 + $0x428] sm:$0xff]
    %v2245 = vld [vmem:[%s5 + $0x430] sm:$0xff]
    %v2246 = vld [vmem:[%s5 + $0x438] sm:$0xff]
    %v2247 = vld [vmem:[%s5 + $0x440] sm:$0xf]
    %v2248 = vld [vmem:[%s5 + $0x444] sm:$0xff]
    %v2249 = vld [vmem:[%s5 + $0x44c] sm:$0xff]
    %v2250 = vld [vmem:[%s5 + $0x454] sm:$0xff]
    %v2251 = vld [vmem:[%s5 + $0x45c] sm:$0xf]
    %v2252 = vld [vmem:[%s5 + $0x460] sm:$0xff]
    %v2253 = vld [vmem:[%s5 + $0x468] sm:$0xff]
    %v2254 = vld [vmem:[%s5 + $0x470] sm:$0xff]
    %v2255 = vld [vmem:[%s5 + $0x478] sm:$0xf]
    %v2256 = vld [vmem:[%s5 + $0x47c] sm:$0xff]
    %v2257 = vld [vmem:[%s5 + $0x484] sm:$0xff]
    %v2258 = vld [vmem:[%s5 + $0x48c] sm:$0xff]
    %v2259 = vld [vmem:[%s5 + $0x494] sm:$0xf]
    %v2260 = vld [vmem:[%s5 + $0x498] sm:$0xff]
    %v2261 = vld [vmem:[%s5 + $0x4a0] sm:$0xff]
    %v2262 = vld [vmem:[%s5 + $0x4a8] sm:$0xff]
    %v2263 = vld [vmem:[%s5 + $0x4b0] sm:$0xf]
    %v2264 = vld [vmem:[%s5 + $0x4b4] sm:$0xff]
    %v2265 = vld [vmem:[%s5 + $0x4bc] sm:$0xff]
    %v2266 = vld [vmem:[%s5 + $0x4c4] sm:$0xff]
    %v2267 = vld [vmem:[%s5 + $0x4cc] sm:$0xf]
    %v2268 = vld [vmem:[%s5 + $0x4d0] sm:$0xff]
    %v2269 = vld [vmem:[%s5 + $0x4d8] sm:$0xff]
    %v2270 = vld [vmem:[%s5 + $0x4e0] sm:$0xff]
    %v2271 = vld [vmem:[%s5 + $0x4e8] sm:$0xf]
    %v2272 = vld [vmem:[%s5 + $0x4ec] sm:$0xff]
    %v2273 = vld [vmem:[%s5 + $0x4f4] sm:$0xff]
    %v2274 = vld [vmem:[%s5 + $0x4fc] sm:$0xff]
    %v2275 = vld [vmem:[%s5 + $0x504] sm:$0xf]
    %v2276 = vld [vmem:[%s5 + $0x508] sm:$0xff]
    %v2277 = vld [vmem:[%s5 + $0x510] sm:$0xff]
    %v2278 = vld [vmem:[%s5 + $0x518] sm:$0xff]
    %v2279 = vld [vmem:[%s5 + $0x520] sm:$0xf]
    %v2280 = vld [vmem:[%s5 + $0x524] sm:$0xff]
    %v2281 = vld [vmem:[%s5 + $0x52c] sm:$0xff]
    %v2282 = vld [vmem:[%s5 + $0x534] sm:$0xff]
    %v2283 = vld [vmem:[%s5 + $0x53c] sm:$0xf]
    %v2284 = vld [vmem:[%s5 + $0x540] sm:$0xff]
    %v2285 = vld [vmem:[%s5 + $0x548] sm:$0xff]
    %v2286 = vld [vmem:[%s5 + $0x550] sm:$0xff]
    %v2287 = vld [vmem:[%s5 + $0x558] sm:$0xf]
    %v2288 = vld [vmem:[%s5 + $0x55c] sm:$0xff]
    %v2289 = vld [vmem:[%s5 + $0x564] sm:$0xff]
    %v2290 = vld [vmem:[%s5 + $0x56c] sm:$0xff]
    %v2291 = vld [vmem:[%s5 + $0x574] sm:$0xf]
    %v2292 = vld [vmem:[%s5 + $0x578] sm:$0xff]
    %v2293 = vld [vmem:[%s5 + $0x580] sm:$0xff]
    %v2294 = vld [vmem:[%s5 + $0x588] sm:$0xff]
    %v2295 = vld [vmem:[%s5 + $0x590] sm:$0xf]
    %v2296 = vld [vmem:[%s5 + $0x594] sm:$0xff]
    %v2297 = vld [vmem:[%s5 + $0x59c] sm:$0xff]
    %v2298 = vld [vmem:[%s5 + $0x5a4] sm:$0xff]
    %v2299 = vld [vmem:[%s5 + $0x5ac] sm:$0xf]
    %v2300 = vld [vmem:[%s5 + $0x5b0] sm:$0xff]
    %v2301 = vld [vmem:[%s5 + $0x5b8] sm:$0xff]
    %v2302 = vld [vmem:[%s5 + $0x5c0] sm:$0xff]
    %v2303 = vld [vmem:[%s5 + $0x5c8] sm:$0xf]
    %v2304 = vld [vmem:[%s5 + $0x5cc] sm:$0xff]
    %v2305 = vld [vmem:[%s5 + $0x5d4] sm:$0xff]
    %v2306 = vld [vmem:[%s5 + $0x5dc] sm:$0xff]
    %v2307 = vld [vmem:[%s5 + $0x5e4] sm:$0xf]
    %v2308 = vld [vmem:[%s5 + $0x5e8] sm:$0xff]
    %v2309 = vld [vmem:[%s5 + $0x5f0] sm:$0xff]
    %v2310 = vld [vmem:[%s5 + $0x5f8] sm:$0xff]
    %v2311 = vld [vmem:[%s5 + $0x600] sm:$0xf]
    %v2312 = vld [vmem:[%s5 + $0x604] sm:$0xff]
    %v2313 = vld [vmem:[%s5 + $0x60c] sm:$0xff]
    %v2314 = vld [vmem:[%s5 + $0x614] sm:$0xff]
    %v2315 = vld [vmem:[%s5 + $0x61c] sm:$0xf]
    %v2316 = vld [vmem:[%s5 + $0x620] sm:$0xff]
    %v2317 = vld [vmem:[%s5 + $0x628] sm:$0xff]
    %v2318 = vld [vmem:[%s5 + $0x630] sm:$0xff]
    %v2319 = vld [vmem:[%s5 + $0x638] sm:$0xf]
    %v2320 = vld [vmem:[%s5 + $0x63c] sm:$0xff]
    %v2321 = vld [vmem:[%s5 + $0x644] sm:$0xff]
    %v2322 = vld [vmem:[%s5 + $0x64c] sm:$0xff]
    %v2323 = vld [vmem:[%s5 + $0x654] sm:$0xf]
    %v2324 = vld [vmem:[%s5 + $0x658] sm:$0xff]
    %v2325 = vld [vmem:[%s5 + $0x660] sm:$0xff]
    %v2326 = vld [vmem:[%s5 + $0x668] sm:$0xff]
    %v2327 = vld [vmem:[%s5 + $0x670] sm:$0xf]
    %v2328 = vld [vmem:[%s5 + $0x674] sm:$0xff]
    %v2329 = vld [vmem:[%s5 + $0x67c] sm:$0xff]
    %v2330 = vld [vmem:[%s5 + $0x684] sm:$0xff]
    %v2331 = vld [vmem:[%s5 + $0x68c] sm:$0xf]
    %v2332 = vld [vmem:[%s5 + $0x690] sm:$0xff]
    %v2333 = vld [vmem:[%s5 + $0x698] sm:$0xff]
    %v2334 = vld [vmem:[%s5 + $0x6a0] sm:$0xff]
    %v2335 = vld [vmem:[%s5 + $0x6a8] sm:$0xf]
    %v2336 = vld [vmem:[%s5 + $0x6ac] sm:$0xff]
    %v2337 = vld [vmem:[%s5 + $0x6b4] sm:$0xff]
    %v2338 = vld [vmem:[%s5 + $0x6bc] sm:$0xff]
    %v2339 = vld [vmem:[%s5 + $0x6c4] sm:$0xf]
    %v2340 = vld [vmem:[%s5 + $0x6c8] sm:$0xff]
    %v2341 = vld [vmem:[%s5 + $0x6d0] sm:$0xff]
    %v2342 = vld [vmem:[%s5 + $0x6d8] sm:$0xff]
    %v2343 = vld [vmem:[%s5 + $0x6e0] sm:$0xf]
    %v2344 = vld [vmem:[%s5 + $0x6e4] sm:$0xff]
    %v2345 = vld [vmem:[%s5 + $0x6ec] sm:$0xff]
    %v2346 = vld [vmem:[%s5 + $0x6f4] sm:$0xff]
    %v2347 = vld [vmem:[%s5 + $0x6fc] sm:$0xf]
    %v2348 = vld [vmem:[%s5 + $0x700] sm:$0xff]
    %v2349 = vld [vmem:[%s5 + $0x708] sm:$0xff]
    %v2350 = vld [vmem:[%s5 + $0x710] sm:$0xff]
    %v2351 = vld [vmem:[%s5 + $0x718] sm:$0xf]
    %v2352 = vld [vmem:[%s5 + $0x71c] sm:$0xff]
    %v2353 = vld [vmem:[%s5 + $0x724] sm:$0xff]
    %v2354 = vld [vmem:[%s5 + $0x72c] sm:$0xff]
    %v2355 = vld [vmem:[%s5 + $0x734] sm:$0xf]
    %v2356 = vld [vmem:[%s5 + $0x738] sm:$0xff]
    %v2357 = vld [vmem:[%s5 + $0x740] sm:$0xff]
    %v2358 = vld [vmem:[%s5 + $0x748] sm:$0xff]
    %v2359 = vld [vmem:[%s5 + $0x750] sm:$0xf]
    %v2360 = vld [vmem:[%s5 + $0x754] sm:$0xff]
    %v2361 = vld [vmem:[%s5 + $0x75c] sm:$0xff]
    %v2362 = vld [vmem:[%s5 + $0x764] sm:$0xff]
    %v2363 = vld [vmem:[%s5 + $0x76c] sm:$0xf]
    %v2364 = vld [vmem:[%s5 + $0x770] sm:$0xff]
    %v2365 = vld [vmem:[%s5 + $0x778] sm:$0xff]
    %v2366 = vld [vmem:[%s5 + $0x780] sm:$0xff]
    %v2367 = vld [vmem:[%s5 + $0x788] sm:$0xf]
    %v2368 = vld [vmem:[%s5 + $0x78c] sm:$0xff]
    %v2369 = vld [vmem:[%s5 + $0x794] sm:$0xff]
    %v2370 = vld [vmem:[%s5 + $0x79c] sm:$0xff]
    %v2371 = vld [vmem:[%s5 + $0x7a4] sm:$0xf]
    %v2372 = vld [vmem:[%s5 + $0x7a8] sm:$0xff]
    %v2373 = vld [vmem:[%s5 + $0x7b0] sm:$0xff]
    %v2374 = vld [vmem:[%s5 + $0x7b8] sm:$0xff]
    %v2375 = vld [vmem:[%s5 + $0x7c0] sm:$0xf]
    %v2376 = vld [vmem:[%s5 + $0x7c4] sm:$0xff]
    %v2377 = vld [vmem:[%s5 + $0x7cc] sm:$0xff]
    %v2378 = vld [vmem:[%s5 + $0x7d4] sm:$0xff]
    %v2379 = vld [vmem:[%s5 + $0x7dc] sm:$0xf]
    %v2380 = vld [vmem:[%s5 + $0x7e0] sm:$0xff]
    %v2381 = vld [vmem:[%s5 + $0x7e8] sm:$0xff]
    %v2382 = vld [vmem:[%s5 + $0x7f0] sm:$0xff]
    %v2383 = vld [vmem:[%s5 + $0x7f8] sm:$0xf]
    %v2384 = vld [vmem:[%s5 + $0x7fc] sm:$0xff]
    %v2385 = vld [vmem:[%s5 + $0x804] sm:$0xff]
    %v2386 = vld [vmem:[%s5 + $0x80c] sm:$0xff]
    %v2387 = vld [vmem:[%s5 + $0x814] sm:$0xf]
    %v2388 = vld [vmem:[%s5 + $0x818] sm:$0xff]
    %v2389 = vld [vmem:[%s5 + $0x820] sm:$0xff]
    %v2390 = vld [vmem:[%s5 + $0x828] sm:$0xff]
    %v2391 = vld [vmem:[%s5 + $0x830] sm:$0xf]
    %v2392 = vld [vmem:[%s5 + $0x834] sm:$0xff]
    %v2393 = vld [vmem:[%s5 + $0x83c] sm:$0xff]
    %v2394 = vld [vmem:[%s5 + $0x844] sm:$0xff]
    %v2395 = vld [vmem:[%s5 + $0x84c] sm:$0xf]
    %v2396 = vld [vmem:[%s5 + $0x850] sm:$0xff]
    %v2397 = vld [vmem:[%s5 + $0x858] sm:$0xff]
    %v2398 = vld [vmem:[%s5 + $0x860] sm:$0xff]
    %v2399 = vld [vmem:[%s5 + $0x868] sm:$0xf]
    %v2400 = vld [vmem:[%s5 + $0x86c] sm:$0xff]
    %v2401 = vld [vmem:[%s5 + $0x874] sm:$0xff]
    %v2402 = vld [vmem:[%s5 + $0x87c] sm:$0xff]
    %v2403 = vld [vmem:[%s5 + $0x884] sm:$0xf]
    %v2404 = vld [vmem:[%s5 + $0x888] sm:$0xff]
    %v2405 = vld [vmem:[%s5 + $0x890] sm:$0xff]
    %v2406 = vld [vmem:[%s5 + $0x898] sm:$0xff]
    %v2407 = vld [vmem:[%s5 + $0x8a0] sm:$0xf]
    %v2408 = vld [vmem:[%s5 + $0x8a4] sm:$0xff]
    %v2409 = vld [vmem:[%s5 + $0x8ac] sm:$0xff]
    %v2410 = vld [vmem:[%s5 + $0x8b4] sm:$0xff]
    %v2411 = vld [vmem:[%s5 + $0x8bc] sm:$0xf]
    %v2412 = vld [vmem:[%s5 + $0x8c0] sm:$0xff]
    %v2413 = vld [vmem:[%s5 + $0x8c8] sm:$0xff]
    %v2414 = vld [vmem:[%s5 + $0x8d0] sm:$0xff]
    %v2415 = vld [vmem:[%s5 + $0x8d8] sm:$0xf]
    %v2416 = vld [vmem:[%s5 + $0x8dc] sm:$0xff]
    %v2417 = vld [vmem:[%s5 + $0x8e4] sm:$0xff]
    %v2418 = vld [vmem:[%s5 + $0x8ec] sm:$0xff]
    %v2419 = vld [vmem:[%s5 + $0x8f4] sm:$0xf]
    %v2420 = vld [vmem:[%s5 + $0x8f8] sm:$0xff]
    %v2421 = vld [vmem:[%s5 + $0x900] sm:$0xff]
    %v2422 = vld [vmem:[%s5 + $0x908] sm:$0xff]
    %v2423 = vld [vmem:[%s5 + $0x910] sm:$0xf]
    %v2424 = vld [vmem:[%s5 + $0x914] sm:$0xff]
    %v2425 = vld [vmem:[%s5 + $0x91c] sm:$0xff]
    %v2426 = vld [vmem:[%s5 + $0x924] sm:$0xff]
    %v2427 = vld [vmem:[%s5 + $0x92c] sm:$0xf]
    %v2428 = vld [vmem:[%s5 + $0x930] sm:$0xff]
    %v2429 = vld [vmem:[%s5 + $0x938] sm:$0xff]
    %v2430 = vld [vmem:[%s5 + $0x940] sm:$0xff]
    %v2431 = vld [vmem:[%s5 + $0x948] sm:$0xf]
    %v2432 = vld [vmem:[%s5 + $0x94c] sm:$0xff]
    %v2433 = vld [vmem:[%s5 + $0x954] sm:$0xff]
    %v2434 = vld [vmem:[%s5 + $0x95c] sm:$0xff]
    %v2435 = vld [vmem:[%s5 + $0x964] sm:$0xf]
    %v2436 = vld [vmem:[%s5 + $0x968] sm:$0xff]
    %v2437 = vld [vmem:[%s5 + $0x970] sm:$0xff]
    %v2438 = vld [vmem:[%s5 + $0x978] sm:$0xff]
    %v2439 = vld [vmem:[%s5 + $0x980] sm:$0xf]
    %v2440 = vld [vmem:[%s5 + $0x984] sm:$0xff]
    %v2441 = vld [vmem:[%s5 + $0x98c] sm:$0xff]
    %v2442 = vld [vmem:[%s5 + $0x994] sm:$0xff]
    %v2443 = vld [vmem:[%s5 + $0x99c] sm:$0xf]
    %v2444 = vld [vmem:[%s5 + $0x9a0] sm:$0xff]
    %v2445 = vld [vmem:[%s5 + $0x9a8] sm:$0xff]
    %v2446 = vld [vmem:[%s5 + $0x9b0] sm:$0xff]
    %v2447 = vld [vmem:[%s5 + $0x9b8] sm:$0xf]
    %v2448 = vld [vmem:[%s5 + $0x9bc] sm:$0xff]
    %v2449 = vld [vmem:[%s5 + $0x9c4] sm:$0xff]
    %v2450 = vld [vmem:[%s5 + $0x9cc] sm:$0xff]
    %v2451 = vld [vmem:[%s5 + $0x9d4] sm:$0xf]
    %v2452 = vld [vmem:[%s5 + $0x9d8] sm:$0xff]
    %v2453 = vld [vmem:[%s5 + $0x9e0] sm:$0xff]
    %v2454 = vld [vmem:[%s5 + $0x9e8] sm:$0xff]
    %v2455 = vld [vmem:[%s5 + $0x9f0] sm:$0xf]
    %v2456 = vld [vmem:[%s5 + $0x9f4] sm:$0xff]
    %v2457 = vld [vmem:[%s5 + $0x9fc] sm:$0xff]
    %v2458 = vld [vmem:[%s5 + $0xa04] sm:$0xff]
    %v2459 = vld [vmem:[%s5 + $0xa0c] sm:$0xf]
    %v2460 = vld [vmem:[%s5 + $0xa10] sm:$0xff]
    %v2461 = vld [vmem:[%s5 + $0xa18] sm:$0xff]
    %v2462 = vld [vmem:[%s5 + $0xa20] sm:$0xff]
    %v2463 = vld [vmem:[%s5 + $0xa28] sm:$0xf]
    %v2464 = vld [vmem:[%s5 + $0xa2c] sm:$0xff]
    %v2465 = vld [vmem:[%s5 + $0xa34] sm:$0xff]
    %v2466 = vld [vmem:[%s5 + $0xa3c] sm:$0xff]
    %v2467 = vld [vmem:[%s5 + $0xa44] sm:$0xf]
    %v2468 = vld [vmem:[%s5 + $0xa48] sm:$0xff]
    %v2469 = vld [vmem:[%s5 + $0xa50] sm:$0xff]
    %v2470 = vld [vmem:[%s5 + $0xa58] sm:$0xff]
    %v2471 = vld [vmem:[%s5 + $0xa60] sm:$0xf]
    %v2472 = vld [vmem:[%s5 + $0xa64] sm:$0xff]
    %v2473 = vld [vmem:[%s5 + $0xa6c] sm:$0xff]
    %v2474 = vld [vmem:[%s5 + $0xa74] sm:$0xff]
    %v2475 = vld [vmem:[%s5 + $0xa7c] sm:$0xf]
    %v2476 = vld [vmem:[%s5 + $0xa80] sm:$0xff]
    %v2477 = vld [vmem:[%s5 + $0xa88] sm:$0xff]
    %v2478 = vld [vmem:[%s5 + $0xa90] sm:$0xff]
    %v2479 = vld [vmem:[%s5 + $0xa98] sm:$0xf]
    %v2480 = vld [vmem:[%s5 + $0xa9c] sm:$0xff]
    %v2481 = vld [vmem:[%s5 + $0xaa4] sm:$0xff]
    %v2482 = vld [vmem:[%s5 + $0xaac] sm:$0xff]
    %v2483 = vld [vmem:[%s5 + $0xab4] sm:$0xf]
    %v2484 = vld [vmem:[%s5 + $0xab8] sm:$0xff]
    %v2485 = vld [vmem:[%s5 + $0xac0] sm:$0xff]
    %v2486 = vld [vmem:[%s5 + $0xac8] sm:$0xff]
    %v2487 = vld [vmem:[%s5 + $0xad0] sm:$0xf]
    %v2488 = vld [vmem:[%s5 + $0xad4] sm:$0xff]
    %v2489 = vld [vmem:[%s5 + $0xadc] sm:$0xff]
    %v2490 = vld [vmem:[%s5 + $0xae4] sm:$0xff]
    %v2491 = vld [vmem:[%s5 + $0xaec] sm:$0xf]
    %v2492 = vld [vmem:[%s5 + $0xaf0] sm:$0xff]
    %v2493 = vld [vmem:[%s5 + $0xaf8] sm:$0xff]
    %v2494 = vld [vmem:[%s5 + $0xb00] sm:$0xff]
    %v2495 = vld [vmem:[%s5 + $0xb08] sm:$0xf]
    %v2496 = vld [vmem:[%s5 + $0xb0c] sm:$0xff]
    %v2497 = vld [vmem:[%s5 + $0xb14] sm:$0xff]
    %v2498 = vld [vmem:[%s5 + $0xb1c] sm:$0xff]
    %v2499 = vld [vmem:[%s5 + $0xb24] sm:$0xf]
    %v2500 = vld [vmem:[%s5 + $0xb28] sm:$0xff]
    %v2501 = vld [vmem:[%s5 + $0xb30] sm:$0xff]
    %v2502 = vld [vmem:[%s5 + $0xb38] sm:$0xff]
    %v2503 = vld [vmem:[%s5 + $0xb40] sm:$0xf]
    %v2504 = vld [vmem:[%s5 + $0xb44] sm:$0xff]
    %v2505 = vld [vmem:[%s5 + $0xb4c] sm:$0xff]
    %v2506 = vld [vmem:[%s5 + $0xb54] sm:$0xff]
    %v2507 = vld [vmem:[%s5 + $0xb5c] sm:$0xf]
    %v2508 = vld [vmem:[%s5 + $0xb60] sm:$0xff]
    %v2509 = vld [vmem:[%s5 + $0xb68] sm:$0xff]
    %v2510 = vld [vmem:[%s5 + $0xb70] sm:$0xff]
    %v2511 = vld [vmem:[%s5 + $0xb78] sm:$0xf]
    %v2512 = vld [vmem:[%s5 + $0xb7c] sm:$0xff]
    %v2513 = vld [vmem:[%s5 + $0xb84] sm:$0xff]
    %v2514 = vld [vmem:[%s5 + $0xb8c] sm:$0xff]
    %v2515 = vld [vmem:[%s5 + $0xb94] sm:$0xf]
    %v2516 = vld [vmem:[%s5 + $0xb98] sm:$0xff]
    %v2517 = vld [vmem:[%s5 + $0xba0] sm:$0xff]
    %v2518 = vld [vmem:[%s5 + $0xba8] sm:$0xff]
    %v2519 = vld [vmem:[%s5 + $0xbb0] sm:$0xf]
    %v2520 = vld [vmem:[%s5 + $0xbb4] sm:$0xff]
    %v2521 = vld [vmem:[%s5 + $0xbbc] sm:$0xff]
    %v2522 = vld [vmem:[%s5 + $0xbc4] sm:$0xff]
    %v2523 = vld [vmem:[%s5 + $0xbcc] sm:$0xf]
    %v2524 = vld [vmem:[%s5 + $0xbd0] sm:$0xff]
    %v2525 = vld [vmem:[%s5 + $0xbd8] sm:$0xff]
    %v2526 = vld [vmem:[%s5 + $0xbe0] sm:$0xff]
    %v2527 = vld [vmem:[%s5 + $0xbe8] sm:$0xf]
    %v2528 = vld [vmem:[%s5 + $0xbec] sm:$0xff]
    %v2529 = vld [vmem:[%s5 + $0xbf4] sm:$0xff]
    %v2530 = vld [vmem:[%s5 + $0xbfc] sm:$0xff]
    %v2531 = vld [vmem:[%s5 + $0xc04] sm:$0xf]
    %v2532 = vld [vmem:[%s5 + $0xc08] sm:$0xff]
    %v2533 = vld [vmem:[%s5 + $0xc10] sm:$0xff]
    %v2534 = vld [vmem:[%s5 + $0xc18] sm:$0xff]
    %v2535 = vld [vmem:[%s5 + $0xc20] sm:$0xf]
    %v2536 = vld [vmem:[%s5 + $0xc24] sm:$0xff]
    %v2537 = vld [vmem:[%s5 + $0xc2c] sm:$0xff]
    %v2538 = vld [vmem:[%s5 + $0xc34] sm:$0xff]
    %v2539 = vld [vmem:[%s5 + $0xc3c] sm:$0xf]
    %v2540 = vld [vmem:[%s5 + $0xc40] sm:$0xff]
    %v2541 = vld [vmem:[%s5 + $0xc48] sm:$0xff]
    %v2542 = vld [vmem:[%s5 + $0xc50] sm:$0xff]
    %v2543 = vld [vmem:[%s5 + $0xc58] sm:$0xf]
    %v2544 = vld [vmem:[%s5 + $0xc5c] sm:$0xff]
    %v2545 = vld [vmem:[%s5 + $0xc64] sm:$0xff]
    %v2546 = vld [vmem:[%s5 + $0xc6c] sm:$0xff]
    %v2547 = vld [vmem:[%s5 + $0xc74] sm:$0xf]
    %v2548 = vld [vmem:[%s5 + $0xc78] sm:$0xff]
    %v2549 = vld [vmem:[%s5 + $0xc80] sm:$0xff]
    %v2550 = vld [vmem:[%s5 + $0xc88] sm:$0xff]
    %v2551 = vld [vmem:[%s5 + $0xc90] sm:$0xf]
    %v2552 = vld [vmem:[%s5 + $0xc94] sm:$0xff]
    %v2553 = vld [vmem:[%s5 + $0xc9c] sm:$0xff]
    %v2554 = vld [vmem:[%s5 + $0xca4] sm:$0xff]
    %v2555 = vld [vmem:[%s5 + $0xcac] sm:$0xf]
    %v2556 = vld [vmem:[%s5 + $0xcb0] sm:$0xff]
    %v2557 = vld [vmem:[%s5 + $0xcb8] sm:$0xff]
    %v2558 = vld [vmem:[%s5 + $0xcc0] sm:$0xff]
    %v2559 = vld [vmem:[%s5 + $0xcc8] sm:$0xf]
    %v2560 = vld [vmem:[%s5 + $0xccc] sm:$0xff]
    %v2561 = vld [vmem:[%s5 + $0xcd4] sm:$0xff]
    %v2562 = vld [vmem:[%s5 + $0xcdc] sm:$0xff]
    %v2563 = vld [vmem:[%s5 + $0xce4] sm:$0xf]
    %v2564 = vld [vmem:[%s5 + $0xce8] sm:$0xff]
    %v2565 = vld [vmem:[%s5 + $0xcf0] sm:$0xff]
    %v2566 = vld [vmem:[%s5 + $0xcf8] sm:$0xff]
    %v2567 = vld [vmem:[%s5 + $0xd00] sm:$0xf]
    %v2568 = vld [vmem:[%s5 + $0xd04] sm:$0xff]
    %v2569 = vld [vmem:[%s5 + $0xd0c] sm:$0xff]
    %v2570 = vld [vmem:[%s5 + $0xd14] sm:$0xff]
    %v2571 = vld [vmem:[%s5 + $0xd1c] sm:$0xf]
    %v2572 = vld [vmem:[%s5 + $0xd20] sm:$0xff]
    %v2573 = vld [vmem:[%s5 + $0xd28] sm:$0xff]
    %v2574 = vld [vmem:[%s5 + $0xd30] sm:$0xff]
    %v2575 = vld [vmem:[%s5 + $0xd38] sm:$0xf]
    %v2576 = vld [vmem:[%s5 + $0xd3c] sm:$0xff]
    %v2577 = vld [vmem:[%s5 + $0xd44] sm:$0xff]
    %v2578 = vld [vmem:[%s5 + $0xd4c] sm:$0xff]
    %v2579 = vld [vmem:[%s5 + $0xd54] sm:$0xf]
    %v2580 = vld [vmem:[%s5 + $0xd58] sm:$0xff]
    %v2581 = vld [vmem:[%s5 + $0xd60] sm:$0xff]
    %v2582 = vld [vmem:[%s5 + $0xd68] sm:$0xff]
    %v2583 = vld [vmem:[%s5 + $0xd70] sm:$0xf]
    %v2584 = vld [vmem:[%s5 + $0xd74] sm:$0xff]
    %v2585 = vld [vmem:[%s5 + $0xd7c] sm:$0xff]
    %v2586 = vld [vmem:[%s5 + $0xd84] sm:$0xff]
    %v2587 = vld [vmem:[%s5 + $0xd8c] sm:$0xf]
    %v2588 = vld [vmem:[%s5 + $0xd90] sm:$0xff]
    %v2589 = vld [vmem:[%s5 + $0xd98] sm:$0xff]
    %v2590 = vld [vmem:[%s5 + $0xda0] sm:$0xff]
    %v2591 = vld [vmem:[%s5 + $0xda8] sm:$0xf]
    %v2592 = vld [vmem:[%s5 + $0xdac] sm:$0xff]
    %v2593 = vld [vmem:[%s5 + $0xdb4] sm:$0xff]
    %v2594 = vld [vmem:[%s5 + $0xdbc] sm:$0xff]
    %v2595 = vld [vmem:[%s5 + $0xdc4] sm:$0xf]
    %v2596 = vld [vmem:[%s5 + $0xdc8] sm:$0xff]
    %v2597 = vld [vmem:[%s5 + $0xdd0] sm:$0xff]
    %v2598 = vld [vmem:[%s5 + $0xdd8] sm:$0xff]
    %v2599 = vld [vmem:[%s5 + $0xde0] sm:$0xf]
    %v2600 = vld [vmem:[%s5 + $0xde4] sm:$0xff]
    %v2601 = vld [vmem:[%s5 + $0xdec] sm:$0xff]
    %v2602 = vld [vmem:[%s5 + $0xdf4] sm:$0xff]
    %v2603 = vld [vmem:[%s5 + $0xdfc] sm:$0xf]
    %v2604 = vld [vmem:[%s6] sm:$0x7f]
    %v2606 = vlaneseq
    %v2607 = vshrl.u32 %v2606, 7
    %v2608 = vsub.s32 0, %v2607
    %v2609 = vrot.slane %v2604, %v2608
    %v2610 = vlaneseq
    %v2611 = vshrl.u32 %v2610, 7
    %v2612 = vsub.s32 1, %v2611
    %v2613 = vrot.slane %v2604, %v2612
    %v2614 = vlaneseq
    %v2615 = vshrl.u32 %v2614, 7
    %v2616 = vsub.s32 2, %v2615
    %v2617 = vrot.slane %v2604, %v2616
    %v2618 = vlaneseq
    %v2619 = vshrl.u32 %v2618, 7
    %v2620 = vsub.s32 3, %v2619
    %v2621 = vrot.slane %v2604, %v2620
    %v2622 = vlaneseq
    %v2623 = vshrl.u32 %v2622, 7
    %v2624 = vsub.s32 4, %v2623
    %v2625 = vrot.slane %v2604, %v2624
    %v2626 = vlaneseq
    %v2627 = vshrl.u32 %v2626, 7
    %v2628 = vsub.s32 5, %v2627
    %v2629 = vrot.slane %v2604, %v2628
    %v2630 = vlaneseq
    %v2631 = vshrl.u32 %v2630, 7
    %v2632 = vsub.s32 6, %v2631
    %v2633 = vrot.slane %v2604, %v2632
    %v3153 = vunpack.c.l.b16 %v2092
    %v3154 = vunpack.c.h.b16 %v2092
    %v3155 = vunpack.c.l.b16 %v2093
    %v3156 = vunpack.c.h.b16 %v2093
    %v3157 = vunpack.c.l.b16 %v2094
    %v3158 = vunpack.c.h.b16 %v2094
    %v3159 = vunpack.c.l.b16 %v2095
    %v3160 = vunpack.c.l.b16 %v2096
    %v3161 = vunpack.c.h.b16 %v2096
    %v3162 = vunpack.c.l.b16 %v2097
    %v3163 = vunpack.c.h.b16 %v2097
    %v3164 = vunpack.c.l.b16 %v2098
    %v3165 = vunpack.c.h.b16 %v2098
    %v3166 = vunpack.c.l.b16 %v2099
    %v3167 = vunpack.c.l.b16 %v2100
    %v3168 = vunpack.c.h.b16 %v2100
    %v3169 = vunpack.c.l.b16 %v2101
    %v3170 = vunpack.c.h.b16 %v2101
    %v3171 = vunpack.c.l.b16 %v2102
    %v3172 = vunpack.c.h.b16 %v2102
    %v3173 = vunpack.c.l.b16 %v2103
    %v3174 = vunpack.c.l.b16 %v2104
    %v3175 = vunpack.c.h.b16 %v2104
    %v3176 = vunpack.c.l.b16 %v2105
    %v3177 = vunpack.c.h.b16 %v2105
    %v3178 = vunpack.c.l.b16 %v2106
    %v3179 = vunpack.c.h.b16 %v2106
    %v3180 = vunpack.c.l.b16 %v2107
    %v3181 = vunpack.c.l.b16 %v2108
    %v3182 = vunpack.c.h.b16 %v2108
    %v3183 = vunpack.c.l.b16 %v2109
    %v3184 = vunpack.c.h.b16 %v2109
    %v3185 = vunpack.c.l.b16 %v2110
    %v3186 = vunpack.c.h.b16 %v2110
    %v3187 = vunpack.c.l.b16 %v2111
    %v3188 = vunpack.c.l.b16 %v2112
    %v3189 = vunpack.c.h.b16 %v2112
    %v3190 = vunpack.c.l.b16 %v2113
    %v3191 = vunpack.c.h.b16 %v2113
    %v3192 = vunpack.c.l.b16 %v2114
    %v3193 = vunpack.c.h.b16 %v2114
    %v3194 = vunpack.c.l.b16 %v2115
    %v3195 = vunpack.c.l.b16 %v2116
    %v3196 = vunpack.c.h.b16 %v2116
    %v3197 = vunpack.c.l.b16 %v2117
    %v3198 = vunpack.c.h.b16 %v2117
    %v3199 = vunpack.c.l.b16 %v2118
    %v3200 = vunpack.c.h.b16 %v2118
    %v3201 = vunpack.c.l.b16 %v2119
    %v3202 = vunpack.c.l.b16 %v2120
    %v3203 = vunpack.c.h.b16 %v2120
    %v3204 = vunpack.c.l.b16 %v2121
    %v3205 = vunpack.c.h.b16 %v2121
    %v3206 = vunpack.c.l.b16 %v2122
    %v3207 = vunpack.c.h.b16 %v2122
    %v3208 = vunpack.c.l.b16 %v2123
    %v3209 = vunpack.c.l.b16 %v2124
    %v3210 = vunpack.c.h.b16 %v2124
    %v3211 = vunpack.c.l.b16 %v2125
    %v3212 = vunpack.c.h.b16 %v2125
    %v3213 = vunpack.c.l.b16 %v2126
    %v3214 = vunpack.c.h.b16 %v2126
    %v3215 = vunpack.c.l.b16 %v2127
    %v3216 = vunpack.c.l.b16 %v2128
    %v3217 = vunpack.c.h.b16 %v2128
    %v3218 = vunpack.c.l.b16 %v2129
    %v3219 = vunpack.c.h.b16 %v2129
    %v3220 = vunpack.c.l.b16 %v2130
    %v3221 = vunpack.c.h.b16 %v2130
    %v3222 = vunpack.c.l.b16 %v2131
    %v3223 = vunpack.c.l.b16 %v2132
    %v3224 = vunpack.c.h.b16 %v2132
    %v3225 = vunpack.c.l.b16 %v2133
    %v3226 = vunpack.c.h.b16 %v2133
    %v3227 = vunpack.c.l.b16 %v2134
    %v3228 = vunpack.c.h.b16 %v2134
    %v3229 = vunpack.c.l.b16 %v2135
    %v3230 = vunpack.c.l.b16 %v2136
    %v3231 = vunpack.c.h.b16 %v2136
    %v3232 = vunpack.c.l.b16 %v2137
    %v3233 = vunpack.c.h.b16 %v2137
    %v3234 = vunpack.c.l.b16 %v2138
    %v3235 = vunpack.c.h.b16 %v2138
    %v3236 = vunpack.c.l.b16 %v2139
    %v3237 = vunpack.c.l.b16 %v2140
    %v3238 = vunpack.c.h.b16 %v2140
    %v3239 = vunpack.c.l.b16 %v2141
    %v3240 = vunpack.c.h.b16 %v2141
    %v3241 = vunpack.c.l.b16 %v2142
    %v3242 = vunpack.c.h.b16 %v2142
    %v3243 = vunpack.c.l.b16 %v2143
    %v3244 = vunpack.c.l.b16 %v2144
    %v3245 = vunpack.c.h.b16 %v2144
    %v3246 = vunpack.c.l.b16 %v2145
    %v3247 = vunpack.c.h.b16 %v2145
    %v3248 = vunpack.c.l.b16 %v2146
    %v3249 = vunpack.c.h.b16 %v2146
    %v3250 = vunpack.c.l.b16 %v2147
    %v3251 = vunpack.c.l.b16 %v2148
    %v3252 = vunpack.c.h.b16 %v2148
    %v3253 = vunpack.c.l.b16 %v2149
    %v3254 = vunpack.c.h.b16 %v2149
    %v3255 = vunpack.c.l.b16 %v2150
    %v3256 = vunpack.c.h.b16 %v2150
    %v3257 = vunpack.c.l.b16 %v2151
    %v3258 = vunpack.c.l.b16 %v2152
    %v3259 = vunpack.c.h.b16 %v2152
    %v3260 = vunpack.c.l.b16 %v2153
    %v3261 = vunpack.c.h.b16 %v2153
    %v3262 = vunpack.c.l.b16 %v2154
    %v3263 = vunpack.c.h.b16 %v2154
    %v3264 = vunpack.c.l.b16 %v2155
    %v3265 = vunpack.c.l.b16 %v2156
    %v3266 = vunpack.c.h.b16 %v2156
    %v3267 = vunpack.c.l.b16 %v2157
    %v3268 = vunpack.c.h.b16 %v2157
    %v3269 = vunpack.c.l.b16 %v2158
    %v3270 = vunpack.c.h.b16 %v2158
    %v3271 = vunpack.c.l.b16 %v2159
    %v3272 = vunpack.c.l.b16 %v2160
    %v3273 = vunpack.c.h.b16 %v2160
    %v3274 = vunpack.c.l.b16 %v2161
    %v3275 = vunpack.c.h.b16 %v2161
    %v3276 = vunpack.c.l.b16 %v2162
    %v3277 = vunpack.c.h.b16 %v2162
    %v3278 = vunpack.c.l.b16 %v2163
    %v3279 = vunpack.c.l.b16 %v2164
    %v3280 = vunpack.c.h.b16 %v2164
    %v3281 = vunpack.c.l.b16 %v2165
    %v3282 = vunpack.c.h.b16 %v2165
    %v3283 = vunpack.c.l.b16 %v2166
    %v3284 = vunpack.c.h.b16 %v2166
    %v3285 = vunpack.c.l.b16 %v2167
    %v3286 = vunpack.c.l.b16 %v2168
    %v3287 = vunpack.c.h.b16 %v2168
    %v3288 = vunpack.c.l.b16 %v2169
    %v3289 = vunpack.c.h.b16 %v2169
    %v3290 = vunpack.c.l.b16 %v2170
    %v3291 = vunpack.c.h.b16 %v2170
    %v3292 = vunpack.c.l.b16 %v2171
    %v3293 = vunpack.c.l.b16 %v2172
    %v3294 = vunpack.c.h.b16 %v2172
    %v3295 = vunpack.c.l.b16 %v2173
    %v3296 = vunpack.c.h.b16 %v2173
    %v3297 = vunpack.c.l.b16 %v2174
    %v3298 = vunpack.c.h.b16 %v2174
    %v3299 = vunpack.c.l.b16 %v2175
    %v3300 = vunpack.c.l.b16 %v2176
    %v3301 = vunpack.c.h.b16 %v2176
    %v3302 = vunpack.c.l.b16 %v2177
    %v3303 = vunpack.c.h.b16 %v2177
    %v3304 = vunpack.c.l.b16 %v2178
    %v3305 = vunpack.c.h.b16 %v2178
    %v3306 = vunpack.c.l.b16 %v2179
    %v3307 = vunpack.c.l.b16 %v2180
    %v3308 = vunpack.c.h.b16 %v2180
    %v3309 = vunpack.c.l.b16 %v2181
    %v3310 = vunpack.c.h.b16 %v2181
    %v3311 = vunpack.c.l.b16 %v2182
    %v3312 = vunpack.c.h.b16 %v2182
    %v3313 = vunpack.c.l.b16 %v2183
    %v3314 = vunpack.c.l.b16 %v2184
    %v3315 = vunpack.c.h.b16 %v2184
    %v3316 = vunpack.c.l.b16 %v2185
    %v3317 = vunpack.c.h.b16 %v2185
    %v3318 = vunpack.c.l.b16 %v2186
    %v3319 = vunpack.c.h.b16 %v2186
    %v3320 = vunpack.c.l.b16 %v2187
    %v3321 = vunpack.c.l.b16 %v2188
    %v3322 = vunpack.c.h.b16 %v2188
    %v3323 = vunpack.c.l.b16 %v2189
    %v3324 = vunpack.c.h.b16 %v2189
    %v3325 = vunpack.c.l.b16 %v2190
    %v3326 = vunpack.c.h.b16 %v2190
    %v3327 = vunpack.c.l.b16 %v2191
    %v3328 = vunpack.c.l.b16 %v2192
    %v3329 = vunpack.c.h.b16 %v2192
    %v3330 = vunpack.c.l.b16 %v2193
    %v3331 = vunpack.c.h.b16 %v2193
    %v3332 = vunpack.c.l.b16 %v2194
    %v3333 = vunpack.c.h.b16 %v2194
    %v3334 = vunpack.c.l.b16 %v2195
    %v3335 = vunpack.c.l.b16 %v2196
    %v3336 = vunpack.c.h.b16 %v2196
    %v3337 = vunpack.c.l.b16 %v2197
    %v3338 = vunpack.c.h.b16 %v2197
    %v3339 = vunpack.c.l.b16 %v2198
    %v3340 = vunpack.c.h.b16 %v2198
    %v3341 = vunpack.c.l.b16 %v2199
    %v3342 = vunpack.c.l.b16 %v2200
    %v3343 = vunpack.c.h.b16 %v2200
    %v3344 = vunpack.c.l.b16 %v2201
    %v3345 = vunpack.c.h.b16 %v2201
    %v3346 = vunpack.c.l.b16 %v2202
    %v3347 = vunpack.c.h.b16 %v2202
    %v3348 = vunpack.c.l.b16 %v2203
    %v3349 = vunpack.c.l.b16 %v2204
    %v3350 = vunpack.c.h.b16 %v2204
    %v3351 = vunpack.c.l.b16 %v2205
    %v3352 = vunpack.c.h.b16 %v2205
    %v3353 = vunpack.c.l.b16 %v2206
    %v3354 = vunpack.c.h.b16 %v2206
    %v3355 = vunpack.c.l.b16 %v2207
    %v3356 = vunpack.c.l.b16 %v2208
    %v3357 = vunpack.c.h.b16 %v2208
    %v3358 = vunpack.c.l.b16 %v2209
    %v3359 = vunpack.c.h.b16 %v2209
    %v3360 = vunpack.c.l.b16 %v2210
    %v3361 = vunpack.c.h.b16 %v2210
    %v3362 = vunpack.c.l.b16 %v2211
    %v3363 = vunpack.c.l.b16 %v2212
    %v3364 = vunpack.c.h.b16 %v2212
    %v3365 = vunpack.c.l.b16 %v2213
    %v3366 = vunpack.c.h.b16 %v2213
    %v3367 = vunpack.c.l.b16 %v2214
    %v3368 = vunpack.c.h.b16 %v2214
    %v3369 = vunpack.c.l.b16 %v2215
    %v3370 = vunpack.c.l.b16 %v2216
    %v3371 = vunpack.c.h.b16 %v2216
    %v3372 = vunpack.c.l.b16 %v2217
    %v3373 = vunpack.c.h.b16 %v2217
    %v3374 = vunpack.c.l.b16 %v2218
    %v3375 = vunpack.c.h.b16 %v2218
    %v3376 = vunpack.c.l.b16 %v2219
    %v3377 = vunpack.c.l.b16 %v2220
    %v3378 = vunpack.c.h.b16 %v2220
    %v3379 = vunpack.c.l.b16 %v2221
    %v3380 = vunpack.c.h.b16 %v2221
    %v3381 = vunpack.c.l.b16 %v2222
    %v3382 = vunpack.c.h.b16 %v2222
    %v3383 = vunpack.c.l.b16 %v2223
    %v3384 = vunpack.c.l.b16 %v2224
    %v3385 = vunpack.c.h.b16 %v2224
    %v3386 = vunpack.c.l.b16 %v2225
    %v3387 = vunpack.c.h.b16 %v2225
    %v3388 = vunpack.c.l.b16 %v2226
    %v3389 = vunpack.c.h.b16 %v2226
    %v3390 = vunpack.c.l.b16 %v2227
    %v3391 = vunpack.c.l.b16 %v2228
    %v3392 = vunpack.c.h.b16 %v2228
    %v3393 = vunpack.c.l.b16 %v2229
    %v3394 = vunpack.c.h.b16 %v2229
    %v3395 = vunpack.c.l.b16 %v2230
    %v3396 = vunpack.c.h.b16 %v2230
    %v3397 = vunpack.c.l.b16 %v2231
    %v3398 = vunpack.c.l.b16 %v2232
    %v3399 = vunpack.c.h.b16 %v2232
    %v3400 = vunpack.c.l.b16 %v2233
    %v3401 = vunpack.c.h.b16 %v2233
    %v3402 = vunpack.c.l.b16 %v2234
    %v3403 = vunpack.c.h.b16 %v2234
    %v3404 = vunpack.c.l.b16 %v2235
    %v3405 = vunpack.c.l.b16 %v2236
    %v3406 = vunpack.c.h.b16 %v2236
    %v3407 = vunpack.c.l.b16 %v2237
    %v3408 = vunpack.c.h.b16 %v2237
    %v3409 = vunpack.c.l.b16 %v2238
    %v3410 = vunpack.c.h.b16 %v2238
    %v3411 = vunpack.c.l.b16 %v2239
    %v3412 = vunpack.c.l.b16 %v2240
    %v3413 = vunpack.c.h.b16 %v2240
    %v3414 = vunpack.c.l.b16 %v2241
    %v3415 = vunpack.c.h.b16 %v2241
    %v3416 = vunpack.c.l.b16 %v2242
    %v3417 = vunpack.c.h.b16 %v2242
    %v3418 = vunpack.c.l.b16 %v2243
    %v3419 = vunpack.c.l.b16 %v2244
    %v3420 = vunpack.c.h.b16 %v2244
    %v3421 = vunpack.c.l.b16 %v2245
    %v3422 = vunpack.c.h.b16 %v2245
    %v3423 = vunpack.c.l.b16 %v2246
    %v3424 = vunpack.c.h.b16 %v2246
    %v3425 = vunpack.c.l.b16 %v2247
    %v3426 = vunpack.c.l.b16 %v2248
    %v3427 = vunpack.c.h.b16 %v2248
    %v3428 = vunpack.c.l.b16 %v2249
    %v3429 = vunpack.c.h.b16 %v2249
    %v3430 = vunpack.c.l.b16 %v2250
    %v3431 = vunpack.c.h.b16 %v2250
    %v3432 = vunpack.c.l.b16 %v2251
    %v3433 = vunpack.c.l.b16 %v2252
    %v3434 = vunpack.c.h.b16 %v2252
    %v3435 = vunpack.c.l.b16 %v2253
    %v3436 = vunpack.c.h.b16 %v2253
    %v3437 = vunpack.c.l.b16 %v2254
    %v3438 = vunpack.c.h.b16 %v2254
    %v3439 = vunpack.c.l.b16 %v2255
    %v3440 = vunpack.c.l.b16 %v2256
    %v3441 = vunpack.c.h.b16 %v2256
    %v3442 = vunpack.c.l.b16 %v2257
    %v3443 = vunpack.c.h.b16 %v2257
    %v3444 = vunpack.c.l.b16 %v2258
    %v3445 = vunpack.c.h.b16 %v2258
    %v3446 = vunpack.c.l.b16 %v2259
    %v3447 = vunpack.c.l.b16 %v2260
    %v3448 = vunpack.c.h.b16 %v2260
    %v3449 = vunpack.c.l.b16 %v2261
    %v3450 = vunpack.c.h.b16 %v2261
    %v3451 = vunpack.c.l.b16 %v2262
    %v3452 = vunpack.c.h.b16 %v2262
    %v3453 = vunpack.c.l.b16 %v2263
    %v3454 = vunpack.c.l.b16 %v2264
    %v3455 = vunpack.c.h.b16 %v2264
    %v3456 = vunpack.c.l.b16 %v2265
    %v3457 = vunpack.c.h.b16 %v2265
    %v3458 = vunpack.c.l.b16 %v2266
    %v3459 = vunpack.c.h.b16 %v2266
    %v3460 = vunpack.c.l.b16 %v2267
    %v3461 = vunpack.c.l.b16 %v2268
    %v3462 = vunpack.c.h.b16 %v2268
    %v3463 = vunpack.c.l.b16 %v2269
    %v3464 = vunpack.c.h.b16 %v2269
    %v3465 = vunpack.c.l.b16 %v2270
    %v3466 = vunpack.c.h.b16 %v2270
    %v3467 = vunpack.c.l.b16 %v2271
    %v3468 = vunpack.c.l.b16 %v2272
    %v3469 = vunpack.c.h.b16 %v2272
    %v3470 = vunpack.c.l.b16 %v2273
    %v3471 = vunpack.c.h.b16 %v2273
    %v3472 = vunpack.c.l.b16 %v2274
    %v3473 = vunpack.c.h.b16 %v2274
    %v3474 = vunpack.c.l.b16 %v2275
    %v3475 = vunpack.c.l.b16 %v2276
    %v3476 = vunpack.c.h.b16 %v2276
    %v3477 = vunpack.c.l.b16 %v2277
    %v3478 = vunpack.c.h.b16 %v2277
    %v3479 = vunpack.c.l.b16 %v2278
    %v3480 = vunpack.c.h.b16 %v2278
    %v3481 = vunpack.c.l.b16 %v2279
    %v3482 = vunpack.c.l.b16 %v2280
    %v3483 = vunpack.c.h.b16 %v2280
    %v3484 = vunpack.c.l.b16 %v2281
    %v3485 = vunpack.c.h.b16 %v2281
    %v3486 = vunpack.c.l.b16 %v2282
    %v3487 = vunpack.c.h.b16 %v2282
    %v3488 = vunpack.c.l.b16 %v2283
    %v3489 = vunpack.c.l.b16 %v2284
    %v3490 = vunpack.c.h.b16 %v2284
    %v3491 = vunpack.c.l.b16 %v2285
    %v3492 = vunpack.c.h.b16 %v2285
    %v3493 = vunpack.c.l.b16 %v2286
    %v3494 = vunpack.c.h.b16 %v2286
    %v3495 = vunpack.c.l.b16 %v2287
    %v3496 = vunpack.c.l.b16 %v2288
    %v3497 = vunpack.c.h.b16 %v2288
    %v3498 = vunpack.c.l.b16 %v2289
    %v3499 = vunpack.c.h.b16 %v2289
    %v3500 = vunpack.c.l.b16 %v2290
    %v3501 = vunpack.c.h.b16 %v2290
    %v3502 = vunpack.c.l.b16 %v2291
    %v3503 = vunpack.c.l.b16 %v2292
    %v3504 = vunpack.c.h.b16 %v2292
    %v3505 = vunpack.c.l.b16 %v2293
    %v3506 = vunpack.c.h.b16 %v2293
    %v3507 = vunpack.c.l.b16 %v2294
    %v3508 = vunpack.c.h.b16 %v2294
    %v3509 = vunpack.c.l.b16 %v2295
    %v3510 = vunpack.c.l.b16 %v2296
    %v3511 = vunpack.c.h.b16 %v2296
    %v3512 = vunpack.c.l.b16 %v2297
    %v3513 = vunpack.c.h.b16 %v2297
    %v3514 = vunpack.c.l.b16 %v2298
    %v3515 = vunpack.c.h.b16 %v2298
    %v3516 = vunpack.c.l.b16 %v2299
    %v3517 = vunpack.c.l.b16 %v2300
    %v3518 = vunpack.c.h.b16 %v2300
    %v3519 = vunpack.c.l.b16 %v2301
    %v3520 = vunpack.c.h.b16 %v2301
    %v3521 = vunpack.c.l.b16 %v2302
    %v3522 = vunpack.c.h.b16 %v2302
    %v3523 = vunpack.c.l.b16 %v2303
    %v3524 = vunpack.c.l.b16 %v2304
    %v3525 = vunpack.c.h.b16 %v2304
    %v3526 = vunpack.c.l.b16 %v2305
    %v3527 = vunpack.c.h.b16 %v2305
    %v3528 = vunpack.c.l.b16 %v2306
    %v3529 = vunpack.c.h.b16 %v2306
    %v3530 = vunpack.c.l.b16 %v2307
    %v3531 = vunpack.c.l.b16 %v2308
    %v3532 = vunpack.c.h.b16 %v2308
    %v3533 = vunpack.c.l.b16 %v2309
    %v3534 = vunpack.c.h.b16 %v2309
    %v3535 = vunpack.c.l.b16 %v2310
    %v3536 = vunpack.c.h.b16 %v2310
    %v3537 = vunpack.c.l.b16 %v2311
    %v3538 = vunpack.c.l.b16 %v2312
    %v3539 = vunpack.c.h.b16 %v2312
    %v3540 = vunpack.c.l.b16 %v2313
    %v3541 = vunpack.c.h.b16 %v2313
    %v3542 = vunpack.c.l.b16 %v2314
    %v3543 = vunpack.c.h.b16 %v2314
    %v3544 = vunpack.c.l.b16 %v2315
    %v3545 = vunpack.c.l.b16 %v2316
    %v3546 = vunpack.c.h.b16 %v2316
    %v3547 = vunpack.c.l.b16 %v2317
    %v3548 = vunpack.c.h.b16 %v2317
    %v3549 = vunpack.c.l.b16 %v2318
    %v3550 = vunpack.c.h.b16 %v2318
    %v3551 = vunpack.c.l.b16 %v2319
    %v3552 = vunpack.c.l.b16 %v2320
    %v3553 = vunpack.c.h.b16 %v2320
    %v3554 = vunpack.c.l.b16 %v2321
    %v3555 = vunpack.c.h.b16 %v2321
    %v3556 = vunpack.c.l.b16 %v2322
    %v3557 = vunpack.c.h.b16 %v2322
    %v3558 = vunpack.c.l.b16 %v2323
    %v3559 = vunpack.c.l.b16 %v2324
    %v3560 = vunpack.c.h.b16 %v2324
    %v3561 = vunpack.c.l.b16 %v2325
    %v3562 = vunpack.c.h.b16 %v2325
    %v3563 = vunpack.c.l.b16 %v2326
    %v3564 = vunpack.c.h.b16 %v2326
    %v3565 = vunpack.c.l.b16 %v2327
    %v3566 = vunpack.c.l.b16 %v2328
    %v3567 = vunpack.c.h.b16 %v2328
    %v3568 = vunpack.c.l.b16 %v2329
    %v3569 = vunpack.c.h.b16 %v2329
    %v3570 = vunpack.c.l.b16 %v2330
    %v3571 = vunpack.c.h.b16 %v2330
    %v3572 = vunpack.c.l.b16 %v2331
    %v3573 = vunpack.c.l.b16 %v2332
    %v3574 = vunpack.c.h.b16 %v2332
    %v3575 = vunpack.c.l.b16 %v2333
    %v3576 = vunpack.c.h.b16 %v2333
    %v3577 = vunpack.c.l.b16 %v2334
    %v3578 = vunpack.c.h.b16 %v2334
    %v3579 = vunpack.c.l.b16 %v2335
    %v3580 = vunpack.c.l.b16 %v2336
    %v3581 = vunpack.c.h.b16 %v2336
    %v3582 = vunpack.c.l.b16 %v2337
    %v3583 = vunpack.c.h.b16 %v2337
    %v3584 = vunpack.c.l.b16 %v2338
    %v3585 = vunpack.c.h.b16 %v2338
    %v3586 = vunpack.c.l.b16 %v2339
    %v3587 = vunpack.c.l.b16 %v2340
    %v3588 = vunpack.c.h.b16 %v2340
    %v3589 = vunpack.c.l.b16 %v2341
    %v3590 = vunpack.c.h.b16 %v2341
    %v3591 = vunpack.c.l.b16 %v2342
    %v3592 = vunpack.c.h.b16 %v2342
    %v3593 = vunpack.c.l.b16 %v2343
    %v3594 = vunpack.c.l.b16 %v2344
    %v3595 = vunpack.c.h.b16 %v2344
    %v3596 = vunpack.c.l.b16 %v2345
    %v3597 = vunpack.c.h.b16 %v2345
    %v3598 = vunpack.c.l.b16 %v2346
    %v3599 = vunpack.c.h.b16 %v2346
    %v3600 = vunpack.c.l.b16 %v2347
    %v3601 = vunpack.c.l.b16 %v2348
    %v3602 = vunpack.c.h.b16 %v2348
    %v3603 = vunpack.c.l.b16 %v2349
    %v3604 = vunpack.c.h.b16 %v2349
    %v3605 = vunpack.c.l.b16 %v2350
    %v3606 = vunpack.c.h.b16 %v2350
    %v3607 = vunpack.c.l.b16 %v2351
    %v3608 = vunpack.c.l.b16 %v2352
    %v3609 = vunpack.c.h.b16 %v2352
    %v3610 = vunpack.c.l.b16 %v2353
    %v3611 = vunpack.c.h.b16 %v2353
    %v3612 = vunpack.c.l.b16 %v2354
    %v3613 = vunpack.c.h.b16 %v2354
    %v3614 = vunpack.c.l.b16 %v2355
    %v3615 = vunpack.c.l.b16 %v2356
    %v3616 = vunpack.c.h.b16 %v2356
    %v3617 = vunpack.c.l.b16 %v2357
    %v3618 = vunpack.c.h.b16 %v2357
    %v3619 = vunpack.c.l.b16 %v2358
    %v3620 = vunpack.c.h.b16 %v2358
    %v3621 = vunpack.c.l.b16 %v2359
    %v3622 = vunpack.c.l.b16 %v2360
    %v3623 = vunpack.c.h.b16 %v2360
    %v3624 = vunpack.c.l.b16 %v2361
    %v3625 = vunpack.c.h.b16 %v2361
    %v3626 = vunpack.c.l.b16 %v2362
    %v3627 = vunpack.c.h.b16 %v2362
    %v3628 = vunpack.c.l.b16 %v2363
    %v3629 = vunpack.c.l.b16 %v2364
    %v3630 = vunpack.c.h.b16 %v2364
    %v3631 = vunpack.c.l.b16 %v2365
    %v3632 = vunpack.c.h.b16 %v2365
    %v3633 = vunpack.c.l.b16 %v2366
    %v3634 = vunpack.c.h.b16 %v2366
    %v3635 = vunpack.c.l.b16 %v2367
    %v3636 = vunpack.c.l.b16 %v2368
    %v3637 = vunpack.c.h.b16 %v2368
    %v3638 = vunpack.c.l.b16 %v2369
    %v3639 = vunpack.c.h.b16 %v2369
    %v3640 = vunpack.c.l.b16 %v2370
    %v3641 = vunpack.c.h.b16 %v2370
    %v3642 = vunpack.c.l.b16 %v2371
    %v3643 = vunpack.c.l.b16 %v2372
    %v3644 = vunpack.c.h.b16 %v2372
    %v3645 = vunpack.c.l.b16 %v2373
    %v3646 = vunpack.c.h.b16 %v2373
    %v3647 = vunpack.c.l.b16 %v2374
    %v3648 = vunpack.c.h.b16 %v2374
    %v3649 = vunpack.c.l.b16 %v2375
    %v3650 = vunpack.c.l.b16 %v2376
    %v3651 = vunpack.c.h.b16 %v2376
    %v3652 = vunpack.c.l.b16 %v2377
    %v3653 = vunpack.c.h.b16 %v2377
    %v3654 = vunpack.c.l.b16 %v2378
    %v3655 = vunpack.c.h.b16 %v2378
    %v3656 = vunpack.c.l.b16 %v2379
    %v3657 = vunpack.c.l.b16 %v2380
    %v3658 = vunpack.c.h.b16 %v2380
    %v3659 = vunpack.c.l.b16 %v2381
    %v3660 = vunpack.c.h.b16 %v2381
    %v3661 = vunpack.c.l.b16 %v2382
    %v3662 = vunpack.c.h.b16 %v2382
    %v3663 = vunpack.c.l.b16 %v2383
    %v3664 = vunpack.c.l.b16 %v2384
    %v3665 = vunpack.c.h.b16 %v2384
    %v3666 = vunpack.c.l.b16 %v2385
    %v3667 = vunpack.c.h.b16 %v2385
    %v3668 = vunpack.c.l.b16 %v2386
    %v3669 = vunpack.c.h.b16 %v2386
    %v3670 = vunpack.c.l.b16 %v2387
    %v3671 = vunpack.c.l.b16 %v2388
    %v3672 = vunpack.c.h.b16 %v2388
    %v3673 = vunpack.c.l.b16 %v2389
    %v3674 = vunpack.c.h.b16 %v2389
    %v3675 = vunpack.c.l.b16 %v2390
    %v3676 = vunpack.c.h.b16 %v2390
    %v3677 = vunpack.c.l.b16 %v2391
    %v3678 = vunpack.c.l.b16 %v2392
    %v3679 = vunpack.c.h.b16 %v2392
    %v3680 = vunpack.c.l.b16 %v2393
    %v3681 = vunpack.c.h.b16 %v2393
    %v3682 = vunpack.c.l.b16 %v2394
    %v3683 = vunpack.c.h.b16 %v2394
    %v3684 = vunpack.c.l.b16 %v2395
    %v3685 = vunpack.c.l.b16 %v2396
    %v3686 = vunpack.c.h.b16 %v2396
    %v3687 = vunpack.c.l.b16 %v2397
    %v3688 = vunpack.c.h.b16 %v2397
    %v3689 = vunpack.c.l.b16 %v2398
    %v3690 = vunpack.c.h.b16 %v2398
    %v3691 = vunpack.c.l.b16 %v2399
    %v3692 = vunpack.c.l.b16 %v2400
    %v3693 = vunpack.c.h.b16 %v2400
    %v3694 = vunpack.c.l.b16 %v2401
    %v3695 = vunpack.c.h.b16 %v2401
    %v3696 = vunpack.c.l.b16 %v2402
    %v3697 = vunpack.c.h.b16 %v2402
    %v3698 = vunpack.c.l.b16 %v2403
    %v3699 = vunpack.c.l.b16 %v2404
    %v3700 = vunpack.c.h.b16 %v2404
    %v3701 = vunpack.c.l.b16 %v2405
    %v3702 = vunpack.c.h.b16 %v2405
    %v3703 = vunpack.c.l.b16 %v2406
    %v3704 = vunpack.c.h.b16 %v2406
    %v3705 = vunpack.c.l.b16 %v2407
    %v3706 = vunpack.c.l.b16 %v2408
    %v3707 = vunpack.c.h.b16 %v2408
    %v3708 = vunpack.c.l.b16 %v2409
    %v3709 = vunpack.c.h.b16 %v2409
    %v3710 = vunpack.c.l.b16 %v2410
    %v3711 = vunpack.c.h.b16 %v2410
    %v3712 = vunpack.c.l.b16 %v2411
    %v3713 = vunpack.c.l.b16 %v2412
    %v3714 = vunpack.c.h.b16 %v2412
    %v3715 = vunpack.c.l.b16 %v2413
    %v3716 = vunpack.c.h.b16 %v2413
    %v3717 = vunpack.c.l.b16 %v2414
    %v3718 = vunpack.c.h.b16 %v2414
    %v3719 = vunpack.c.l.b16 %v2415
    %v3720 = vunpack.c.l.b16 %v2416
    %v3721 = vunpack.c.h.b16 %v2416
    %v3722 = vunpack.c.l.b16 %v2417
    %v3723 = vunpack.c.h.b16 %v2417
    %v3724 = vunpack.c.l.b16 %v2418
    %v3725 = vunpack.c.h.b16 %v2418
    %v3726 = vunpack.c.l.b16 %v2419
    %v3727 = vunpack.c.l.b16 %v2420
    %v3728 = vunpack.c.h.b16 %v2420
    %v3729 = vunpack.c.l.b16 %v2421
    %v3730 = vunpack.c.h.b16 %v2421
    %v3731 = vunpack.c.l.b16 %v2422
    %v3732 = vunpack.c.h.b16 %v2422
    %v3733 = vunpack.c.l.b16 %v2423
    %v3734 = vunpack.c.l.b16 %v2424
    %v3735 = vunpack.c.h.b16 %v2424
    %v3736 = vunpack.c.l.b16 %v2425
    %v3737 = vunpack.c.h.b16 %v2425
    %v3738 = vunpack.c.l.b16 %v2426
    %v3739 = vunpack.c.h.b16 %v2426
    %v3740 = vunpack.c.l.b16 %v2427
    %v3741 = vunpack.c.l.b16 %v2428
    %v3742 = vunpack.c.h.b16 %v2428
    %v3743 = vunpack.c.l.b16 %v2429
    %v3744 = vunpack.c.h.b16 %v2429
    %v3745 = vunpack.c.l.b16 %v2430
    %v3746 = vunpack.c.h.b16 %v2430
    %v3747 = vunpack.c.l.b16 %v2431
    %v3748 = vunpack.c.l.b16 %v2432
    %v3749 = vunpack.c.h.b16 %v2432
    %v3750 = vunpack.c.l.b16 %v2433
    %v3751 = vunpack.c.h.b16 %v2433
    %v3752 = vunpack.c.l.b16 %v2434
    %v3753 = vunpack.c.h.b16 %v2434
    %v3754 = vunpack.c.l.b16 %v2435
    %v3755 = vunpack.c.l.b16 %v2436
    %v3756 = vunpack.c.h.b16 %v2436
    %v3757 = vunpack.c.l.b16 %v2437
    %v3758 = vunpack.c.h.b16 %v2437
    %v3759 = vunpack.c.l.b16 %v2438
    %v3760 = vunpack.c.h.b16 %v2438
    %v3761 = vunpack.c.l.b16 %v2439
    %v3762 = vunpack.c.l.b16 %v2440
    %v3763 = vunpack.c.h.b16 %v2440
    %v3764 = vunpack.c.l.b16 %v2441
    %v3765 = vunpack.c.h.b16 %v2441
    %v3766 = vunpack.c.l.b16 %v2442
    %v3767 = vunpack.c.h.b16 %v2442
    %v3768 = vunpack.c.l.b16 %v2443
    %v3769 = vunpack.c.l.b16 %v2444
    %v3770 = vunpack.c.h.b16 %v2444
    %v3771 = vunpack.c.l.b16 %v2445
    %v3772 = vunpack.c.h.b16 %v2445
    %v3773 = vunpack.c.l.b16 %v2446
    %v3774 = vunpack.c.h.b16 %v2446
    %v3775 = vunpack.c.l.b16 %v2447
    %v3776 = vunpack.c.l.b16 %v2448
    %v3777 = vunpack.c.h.b16 %v2448
    %v3778 = vunpack.c.l.b16 %v2449
    %v3779 = vunpack.c.h.b16 %v2449
    %v3780 = vunpack.c.l.b16 %v2450
    %v3781 = vunpack.c.h.b16 %v2450
    %v3782 = vunpack.c.l.b16 %v2451
    %v3783 = vunpack.c.l.b16 %v2452
    %v3784 = vunpack.c.h.b16 %v2452
    %v3785 = vunpack.c.l.b16 %v2453
    %v3786 = vunpack.c.h.b16 %v2453
    %v3787 = vunpack.c.l.b16 %v2454
    %v3788 = vunpack.c.h.b16 %v2454
    %v3789 = vunpack.c.l.b16 %v2455
    %v3790 = vunpack.c.l.b16 %v2456
    %v3791 = vunpack.c.h.b16 %v2456
    %v3792 = vunpack.c.l.b16 %v2457
    %v3793 = vunpack.c.h.b16 %v2457
    %v3794 = vunpack.c.l.b16 %v2458
    %v3795 = vunpack.c.h.b16 %v2458
    %v3796 = vunpack.c.l.b16 %v2459
    %v3797 = vunpack.c.l.b16 %v2460
    %v3798 = vunpack.c.h.b16 %v2460
    %v3799 = vunpack.c.l.b16 %v2461
    %v3800 = vunpack.c.h.b16 %v2461
    %v3801 = vunpack.c.l.b16 %v2462
    %v3802 = vunpack.c.h.b16 %v2462
    %v3803 = vunpack.c.l.b16 %v2463
    %v3804 = vunpack.c.l.b16 %v2464
    %v3805 = vunpack.c.h.b16 %v2464
    %v3806 = vunpack.c.l.b16 %v2465
    %v3807 = vunpack.c.h.b16 %v2465
    %v3808 = vunpack.c.l.b16 %v2466
    %v3809 = vunpack.c.h.b16 %v2466
    %v3810 = vunpack.c.l.b16 %v2467
    %v3811 = vunpack.c.l.b16 %v2468
    %v3812 = vunpack.c.h.b16 %v2468
    %v3813 = vunpack.c.l.b16 %v2469
    %v3814 = vunpack.c.h.b16 %v2469
    %v3815 = vunpack.c.l.b16 %v2470
    %v3816 = vunpack.c.h.b16 %v2470
    %v3817 = vunpack.c.l.b16 %v2471
    %v3818 = vunpack.c.l.b16 %v2472
    %v3819 = vunpack.c.h.b16 %v2472
    %v3820 = vunpack.c.l.b16 %v2473
    %v3821 = vunpack.c.h.b16 %v2473
    %v3822 = vunpack.c.l.b16 %v2474
    %v3823 = vunpack.c.h.b16 %v2474
    %v3824 = vunpack.c.l.b16 %v2475
    %v3825 = vunpack.c.l.b16 %v2476
    %v3826 = vunpack.c.h.b16 %v2476
    %v3827 = vunpack.c.l.b16 %v2477
    %v3828 = vunpack.c.h.b16 %v2477
    %v3829 = vunpack.c.l.b16 %v2478
    %v3830 = vunpack.c.h.b16 %v2478
    %v3831 = vunpack.c.l.b16 %v2479
    %v3832 = vunpack.c.l.b16 %v2480
    %v3833 = vunpack.c.h.b16 %v2480
    %v3834 = vunpack.c.l.b16 %v2481
    %v3835 = vunpack.c.h.b16 %v2481
    %v3836 = vunpack.c.l.b16 %v2482
    %v3837 = vunpack.c.h.b16 %v2482
    %v3838 = vunpack.c.l.b16 %v2483
    %v3839 = vunpack.c.l.b16 %v2484
    %v3840 = vunpack.c.h.b16 %v2484
    %v3841 = vunpack.c.l.b16 %v2485
    %v3842 = vunpack.c.h.b16 %v2485
    %v3843 = vunpack.c.l.b16 %v2486
    %v3844 = vunpack.c.h.b16 %v2486
    %v3845 = vunpack.c.l.b16 %v2487
    %v3846 = vunpack.c.l.b16 %v2488
    %v3847 = vunpack.c.h.b16 %v2488
    %v3848 = vunpack.c.l.b16 %v2489
    %v3849 = vunpack.c.h.b16 %v2489
    %v3850 = vunpack.c.l.b16 %v2490
    %v3851 = vunpack.c.h.b16 %v2490
    %v3852 = vunpack.c.l.b16 %v2491
    %v3853 = vunpack.c.l.b16 %v2492
    %v3854 = vunpack.c.h.b16 %v2492
    %v3855 = vunpack.c.l.b16 %v2493
    %v3856 = vunpack.c.h.b16 %v2493
    %v3857 = vunpack.c.l.b16 %v2494
    %v3858 = vunpack.c.h.b16 %v2494
    %v3859 = vunpack.c.l.b16 %v2495
    %v3860 = vunpack.c.l.b16 %v2496
    %v3861 = vunpack.c.h.b16 %v2496
    %v3862 = vunpack.c.l.b16 %v2497
    %v3863 = vunpack.c.h.b16 %v2497
    %v3864 = vunpack.c.l.b16 %v2498
    %v3865 = vunpack.c.h.b16 %v2498
    %v3866 = vunpack.c.l.b16 %v2499
    %v3867 = vunpack.c.l.b16 %v2500
    %v3868 = vunpack.c.h.b16 %v2500
    %v3869 = vunpack.c.l.b16 %v2501
    %v3870 = vunpack.c.h.b16 %v2501
    %v3871 = vunpack.c.l.b16 %v2502
    %v3872 = vunpack.c.h.b16 %v2502
    %v3873 = vunpack.c.l.b16 %v2503
    %v3874 = vunpack.c.l.b16 %v2504
    %v3875 = vunpack.c.h.b16 %v2504
    %v3876 = vunpack.c.l.b16 %v2505
    %v3877 = vunpack.c.h.b16 %v2505
    %v3878 = vunpack.c.l.b16 %v2506
    %v3879 = vunpack.c.h.b16 %v2506
    %v3880 = vunpack.c.l.b16 %v2507
    %v3881 = vunpack.c.l.b16 %v2508
    %v3882 = vunpack.c.h.b16 %v2508
    %v3883 = vunpack.c.l.b16 %v2509
    %v3884 = vunpack.c.h.b16 %v2509
    %v3885 = vunpack.c.l.b16 %v2510
    %v3886 = vunpack.c.h.b16 %v2510
    %v3887 = vunpack.c.l.b16 %v2511
    %v3888 = vunpack.c.l.b16 %v2512
    %v3889 = vunpack.c.h.b16 %v2512
    %v3890 = vunpack.c.l.b16 %v2513
    %v3891 = vunpack.c.h.b16 %v2513
    %v3892 = vunpack.c.l.b16 %v2514
    %v3893 = vunpack.c.h.b16 %v2514
    %v3894 = vunpack.c.l.b16 %v2515
    %v3895 = vunpack.c.l.b16 %v2516
    %v3896 = vunpack.c.h.b16 %v2516
    %v3897 = vunpack.c.l.b16 %v2517
    %v3898 = vunpack.c.h.b16 %v2517
    %v3899 = vunpack.c.l.b16 %v2518
    %v3900 = vunpack.c.h.b16 %v2518
    %v3901 = vunpack.c.l.b16 %v2519
    %v3902 = vunpack.c.l.b16 %v2520
    %v3903 = vunpack.c.h.b16 %v2520
    %v3904 = vunpack.c.l.b16 %v2521
    %v3905 = vunpack.c.h.b16 %v2521
    %v3906 = vunpack.c.l.b16 %v2522
    %v3907 = vunpack.c.h.b16 %v2522
    %v3908 = vunpack.c.l.b16 %v2523
    %v3909 = vunpack.c.l.b16 %v2524
    %v3910 = vunpack.c.h.b16 %v2524
    %v3911 = vunpack.c.l.b16 %v2525
    %v3912 = vunpack.c.h.b16 %v2525
    %v3913 = vunpack.c.l.b16 %v2526
    %v3914 = vunpack.c.h.b16 %v2526
    %v3915 = vunpack.c.l.b16 %v2527
    %v3916 = vunpack.c.l.b16 %v2528
    %v3917 = vunpack.c.h.b16 %v2528
    %v3918 = vunpack.c.l.b16 %v2529
    %v3919 = vunpack.c.h.b16 %v2529
    %v3920 = vunpack.c.l.b16 %v2530
    %v3921 = vunpack.c.h.b16 %v2530
    %v3922 = vunpack.c.l.b16 %v2531
    %v3923 = vunpack.c.l.b16 %v2532
    %v3924 = vunpack.c.h.b16 %v2532
    %v3925 = vunpack.c.l.b16 %v2533
    %v3926 = vunpack.c.h.b16 %v2533
    %v3927 = vunpack.c.l.b16 %v2534
    %v3928 = vunpack.c.h.b16 %v2534
    %v3929 = vunpack.c.l.b16 %v2535
    %v3930 = vunpack.c.l.b16 %v2536
    %v3931 = vunpack.c.h.b16 %v2536
    %v3932 = vunpack.c.l.b16 %v2537
    %v3933 = vunpack.c.h.b16 %v2537
    %v3934 = vunpack.c.l.b16 %v2538
    %v3935 = vunpack.c.h.b16 %v2538
    %v3936 = vunpack.c.l.b16 %v2539
    %v3937 = vunpack.c.l.b16 %v2540
    %v3938 = vunpack.c.h.b16 %v2540
    %v3939 = vunpack.c.l.b16 %v2541
    %v3940 = vunpack.c.h.b16 %v2541
    %v3941 = vunpack.c.l.b16 %v2542
    %v3942 = vunpack.c.h.b16 %v2542
    %v3943 = vunpack.c.l.b16 %v2543
    %v3944 = vunpack.c.l.b16 %v2544
    %v3945 = vunpack.c.h.b16 %v2544
    %v3946 = vunpack.c.l.b16 %v2545
    %v3947 = vunpack.c.h.b16 %v2545
    %v3948 = vunpack.c.l.b16 %v2546
    %v3949 = vunpack.c.h.b16 %v2546
    %v3950 = vunpack.c.l.b16 %v2547
    %v3951 = vunpack.c.l.b16 %v2548
    %v3952 = vunpack.c.h.b16 %v2548
    %v3953 = vunpack.c.l.b16 %v2549
    %v3954 = vunpack.c.h.b16 %v2549
    %v3955 = vunpack.c.l.b16 %v2550
    %v3956 = vunpack.c.h.b16 %v2550
    %v3957 = vunpack.c.l.b16 %v2551
    %v3958 = vunpack.c.l.b16 %v2552
    %v3959 = vunpack.c.h.b16 %v2552
    %v3960 = vunpack.c.l.b16 %v2553
    %v3961 = vunpack.c.h.b16 %v2553
    %v3962 = vunpack.c.l.b16 %v2554
    %v3963 = vunpack.c.h.b16 %v2554
    %v3964 = vunpack.c.l.b16 %v2555
    %v3965 = vunpack.c.l.b16 %v2556
    %v3966 = vunpack.c.h.b16 %v2556
    %v3967 = vunpack.c.l.b16 %v2557
    %v3968 = vunpack.c.h.b16 %v2557
    %v3969 = vunpack.c.l.b16 %v2558
    %v3970 = vunpack.c.h.b16 %v2558
    %v3971 = vunpack.c.l.b16 %v2559
    %v3972 = vunpack.c.l.b16 %v2560
    %v3973 = vunpack.c.h.b16 %v2560
    %v3974 = vunpack.c.l.b16 %v2561
    %v3975 = vunpack.c.h.b16 %v2561
    %v3976 = vunpack.c.l.b16 %v2562
    %v3977 = vunpack.c.h.b16 %v2562
    %v3978 = vunpack.c.l.b16 %v2563
    %v3979 = vunpack.c.l.b16 %v2564
    %v3980 = vunpack.c.h.b16 %v2564
    %v3981 = vunpack.c.l.b16 %v2565
    %v3982 = vunpack.c.h.b16 %v2565
    %v3983 = vunpack.c.l.b16 %v2566
    %v3984 = vunpack.c.h.b16 %v2566
    %v3985 = vunpack.c.l.b16 %v2567
    %v3986 = vunpack.c.l.b16 %v2568
    %v3987 = vunpack.c.h.b16 %v2568
    %v3988 = vunpack.c.l.b16 %v2569
    %v3989 = vunpack.c.h.b16 %v2569
    %v3990 = vunpack.c.l.b16 %v2570
    %v3991 = vunpack.c.h.b16 %v2570
    %v3992 = vunpack.c.l.b16 %v2571
    %v3993 = vunpack.c.l.b16 %v2572
    %v3994 = vunpack.c.h.b16 %v2572
    %v3995 = vunpack.c.l.b16 %v2573
    %v3996 = vunpack.c.h.b16 %v2573
    %v3997 = vunpack.c.l.b16 %v2574
    %v3998 = vunpack.c.h.b16 %v2574
    %v3999 = vunpack.c.l.b16 %v2575
    %v4000 = vunpack.c.l.b16 %v2576
    %v4001 = vunpack.c.h.b16 %v2576
    %v4002 = vunpack.c.l.b16 %v2577
    %v4003 = vunpack.c.h.b16 %v2577
    %v4004 = vunpack.c.l.b16 %v2578
    %v4005 = vunpack.c.h.b16 %v2578
    %v4006 = vunpack.c.l.b16 %v2579
    %v4007 = vunpack.c.l.b16 %v2580
    %v4008 = vunpack.c.h.b16 %v2580
    %v4009 = vunpack.c.l.b16 %v2581
    %v4010 = vunpack.c.h.b16 %v2581
    %v4011 = vunpack.c.l.b16 %v2582
    %v4012 = vunpack.c.h.b16 %v2582
    %v4013 = vunpack.c.l.b16 %v2583
    %v4014 = vunpack.c.l.b16 %v2584
    %v4015 = vunpack.c.h.b16 %v2584
    %v4016 = vunpack.c.l.b16 %v2585
    %v4017 = vunpack.c.h.b16 %v2585
    %v4018 = vunpack.c.l.b16 %v2586
    %v4019 = vunpack.c.h.b16 %v2586
    %v4020 = vunpack.c.l.b16 %v2587
    %v4021 = vunpack.c.l.b16 %v2588
    %v4022 = vunpack.c.h.b16 %v2588
    %v4023 = vunpack.c.l.b16 %v2589
    %v4024 = vunpack.c.h.b16 %v2589
    %v4025 = vunpack.c.l.b16 %v2590
    %v4026 = vunpack.c.h.b16 %v2590
    %v4027 = vunpack.c.l.b16 %v2591
    %v4028 = vunpack.c.l.b16 %v2592
    %v4029 = vunpack.c.h.b16 %v2592
    %v4030 = vunpack.c.l.b16 %v2593
    %v4031 = vunpack.c.h.b16 %v2593
    %v4032 = vunpack.c.l.b16 %v2594
    %v4033 = vunpack.c.h.b16 %v2594
    %v4034 = vunpack.c.l.b16 %v2595
    %v4035 = vunpack.c.l.b16 %v2596
    %v4036 = vunpack.c.h.b16 %v2596
    %v4037 = vunpack.c.l.b16 %v2597
    %v4038 = vunpack.c.h.b16 %v2597
    %v4039 = vunpack.c.l.b16 %v2598
    %v4040 = vunpack.c.h.b16 %v2598
    %v4041 = vunpack.c.l.b16 %v2599
    %v4042 = vunpack.c.l.b16 %v2600
    %v4043 = vunpack.c.h.b16 %v2600
    %v4044 = vunpack.c.l.b16 %v2601
    %v4045 = vunpack.c.h.b16 %v2601
    %v4046 = vunpack.c.l.b16 %v2602
    %v4047 = vunpack.c.h.b16 %v2602
    %v4048 = vunpack.c.l.b16 %v2603
    %v4049 = vpack.c.b16 %v3160, %v3153
    %v4050 = vpack.c.b16 %v3161, %v3154
    %v4051 = vpack.c.b16 %v3162, %v3155
    %v4052 = vpack.c.b16 %v3163, %v3156
    %v4053 = vpack.c.b16 %v3164, %v3157
    %v4054 = vpack.c.b16 %v3165, %v3158
    %v4055 = vpack.c.b16 %v3166, %v3159
    %v4056 = vpack.c.b16 %v3174, %v3167
    %v4057 = vpack.c.b16 %v3175, %v3168
    %v4058 = vpack.c.b16 %v3176, %v3169
    %v4059 = vpack.c.b16 %v3177, %v3170
    %v4060 = vpack.c.b16 %v3178, %v3171
    %v4061 = vpack.c.b16 %v3179, %v3172
    %v4062 = vpack.c.b16 %v3180, %v3173
    %v4063 = vpack.c.b16 %v3188, %v3181
    %v4064 = vpack.c.b16 %v3189, %v3182
    %v4065 = vpack.c.b16 %v3190, %v3183
    %v4066 = vpack.c.b16 %v3191, %v3184
    %v4067 = vpack.c.b16 %v3192, %v3185
    %v4068 = vpack.c.b16 %v3193, %v3186
    %v4069 = vpack.c.b16 %v3194, %v3187
    %v4070 = vpack.c.b16 %v3202, %v3195
    %v4071 = vpack.c.b16 %v3203, %v3196
    %v4072 = vpack.c.b16 %v3204, %v3197
    %v4073 = vpack.c.b16 %v3205, %v3198
    %v4074 = vpack.c.b16 %v3206, %v3199
    %v4075 = vpack.c.b16 %v3207, %v3200
    %v4076 = vpack.c.b16 %v3208, %v3201
    %v4077 = vpack.c.b16 %v3216, %v3209
    %v4078 = vpack.c.b16 %v3217, %v3210
    %v4079 = vpack.c.b16 %v3218, %v3211
    %v4080 = vpack.c.b16 %v3219, %v3212
    %v4081 = vpack.c.b16 %v3220, %v3213
    %v4082 = vpack.c.b16 %v3221, %v3214
    %v4083 = vpack.c.b16 %v3222, %v3215
    %v4084 = vpack.c.b16 %v3230, %v3223
    %v4085 = vpack.c.b16 %v3231, %v3224
    %v4086 = vpack.c.b16 %v3232, %v3225
    %v4087 = vpack.c.b16 %v3233, %v3226
    %v4088 = vpack.c.b16 %v3234, %v3227
    %v4089 = vpack.c.b16 %v3235, %v3228
    %v4090 = vpack.c.b16 %v3236, %v3229
    %v4091 = vpack.c.b16 %v3244, %v3237
    %v4092 = vpack.c.b16 %v3245, %v3238
    %v4093 = vpack.c.b16 %v3246, %v3239
    %v4094 = vpack.c.b16 %v3247, %v3240
    %v4095 = vpack.c.b16 %v3248, %v3241
    %v4096 = vpack.c.b16 %v3249, %v3242
    %v4097 = vpack.c.b16 %v3250, %v3243
    %v4098 = vpack.c.b16 %v3258, %v3251
    %v4099 = vpack.c.b16 %v3259, %v3252
    %v4100 = vpack.c.b16 %v3260, %v3253
    %v4101 = vpack.c.b16 %v3261, %v3254
    %v4102 = vpack.c.b16 %v3262, %v3255
    %v4103 = vpack.c.b16 %v3263, %v3256
    %v4104 = vpack.c.b16 %v3264, %v3257
    %v4105 = vpack.c.b16 %v3272, %v3265
    %v4106 = vpack.c.b16 %v3273, %v3266
    %v4107 = vpack.c.b16 %v3274, %v3267
    %v4108 = vpack.c.b16 %v3275, %v3268
    %v4109 = vpack.c.b16 %v3276, %v3269
    %v4110 = vpack.c.b16 %v3277, %v3270
    %v4111 = vpack.c.b16 %v3278, %v3271
    %v4112 = vpack.c.b16 %v3286, %v3279
    %v4113 = vpack.c.b16 %v3287, %v3280
    %v4114 = vpack.c.b16 %v3288, %v3281
    %v4115 = vpack.c.b16 %v3289, %v3282
    %v4116 = vpack.c.b16 %v3290, %v3283
    %v4117 = vpack.c.b16 %v3291, %v3284
    %v4118 = vpack.c.b16 %v3292, %v3285
    %v4119 = vpack.c.b16 %v3300, %v3293
    %v4120 = vpack.c.b16 %v3301, %v3294
    %v4121 = vpack.c.b16 %v3302, %v3295
    %v4122 = vpack.c.b16 %v3303, %v3296
    %v4123 = vpack.c.b16 %v3304, %v3297
    %v4124 = vpack.c.b16 %v3305, %v3298
    %v4125 = vpack.c.b16 %v3306, %v3299
    %v4126 = vpack.c.b16 %v3314, %v3307
    %v4127 = vpack.c.b16 %v3315, %v3308
    %v4128 = vpack.c.b16 %v3316, %v3309
    %v4129 = vpack.c.b16 %v3317, %v3310
    %v4130 = vpack.c.b16 %v3318, %v3311
    %v4131 = vpack.c.b16 %v3319, %v3312
    %v4132 = vpack.c.b16 %v3320, %v3313
    %v4133 = vpack.c.b16 %v3328, %v3321
    %v4134 = vpack.c.b16 %v3329, %v3322
    %v4135 = vpack.c.b16 %v3330, %v3323
    %v4136 = vpack.c.b16 %v3331, %v3324
    %v4137 = vpack.c.b16 %v3332, %v3325
    %v4138 = vpack.c.b16 %v3333, %v3326
    %v4139 = vpack.c.b16 %v3334, %v3327
    %v4140 = vpack.c.b16 %v3342, %v3335
    %v4141 = vpack.c.b16 %v3343, %v3336
    %v4142 = vpack.c.b16 %v3344, %v3337
    %v4143 = vpack.c.b16 %v3345, %v3338
    %v4144 = vpack.c.b16 %v3346, %v3339
    %v4145 = vpack.c.b16 %v3347, %v3340
    %v4146 = vpack.c.b16 %v3348, %v3341
    %v4147 = vpack.c.b16 %v3356, %v3349
    %v4148 = vpack.c.b16 %v3357, %v3350
    %v4149 = vpack.c.b16 %v3358, %v3351
    %v4150 = vpack.c.b16 %v3359, %v3352
    %v4151 = vpack.c.b16 %v3360, %v3353
    %v4152 = vpack.c.b16 %v3361, %v3354
    %v4153 = vpack.c.b16 %v3362, %v3355
    %v4154 = vpack.c.b16 %v3370, %v3363
    %v4155 = vpack.c.b16 %v3371, %v3364
    %v4156 = vpack.c.b16 %v3372, %v3365
    %v4157 = vpack.c.b16 %v3373, %v3366
    %v4158 = vpack.c.b16 %v3374, %v3367
    %v4159 = vpack.c.b16 %v3375, %v3368
    %v4160 = vpack.c.b16 %v3376, %v3369
    %v4161 = vpack.c.b16 %v3384, %v3377
    %v4162 = vpack.c.b16 %v3385, %v3378
    %v4163 = vpack.c.b16 %v3386, %v3379
    %v4164 = vpack.c.b16 %v3387, %v3380
    %v4165 = vpack.c.b16 %v3388, %v3381
    %v4166 = vpack.c.b16 %v3389, %v3382
    %v4167 = vpack.c.b16 %v3390, %v3383
    %v4168 = vpack.c.b16 %v3398, %v3391
    %v4169 = vpack.c.b16 %v3399, %v3392
    %v4170 = vpack.c.b16 %v3400, %v3393
    %v4171 = vpack.c.b16 %v3401, %v3394
    %v4172 = vpack.c.b16 %v3402, %v3395
    %v4173 = vpack.c.b16 %v3403, %v3396
    %v4174 = vpack.c.b16 %v3404, %v3397
    %v4175 = vpack.c.b16 %v3412, %v3405
    %v4176 = vpack.c.b16 %v3413, %v3406
    %v4177 = vpack.c.b16 %v3414, %v3407
    %v4178 = vpack.c.b16 %v3415, %v3408
    %v4179 = vpack.c.b16 %v3416, %v3409
    %v4180 = vpack.c.b16 %v3417, %v3410
    %v4181 = vpack.c.b16 %v3418, %v3411
    %v4182 = vpack.c.b16 %v3426, %v3419
    %v4183 = vpack.c.b16 %v3427, %v3420
    %v4184 = vpack.c.b16 %v3428, %v3421
    %v4185 = vpack.c.b16 %v3429, %v3422
    %v4186 = vpack.c.b16 %v3430, %v3423
    %v4187 = vpack.c.b16 %v3431, %v3424
    %v4188 = vpack.c.b16 %v3432, %v3425
    %v4189 = vpack.c.b16 %v3440, %v3433
    %v4190 = vpack.c.b16 %v3441, %v3434
    %v4191 = vpack.c.b16 %v3442, %v3435
    %v4192 = vpack.c.b16 %v3443, %v3436
    %v4193 = vpack.c.b16 %v3444, %v3437
    %v4194 = vpack.c.b16 %v3445, %v3438
    %v4195 = vpack.c.b16 %v3446, %v3439
    %v4196 = vpack.c.b16 %v3454, %v3447
    %v4197 = vpack.c.b16 %v3455, %v3448
    %v4198 = vpack.c.b16 %v3456, %v3449
    %v4199 = vpack.c.b16 %v3457, %v3450
    %v4200 = vpack.c.b16 %v3458, %v3451
    %v4201 = vpack.c.b16 %v3459, %v3452
    %v4202 = vpack.c.b16 %v3460, %v3453
    %v4203 = vpack.c.b16 %v3468, %v3461
    %v4204 = vpack.c.b16 %v3469, %v3462
    %v4205 = vpack.c.b16 %v3470, %v3463
    %v4206 = vpack.c.b16 %v3471, %v3464
    %v4207 = vpack.c.b16 %v3472, %v3465
    %v4208 = vpack.c.b16 %v3473, %v3466
    %v4209 = vpack.c.b16 %v3474, %v3467
    %v4210 = vpack.c.b16 %v3482, %v3475
    %v4211 = vpack.c.b16 %v3483, %v3476
    %v4212 = vpack.c.b16 %v3484, %v3477
    %v4213 = vpack.c.b16 %v3485, %v3478
    %v4214 = vpack.c.b16 %v3486, %v3479
    %v4215 = vpack.c.b16 %v3487, %v3480
    %v4216 = vpack.c.b16 %v3488, %v3481
    %v4217 = vpack.c.b16 %v3496, %v3489
    %v4218 = vpack.c.b16 %v3497, %v3490
    %v4219 = vpack.c.b16 %v3498, %v3491
    %v4220 = vpack.c.b16 %v3499, %v3492
    %v4221 = vpack.c.b16 %v3500, %v3493
    %v4222 = vpack.c.b16 %v3501, %v3494
    %v4223 = vpack.c.b16 %v3502, %v3495
    %v4224 = vpack.c.b16 %v3510, %v3503
    %v4225 = vpack.c.b16 %v3511, %v3504
    %v4226 = vpack.c.b16 %v3512, %v3505
    %v4227 = vpack.c.b16 %v3513, %v3506
    %v4228 = vpack.c.b16 %v3514, %v3507
    %v4229 = vpack.c.b16 %v3515, %v3508
    %v4230 = vpack.c.b16 %v3516, %v3509
    %v4231 = vpack.c.b16 %v3524, %v3517
    %v4232 = vpack.c.b16 %v3525, %v3518
    %v4233 = vpack.c.b16 %v3526, %v3519
    %v4234 = vpack.c.b16 %v3527, %v3520
    %v4235 = vpack.c.b16 %v3528, %v3521
    %v4236 = vpack.c.b16 %v3529, %v3522
    %v4237 = vpack.c.b16 %v3530, %v3523
    %v4238 = vpack.c.b16 %v3538, %v3531
    %v4239 = vpack.c.b16 %v3539, %v3532
    %v4240 = vpack.c.b16 %v3540, %v3533
    %v4241 = vpack.c.b16 %v3541, %v3534
    %v4242 = vpack.c.b16 %v3542, %v3535
    %v4243 = vpack.c.b16 %v3543, %v3536
    %v4244 = vpack.c.b16 %v3544, %v3537
    %v4245 = vpack.c.b16 %v3552, %v3545
    %v4246 = vpack.c.b16 %v3553, %v3546
    %v4247 = vpack.c.b16 %v3554, %v3547
    %v4248 = vpack.c.b16 %v3555, %v3548
    %v4249 = vpack.c.b16 %v3556, %v3549
    %v4250 = vpack.c.b16 %v3557, %v3550
    %v4251 = vpack.c.b16 %v3558, %v3551
    %v4252 = vpack.c.b16 %v3566, %v3559
    %v4253 = vpack.c.b16 %v3567, %v3560
    %v4254 = vpack.c.b16 %v3568, %v3561
    %v4255 = vpack.c.b16 %v3569, %v3562
    %v4256 = vpack.c.b16 %v3570, %v3563
    %v4257 = vpack.c.b16 %v3571, %v3564
    %v4258 = vpack.c.b16 %v3572, %v3565
    %v4259 = vpack.c.b16 %v3580, %v3573
    %v4260 = vpack.c.b16 %v3581, %v3574
    %v4261 = vpack.c.b16 %v3582, %v3575
    %v4262 = vpack.c.b16 %v3583, %v3576
    %v4263 = vpack.c.b16 %v3584, %v3577
    %v4264 = vpack.c.b16 %v3585, %v3578
    %v4265 = vpack.c.b16 %v3586, %v3579
    %v4266 = vpack.c.b16 %v3594, %v3587
    %v4267 = vpack.c.b16 %v3595, %v3588
    %v4268 = vpack.c.b16 %v3596, %v3589
    %v4269 = vpack.c.b16 %v3597, %v3590
    %v4270 = vpack.c.b16 %v3598, %v3591
    %v4271 = vpack.c.b16 %v3599, %v3592
    %v4272 = vpack.c.b16 %v3600, %v3593
    %v4273 = vpack.c.b16 %v3608, %v3601
    %v4274 = vpack.c.b16 %v3609, %v3602
    %v4275 = vpack.c.b16 %v3610, %v3603
    %v4276 = vpack.c.b16 %v3611, %v3604
    %v4277 = vpack.c.b16 %v3612, %v3605
    %v4278 = vpack.c.b16 %v3613, %v3606
    %v4279 = vpack.c.b16 %v3614, %v3607
    %v4280 = vpack.c.b16 %v3622, %v3615
    %v4281 = vpack.c.b16 %v3623, %v3616
    %v4282 = vpack.c.b16 %v3624, %v3617
    %v4283 = vpack.c.b16 %v3625, %v3618
    %v4284 = vpack.c.b16 %v3626, %v3619
    %v4285 = vpack.c.b16 %v3627, %v3620
    %v4286 = vpack.c.b16 %v3628, %v3621
    %v4287 = vpack.c.b16 %v3636, %v3629
    %v4288 = vpack.c.b16 %v3637, %v3630
    %v4289 = vpack.c.b16 %v3638, %v3631
    %v4290 = vpack.c.b16 %v3639, %v3632
    %v4291 = vpack.c.b16 %v3640, %v3633
    %v4292 = vpack.c.b16 %v3641, %v3634
    %v4293 = vpack.c.b16 %v3642, %v3635
    %v4294 = vpack.c.b16 %v3650, %v3643
    %v4295 = vpack.c.b16 %v3651, %v3644
    %v4296 = vpack.c.b16 %v3652, %v3645
    %v4297 = vpack.c.b16 %v3653, %v3646
    %v4298 = vpack.c.b16 %v3654, %v3647
    %v4299 = vpack.c.b16 %v3655, %v3648
    %v4300 = vpack.c.b16 %v3656, %v3649
    %v4301 = vpack.c.b16 %v3664, %v3657
    %v4302 = vpack.c.b16 %v3665, %v3658
    %v4303 = vpack.c.b16 %v3666, %v3659
    %v4304 = vpack.c.b16 %v3667, %v3660
    %v4305 = vpack.c.b16 %v3668, %v3661
    %v4306 = vpack.c.b16 %v3669, %v3662
    %v4307 = vpack.c.b16 %v3670, %v3663
    %v4308 = vpack.c.b16 %v3678, %v3671
    %v4309 = vpack.c.b16 %v3679, %v3672
    %v4310 = vpack.c.b16 %v3680, %v3673
    %v4311 = vpack.c.b16 %v3681, %v3674
    %v4312 = vpack.c.b16 %v3682, %v3675
    %v4313 = vpack.c.b16 %v3683, %v3676
    %v4314 = vpack.c.b16 %v3684, %v3677
    %v4315 = vpack.c.b16 %v3692, %v3685
    %v4316 = vpack.c.b16 %v3693, %v3686
    %v4317 = vpack.c.b16 %v3694, %v3687
    %v4318 = vpack.c.b16 %v3695, %v3688
    %v4319 = vpack.c.b16 %v3696, %v3689
    %v4320 = vpack.c.b16 %v3697, %v3690
    %v4321 = vpack.c.b16 %v3698, %v3691
    %v4322 = vpack.c.b16 %v3706, %v3699
    %v4323 = vpack.c.b16 %v3707, %v3700
    %v4324 = vpack.c.b16 %v3708, %v3701
    %v4325 = vpack.c.b16 %v3709, %v3702
    %v4326 = vpack.c.b16 %v3710, %v3703
    %v4327 = vpack.c.b16 %v3711, %v3704
    %v4328 = vpack.c.b16 %v3712, %v3705
    %v4329 = vpack.c.b16 %v3720, %v3713
    %v4330 = vpack.c.b16 %v3721, %v3714
    %v4331 = vpack.c.b16 %v3722, %v3715
    %v4332 = vpack.c.b16 %v3723, %v3716
    %v4333 = vpack.c.b16 %v3724, %v3717
    %v4334 = vpack.c.b16 %v3725, %v3718
    %v4335 = vpack.c.b16 %v3726, %v3719
    %v4336 = vpack.c.b16 %v3734, %v3727
    %v4337 = vpack.c.b16 %v3735, %v3728
    %v4338 = vpack.c.b16 %v3736, %v3729
    %v4339 = vpack.c.b16 %v3737, %v3730
    %v4340 = vpack.c.b16 %v3738, %v3731
    %v4341 = vpack.c.b16 %v3739, %v3732
    %v4342 = vpack.c.b16 %v3740, %v3733
    %v4343 = vpack.c.b16 %v3748, %v3741
    %v4344 = vpack.c.b16 %v3749, %v3742
    %v4345 = vpack.c.b16 %v3750, %v3743
    %v4346 = vpack.c.b16 %v3751, %v3744
    %v4347 = vpack.c.b16 %v3752, %v3745
    %v4348 = vpack.c.b16 %v3753, %v3746
    %v4349 = vpack.c.b16 %v3754, %v3747
    %v4350 = vpack.c.b16 %v3762, %v3755
    %v4351 = vpack.c.b16 %v3763, %v3756
    %v4352 = vpack.c.b16 %v3764, %v3757
    %v4353 = vpack.c.b16 %v3765, %v3758
    %v4354 = vpack.c.b16 %v3766, %v3759
    %v4355 = vpack.c.b16 %v3767, %v3760
    %v4356 = vpack.c.b16 %v3768, %v3761
    %v4357 = vpack.c.b16 %v3776, %v3769
    %v4358 = vpack.c.b16 %v3777, %v3770
    %v4359 = vpack.c.b16 %v3778, %v3771
    %v4360 = vpack.c.b16 %v3779, %v3772
    %v4361 = vpack.c.b16 %v3780, %v3773
    %v4362 = vpack.c.b16 %v3781, %v3774
    %v4363 = vpack.c.b16 %v3782, %v3775
    %v4364 = vpack.c.b16 %v3790, %v3783
    %v4365 = vpack.c.b16 %v3791, %v3784
    %v4366 = vpack.c.b16 %v3792, %v3785
    %v4367 = vpack.c.b16 %v3793, %v3786
    %v4368 = vpack.c.b16 %v3794, %v3787
    %v4369 = vpack.c.b16 %v3795, %v3788
    %v4370 = vpack.c.b16 %v3796, %v3789
    %v4371 = vpack.c.b16 %v3804, %v3797
    %v4372 = vpack.c.b16 %v3805, %v3798
    %v4373 = vpack.c.b16 %v3806, %v3799
    %v4374 = vpack.c.b16 %v3807, %v3800
    %v4375 = vpack.c.b16 %v3808, %v3801
    %v4376 = vpack.c.b16 %v3809, %v3802
    %v4377 = vpack.c.b16 %v3810, %v3803
    %v4378 = vpack.c.b16 %v3818, %v3811
    %v4379 = vpack.c.b16 %v3819, %v3812
    %v4380 = vpack.c.b16 %v3820, %v3813
    %v4381 = vpack.c.b16 %v3821, %v3814
    %v4382 = vpack.c.b16 %v3822, %v3815
    %v4383 = vpack.c.b16 %v3823, %v3816
    %v4384 = vpack.c.b16 %v3824, %v3817
    %v4385 = vpack.c.b16 %v3832, %v3825
    %v4386 = vpack.c.b16 %v3833, %v3826
    %v4387 = vpack.c.b16 %v3834, %v3827
    %v4388 = vpack.c.b16 %v3835, %v3828
    %v4389 = vpack.c.b16 %v3836, %v3829
    %v4390 = vpack.c.b16 %v3837, %v3830
    %v4391 = vpack.c.b16 %v3838, %v3831
    %v4392 = vpack.c.b16 %v3846, %v3839
    %v4393 = vpack.c.b16 %v3847, %v3840
    %v4394 = vpack.c.b16 %v3848, %v3841
    %v4395 = vpack.c.b16 %v3849, %v3842
    %v4396 = vpack.c.b16 %v3850, %v3843
    %v4397 = vpack.c.b16 %v3851, %v3844
    %v4398 = vpack.c.b16 %v3852, %v3845
    %v4399 = vpack.c.b16 %v3860, %v3853
    %v4400 = vpack.c.b16 %v3861, %v3854
    %v4401 = vpack.c.b16 %v3862, %v3855
    %v4402 = vpack.c.b16 %v3863, %v3856
    %v4403 = vpack.c.b16 %v3864, %v3857
    %v4404 = vpack.c.b16 %v3865, %v3858
    %v4405 = vpack.c.b16 %v3866, %v3859
    %v4406 = vpack.c.b16 %v3874, %v3867
    %v4407 = vpack.c.b16 %v3875, %v3868
    %v4408 = vpack.c.b16 %v3876, %v3869
    %v4409 = vpack.c.b16 %v3877, %v3870
    %v4410 = vpack.c.b16 %v3878, %v3871
    %v4411 = vpack.c.b16 %v3879, %v3872
    %v4412 = vpack.c.b16 %v3880, %v3873
    %v4413 = vpack.c.b16 %v3888, %v3881
    %v4414 = vpack.c.b16 %v3889, %v3882
    %v4415 = vpack.c.b16 %v3890, %v3883
    %v4416 = vpack.c.b16 %v3891, %v3884
    %v4417 = vpack.c.b16 %v3892, %v3885
    %v4418 = vpack.c.b16 %v3893, %v3886
    %v4419 = vpack.c.b16 %v3894, %v3887
    %v4420 = vpack.c.b16 %v3902, %v3895
    %v4421 = vpack.c.b16 %v3903, %v3896
    %v4422 = vpack.c.b16 %v3904, %v3897
    %v4423 = vpack.c.b16 %v3905, %v3898
    %v4424 = vpack.c.b16 %v3906, %v3899
    %v4425 = vpack.c.b16 %v3907, %v3900
    %v4426 = vpack.c.b16 %v3908, %v3901
    %v4427 = vpack.c.b16 %v3916, %v3909
    %v4428 = vpack.c.b16 %v3917, %v3910
    %v4429 = vpack.c.b16 %v3918, %v3911
    %v4430 = vpack.c.b16 %v3919, %v3912
    %v4431 = vpack.c.b16 %v3920, %v3913
    %v4432 = vpack.c.b16 %v3921, %v3914
    %v4433 = vpack.c.b16 %v3922, %v3915
    %v4434 = vpack.c.b16 %v3930, %v3923
    %v4435 = vpack.c.b16 %v3931, %v3924
    %v4436 = vpack.c.b16 %v3932, %v3925
    %v4437 = vpack.c.b16 %v3933, %v3926
    %v4438 = vpack.c.b16 %v3934, %v3927
    %v4439 = vpack.c.b16 %v3935, %v3928
    %v4440 = vpack.c.b16 %v3936, %v3929
    %v4441 = vpack.c.b16 %v3944, %v3937
    %v4442 = vpack.c.b16 %v3945, %v3938
    %v4443 = vpack.c.b16 %v3946, %v3939
    %v4444 = vpack.c.b16 %v3947, %v3940
    %v4445 = vpack.c.b16 %v3948, %v3941
    %v4446 = vpack.c.b16 %v3949, %v3942
    %v4447 = vpack.c.b16 %v3950, %v3943
    %v4448 = vpack.c.b16 %v3958, %v3951
    %v4449 = vpack.c.b16 %v3959, %v3952
    %v4450 = vpack.c.b16 %v3960, %v3953
    %v4451 = vpack.c.b16 %v3961, %v3954
    %v4452 = vpack.c.b16 %v3962, %v3955
    %v4453 = vpack.c.b16 %v3963, %v3956
    %v4454 = vpack.c.b16 %v3964, %v3957
    %v4455 = vpack.c.b16 %v3972, %v3965
    %v4456 = vpack.c.b16 %v3973, %v3966
    %v4457 = vpack.c.b16 %v3974, %v3967
    %v4458 = vpack.c.b16 %v3975, %v3968
    %v4459 = vpack.c.b16 %v3976, %v3969
    %v4460 = vpack.c.b16 %v3977, %v3970
    %v4461 = vpack.c.b16 %v3978, %v3971
    %v4462 = vpack.c.b16 %v3986, %v3979
    %v4463 = vpack.c.b16 %v3987, %v3980
    %v4464 = vpack.c.b16 %v3988, %v3981
    %v4465 = vpack.c.b16 %v3989, %v3982
    %v4466 = vpack.c.b16 %v3990, %v3983
    %v4467 = vpack.c.b16 %v3991, %v3984
    %v4468 = vpack.c.b16 %v3992, %v3985
    %v4469 = vpack.c.b16 %v4000, %v3993
    %v4470 = vpack.c.b16 %v4001, %v3994
    %v4471 = vpack.c.b16 %v4002, %v3995
    %v4472 = vpack.c.b16 %v4003, %v3996
    %v4473 = vpack.c.b16 %v4004, %v3997
    %v4474 = vpack.c.b16 %v4005, %v3998
    %v4475 = vpack.c.b16 %v4006, %v3999
    %v4476 = vpack.c.b16 %v4014, %v4007
    %v4477 = vpack.c.b16 %v4015, %v4008
    %v4478 = vpack.c.b16 %v4016, %v4009
    %v4479 = vpack.c.b16 %v4017, %v4010
    %v4480 = vpack.c.b16 %v4018, %v4011
    %v4481 = vpack.c.b16 %v4019, %v4012
    %v4482 = vpack.c.b16 %v4020, %v4013
    %v4483 = vpack.c.b16 %v4028, %v4021
    %v4484 = vpack.c.b16 %v4029, %v4022
    %v4485 = vpack.c.b16 %v4030, %v4023
    %v4486 = vpack.c.b16 %v4031, %v4024
    %v4487 = vpack.c.b16 %v4032, %v4025
    %v4488 = vpack.c.b16 %v4033, %v4026
    %v4489 = vpack.c.b16 %v4034, %v4027
    %v4490 = vpack.c.b16 %v4042, %v4035
    %v4491 = vpack.c.b16 %v4043, %v4036
    %v4492 = vpack.c.b16 %v4044, %v4037
    %v4493 = vpack.c.b16 %v4045, %v4038
    %v4494 = vpack.c.b16 %v4046, %v4039
    %v4495 = vpack.c.b16 %v4047, %v4040
    %v4496 = vpack.c.b16 %v4048, %v4041
    %4945 = vmatprep.subr.bf16.mxu0 %v4050
    %4946 = vmatpush1.bf16.msra.mxu0 %v4049
    %4947 = vmatprep.subr.bf16.mxu0 %v4057
    %4948 = vmatpush1.bf16.msra.mxu0 %v4056
    %4949 = vmatprep.subr.bf16.mxu0 %v4064
    %4950 = vmatpush1.bf16.msra.mxu0 %v4063
    %4951 = vmatprep.subr.bf16.mxu0 %v4071
    %4952 = vmatpush1.bf16.msra.mxu0 %v4070
    %4953 = vmatprep.subr.bf16.mxu0 %v4078
    %4954 = vmatpush1.bf16.msra.mxu0 %v4077
    %4955 = vmatprep.subr.bf16.mxu0 %v4085
    %4956 = vmatpush1.bf16.msra.mxu0 %v4084
    %4957 = vmatprep.subr.bf16.mxu0 %v4092
    %4958 = vmatpush1.bf16.msra.mxu0 %v4091
    %4959 = vmatprep.subr.bf16.mxu0 %v4099
    %4960 = vmatpush1.bf16.msra.mxu0 %v4098
    %4961 = vmatprep.subr.bf16.mxu0 %v4106
    %4962 = vmatpush1.bf16.msra.mxu0 %v4105
    %4963 = vmatprep.subr.bf16.mxu0 %v4113
    %4964 = vmatpush1.bf16.msra.mxu0 %v4112
    %4965 = vmatprep.subr.bf16.mxu0 %v4120
    %4966 = vmatpush1.bf16.msra.mxu0 %v4119
    %4967 = vmatprep.subr.bf16.mxu0 %v4127
    %4968 = vmatpush1.bf16.msra.mxu0 %v4126
    %4969 = vmatprep.subr.bf16.mxu0 %v4134
    %4970 = vmatpush1.bf16.msra.mxu0 %v4133
    %4971 = vmatprep.subr.bf16.mxu0 %v4141
    %4972 = vmatpush1.bf16.msra.mxu0 %v4140
    %4973 = vmatprep.subr.bf16.mxu0 %v4148
    %4974 = vmatpush1.bf16.msra.mxu0 %v4147
    %4975 = vmatprep.subr.bf16.mxu0 %v4155
    %4976 = vmatpush1.bf16.msra.mxu0 %v4154
    %4977 = vmatprep.mubr.bf16.mxu0 %v2085
    %4978 = vmatmul.mubr.bf16.gmra.mrb[0].mxu0 %v2084
    %v4979 = vpop.f32.mrb[0].mxu0
    %v4980 = vadd.f32 %v2609, %v4979
    %v4981 = vpop.f32.mrb[0].mxu0
    %v4982 = vadd.f32 %v2613, %v4981
    %v4983 = vpop.f32.mrb[0].mxu0
    %v4984 = vpop.f32.mrb[0].mxu0
    %4985 = vdwg.mxu0
    %4986 = vmatprep.subr.bf16.mxu0 %v4162
    %4987 = vmatpush1.bf16.msra.mxu0 %v4161
    %4988 = vmatprep.subr.bf16.mxu0 %v4169
    %4989 = vmatpush1.bf16.msra.mxu0 %v4168
    %4990 = vmatprep.subr.bf16.mxu0 %v4176
    %4991 = vmatpush1.bf16.msra.mxu0 %v4175
    %4992 = vmatprep.subr.bf16.mxu0 %v4183
    %4993 = vmatpush1.bf16.msra.mxu0 %v4182
    %4994 = vmatprep.subr.bf16.mxu0 %v4190
    %4995 = vmatpush1.bf16.msra.mxu0 %v4189
    %4996 = vmatprep.subr.bf16.mxu0 %v4197
    %4997 = vmatpush1.bf16.msra.mxu0 %v4196
    %4998 = vmatprep.subr.bf16.mxu0 %v4204
    %4999 = vmatpush1.bf16.msra.mxu0 %v4203
    %5000 = vmatprep.subr.bf16.mxu0 %v4211
    %5001 = vmatpush1.bf16.msra.mxu0 %v4210
    %5002 = vmatprep.subr.bf16.mxu0 %v4218
    %5003 = vmatpush1.bf16.msra.mxu0 %v4217
    %5004 = vmatprep.subr.bf16.mxu0 %v4225
    %5005 = vmatpush1.bf16.msra.mxu0 %v4224
    %5006 = vmatprep.subr.bf16.mxu0 %v4232
    %5007 = vmatpush1.bf16.msra.mxu0 %v4231
    %5008 = vmatprep.subr.bf16.mxu0 %v4239
    %5009 = vmatpush1.bf16.msra.mxu0 %v4238
    %5010 = vmatprep.subr.bf16.mxu0 %v4246
    %5011 = vmatpush1.bf16.msra.mxu0 %v4245
    %5012 = vmatprep.subr.bf16.mxu0 %v4253
    %5013 = vmatpush1.bf16.msra.mxu0 %v4252
    %5014 = vmatprep.subr.bf16.mxu0 %v4260
    %5015 = vmatpush1.bf16.msra.mxu0 %v4259
    %5016 = vmatprep.subr.bf16.mxu0 %v4267
    %5017 = vmatpush1.bf16.msra.mxu0 %v4266
    %5018 = vmatprep.mubr.bf16.mxu0 %v2087
    %5019 = vmatmul.mubr.bf16.gmra.mrb[0].mxu0 %v2086
    %v5020 = vpop.f32.mrb[0].mxu0
    %v5021 = vadd.f32 %v4980, %v5020
    %v5022 = vpop.f32.mrb[0].mxu0
    %v5023 = vadd.f32 %v4982, %v5022
    %v5024 = vpop.f32.mrb[0].mxu0
    %v5025 = vpop.f32.mrb[0].mxu0
    %5026 = vdwg.mxu0
    %5027 = vmatprep.subr.bf16.mxu0 %v4274
    %5028 = vmatpush1.bf16.msra.mxu0 %v4273
    %5029 = vmatprep.subr.bf16.mxu0 %v4281
    %5030 = vmatpush1.bf16.msra.mxu0 %v4280
    %5031 = vmatprep.subr.bf16.mxu0 %v4288
    %5032 = vmatpush1.bf16.msra.mxu0 %v4287
    %5033 = vmatprep.subr.bf16.mxu0 %v4295
    %5034 = vmatpush1.bf16.msra.mxu0 %v4294
    %5035 = vmatprep.subr.bf16.mxu0 %v4302
    %5036 = vmatpush1.bf16.msra.mxu0 %v4301
    %5037 = vmatprep.subr.bf16.mxu0 %v4309
    %5038 = vmatpush1.bf16.msra.mxu0 %v4308
    %5039 = vmatprep.subr.bf16.mxu0 %v4316
    %5040 = vmatpush1.bf16.msra.mxu0 %v4315
    %5041 = vmatprep.subr.bf16.mxu0 %v4323
    %5042 = vmatpush1.bf16.msra.mxu0 %v4322
    %5043 = vmatprep.subr.bf16.mxu0 %v4330
    %5044 = vmatpush1.bf16.msra.mxu0 %v4329
    %5045 = vmatprep.subr.bf16.mxu0 %v4337
    %5046 = vmatpush1.bf16.msra.mxu0 %v4336
    %5047 = vmatprep.subr.bf16.mxu0 %v4344
    %5048 = vmatpush1.bf16.msra.mxu0 %v4343
    %5049 = vmatprep.subr.bf16.mxu0 %v4351
    %5050 = vmatpush1.bf16.msra.mxu0 %v4350
    %5051 = vmatprep.subr.bf16.mxu0 %v4358
    %5052 = vmatpush1.bf16.msra.mxu0 %v4357
    %5053 = vmatprep.subr.bf16.mxu0 %v4365
    %5054 = vmatpush1.bf16.msra.mxu0 %v4364
    %5055 = vmatprep.subr.bf16.mxu0 %v4372
    %5056 = vmatpush1.bf16.msra.mxu0 %v4371
    %5057 = vmatprep.subr.bf16.mxu0 %v4379
    %5058 = vmatpush1.bf16.msra.mxu0 %v4378
    %5059 = vmatprep.mubr.bf16.mxu0 %v2089
    %5060 = vmatmul.mubr.bf16.gmra.mrb[0].mxu0 %v2088
    %v5061 = vpop.f32.mrb[0].mxu0
    %v5062 = vadd.f32 %v5021, %v5061
    %v5063 = vpop.f32.mrb[0].mxu0
    %v5064 = vadd.f32 %v5023, %v5063
    %v5065 = vpop.f32.mrb[0].mxu0
    %v5066 = vpop.f32.mrb[0].mxu0
    %5067 = vdwg.mxu0
    %5068 = vmatprep.subr.bf16.mxu0 %v4386
    %5069 = vmatpush1.bf16.msra.mxu0 %v4385
    %5070 = vmatprep.subr.bf16.mxu0 %v4393
    %5071 = vmatpush1.bf16.msra.mxu0 %v4392
    %5072 = vmatprep.subr.bf16.mxu0 %v4400
    %5073 = vmatpush1.bf16.msra.mxu0 %v4399
    %5074 = vmatprep.subr.bf16.mxu0 %v4407
    %5075 = vmatpush1.bf16.msra.mxu0 %v4406
    %5076 = vmatprep.subr.bf16.mxu0 %v4414
    %5077 = vmatpush1.bf16.msra.mxu0 %v4413
    %5078 = vmatprep.subr.bf16.mxu0 %v4421
    %5079 = vmatpush1.bf16.msra.mxu0 %v4420
    %5080 = vmatprep.subr.bf16.mxu0 %v4428
    %5081 = vmatpush1.bf16.msra.mxu0 %v4427
    %5082 = vmatprep.subr.bf16.mxu0 %v4435
    %5083 = vmatpush1.bf16.msra.mxu0 %v4434
    %5084 = vmatprep.subr.bf16.mxu0 %v4442
    %5085 = vmatpush1.bf16.msra.mxu0 %v4441
    %5086 = vmatprep.subr.bf16.mxu0 %v4449
    %5087 = vmatpush1.bf16.msra.mxu0 %v4448
    %5088 = vmatprep.subr.bf16.mxu0 %v4456
    %5089 = vmatpush1.bf16.msra.mxu0 %v4455
    %5090 = vmatprep.subr.bf16.mxu0 %v4463
    %5091 = vmatpush1.bf16.msra.mxu0 %v4462
    %5092 = vmatprep.subr.bf16.mxu0 %v4470
    %5093 = vmatpush1.bf16.msra.mxu0 %v4469
    %5094 = vmatprep.subr.bf16.mxu0 %v4477
    %5095 = vmatpush1.bf16.msra.mxu0 %v4476
    %5096 = vmatprep.subr.bf16.mxu0 %v4484
    %5097 = vmatpush1.bf16.msra.mxu0 %v4483
    %5098 = vmatprep.subr.bf16.mxu0 %v4491
    %5099 = vmatpush1.bf16.msra.mxu0 %v4490
    %5100 = vmatprep.mubr.bf16.mxu0 %v2091
    %5101 = vmatmul.mubr.bf16.gmra.mrb[0].mxu0 %v2090
    %v5102 = vpop.f32.mrb[0].mxu0
    %v5103 = vadd.f32 %v5062, %v5102
    %v5104 = vpop.f32.mrb[0].mxu0
    %v5105 = vadd.f32 %v5064, %v5104
    %v5106 = vpop.f32.mrb[0].mxu0
    %v5107 = vpop.f32.mrb[0].mxu0
    %5108 = vdwg.mxu0
    %5109 = vmatprep.subr.bf16.mxu0 %v4052
    %5110 = vmatpush1.bf16.msra.mxu0 %v4051
    %5111 = vmatprep.subr.bf16.mxu0 %v4059
    %5112 = vmatpush1.bf16.msra.mxu0 %v4058
    %5113 = vmatprep.subr.bf16.mxu0 %v4066
    %5114 = vmatpush1.bf16.msra.mxu0 %v4065
    %5115 = vmatprep.subr.bf16.mxu0 %v4073
    %5116 = vmatpush1.bf16.msra.mxu0 %v4072
    %5117 = vmatprep.subr.bf16.mxu0 %v4080
    %5118 = vmatpush1.bf16.msra.mxu0 %v4079
    %5119 = vmatprep.subr.bf16.mxu0 %v4087
    %5120 = vmatpush1.bf16.msra.mxu0 %v4086
    %5121 = vmatprep.subr.bf16.mxu0 %v4094
    %5122 = vmatpush1.bf16.msra.mxu0 %v4093
    %5123 = vmatprep.subr.bf16.mxu0 %v4101
    %5124 = vmatpush1.bf16.msra.mxu0 %v4100
    %5125 = vmatprep.subr.bf16.mxu0 %v4108
    %5126 = vmatpush1.bf16.msra.mxu0 %v4107
    %5127 = vmatprep.subr.bf16.mxu0 %v4115
    %5128 = vmatpush1.bf16.msra.mxu0 %v4114
    %5129 = vmatprep.subr.bf16.mxu0 %v4122
    %5130 = vmatpush1.bf16.msra.mxu0 %v4121
    %5131 = vmatprep.subr.bf16.mxu0 %v4129
    %5132 = vmatpush1.bf16.msra.mxu0 %v4128
    %5133 = vmatprep.subr.bf16.mxu0 %v4136
    %5134 = vmatpush1.bf16.msra.mxu0 %v4135
    %5135 = vmatprep.subr.bf16.mxu0 %v4143
    %5136 = vmatpush1.bf16.msra.mxu0 %v4142
    %5137 = vmatprep.subr.bf16.mxu0 %v4150
    %5138 = vmatpush1.bf16.msra.mxu0 %v4149
    %5139 = vmatprep.subr.bf16.mxu0 %v4157
    %5140 = vmatpush1.bf16.msra.mxu0 %v4156
    %5141 = vmatprep.mubr.bf16.mxu0 %v2085
    %5142 = vmatmul.mubr.bf16.gmra.mrb[0].mxu0 %v2084
    %v5143 = vpop.f32.mrb[0].mxu0
    %v5144 = vadd.f32 %v2617, %v5143
    %v5145 = vpop.f32.mrb[0].mxu0
    %v5146 = vadd.f32 %v2621, %v5145
    %v5147 = vpop.f32.mrb[0].mxu0
    %v5148 = vpop.f32.mrb[0].mxu0
    %5149 = vdwg.mxu0
    %5150 = vmatprep.subr.bf16.mxu0 %v4164
    %5151 = vmatpush1.bf16.msra.mxu0 %v4163
    %5152 = vmatprep.subr.bf16.mxu0 %v4171
    %5153 = vmatpush1.bf16.msra.mxu0 %v4170
    %5154 = vmatprep.subr.bf16.mxu0 %v4178
    %5155 = vmatpush1.bf16.msra.mxu0 %v4177
    %5156 = vmatprep.subr.bf16.mxu0 %v4185
    %5157 = vmatpush1.bf16.msra.mxu0 %v4184
    %5158 = vmatprep.subr.bf16.mxu0 %v4192
    %5159 = vmatpush1.bf16.msra.mxu0 %v4191
    %5160 = vmatprep.subr.bf16.mxu0 %v4199
    %5161 = vmatpush1.bf16.msra.mxu0 %v4198
    %5162 = vmatprep.subr.bf16.mxu0 %v4206
    %5163 = vmatpush1.bf16.msra.mxu0 %v4205
    %5164 = vmatprep.subr.bf16.mxu0 %v4213
    %5165 = vmatpush1.bf16.msra.mxu0 %v4212
    %5166 = vmatprep.subr.bf16.mxu0 %v4220
    %5167 = vmatpush1.bf16.msra.mxu0 %v4219
    %5168 = vmatprep.subr.bf16.mxu0 %v4227
    %5169 = vmatpush1.bf16.msra.mxu0 %v4226
    %5170 = vmatprep.subr.bf16.mxu0 %v4234
    %5171 = vmatpush1.bf16.msra.mxu0 %v4233
    %5172 = vmatprep.subr.bf16.mxu0 %v4241
    %5173 = vmatpush1.bf16.msra.mxu0 %v4240
    %5174 = vmatprep.subr.bf16.mxu0 %v4248
    %5175 = vmatpush1.bf16.msra.mxu0 %v4247
    %5176 = vmatprep.subr.bf16.mxu0 %v4255
    %5177 = vmatpush1.bf16.msra.mxu0 %v4254
    %5178 = vmatprep.subr.bf16.mxu0 %v4262
    %5179 = vmatpush1.bf16.msra.mxu0 %v4261
    %5180 = vmatprep.subr.bf16.mxu0 %v4269
    %5181 = vmatpush1.bf16.msra.mxu0 %v4268
    %5182 = vmatprep.mubr.bf16.mxu0 %v2087
    %5183 = vmatmul.mubr.bf16.gmra.mrb[0].mxu0 %v2086
    %v5184 = vpop.f32.mrb[0].mxu0
    %v5185 = vadd.f32 %v5144, %v5184
    %v5186 = vpop.f32.mrb[0].mxu0
    %v5187 = vadd.f32 %v5146, %v5186
    %v5188 = vpop.f32.mrb[0].mxu0
    %v5189 = vpop.f32.mrb[0].mxu0
    %5190 = vdwg.mxu0
    %5191 = vmatprep.subr.bf16.mxu0 %v4276
    %5192 = vmatpush1.bf16.msra.mxu0 %v4275
    %5193 = vmatprep.subr.bf16.mxu0 %v4283
    %5194 = vmatpush1.bf16.msra.mxu0 %v4282
    %5195 = vmatprep.subr.bf16.mxu0 %v4290
    %5196 = vmatpush1.bf16.msra.mxu0 %v4289
    %5197 = vmatprep.subr.bf16.mxu0 %v4297
    %5198 = vmatpush1.bf16.msra.mxu0 %v4296
    %5199 = vmatprep.subr.bf16.mxu0 %v4304
    %5200 = vmatpush1.bf16.msra.mxu0 %v4303
    %5201 = vmatprep.subr.bf16.mxu0 %v4311
    %5202 = vmatpush1.bf16.msra.mxu0 %v4310
    %5203 = vmatprep.subr.bf16.mxu0 %v4318
    %5204 = vmatpush1.bf16.msra.mxu0 %v4317
    %5205 = vmatprep.subr.bf16.mxu0 %v4325
    %5206 = vmatpush1.bf16.msra.mxu0 %v4324
    %5207 = vmatprep.subr.bf16.mxu0 %v4332
    %5208 = vmatpush1.bf16.msra.mxu0 %v4331
    %5209 = vmatprep.subr.bf16.mxu0 %v4339
    %5210 = vmatpush1.bf16.msra.mxu0 %v4338
    %5211 = vmatprep.subr.bf16.mxu0 %v4346
    %5212 = vmatpush1.bf16.msra.mxu0 %v4345
    %5213 = vmatprep.subr.bf16.mxu0 %v4353
    %5214 = vmatpush1.bf16.msra.mxu0 %v4352
    %5215 = vmatprep.subr.bf16.mxu0 %v4360
    %5216 = vmatpush1.bf16.msra.mxu0 %v4359
    %5217 = vmatprep.subr.bf16.mxu0 %v4367
    %5218 = vmatpush1.bf16.msra.mxu0 %v4366
    %5219 = vmatprep.subr.bf16.mxu0 %v4374
    %5220 = vmatpush1.bf16.msra.mxu0 %v4373
    %5221 = vmatprep.subr.bf16.mxu0 %v4381
    %5222 = vmatpush1.bf16.msra.mxu0 %v4380
    %5223 = vmatprep.mubr.bf16.mxu0 %v2089
    %5224 = vmatmul.mubr.bf16.gmra.mrb[0].mxu0 %v2088
    %v5225 = vpop.f32.mrb[0].mxu0
    %v5226 = vadd.f32 %v5185, %v5225
    %v5227 = vpop.f32.mrb[0].mxu0
    %v5228 = vadd.f32 %v5187, %v5227
    %v5229 = vpop.f32.mrb[0].mxu0
    %v5230 = vpop.f32.mrb[0].mxu0
    %5231 = vdwg.mxu0
    %5232 = vmatprep.subr.bf16.mxu0 %v4388
    %5233 = vmatpush1.bf16.msra.mxu0 %v4387
    %5234 = vmatprep.subr.bf16.mxu0 %v4395
    %5235 = vmatpush1.bf16.msra.mxu0 %v4394
    %5236 = vmatprep.subr.bf16.mxu0 %v4402
    %5237 = vmatpush1.bf16.msra.mxu0 %v4401
    %5238 = vmatprep.subr.bf16.mxu0 %v4409
    %5239 = vmatpush1.bf16.msra.mxu0 %v4408
    %5240 = vmatprep.subr.bf16.mxu0 %v4416
    %5241 = vmatpush1.bf16.msra.mxu0 %v4415
    %5242 = vmatprep.subr.bf16.mxu0 %v4423
    %5243 = vmatpush1.bf16.msra.mxu0 %v4422
    %5244 = vmatprep.subr.bf16.mxu0 %v4430
    %5245 = vmatpush1.bf16.msra.mxu0 %v4429
    %5246 = vmatprep.subr.bf16.mxu0 %v4437
    %5247 = vmatpush1.bf16.msra.mxu0 %v4436
    %5248 = vmatprep.subr.bf16.mxu0 %v4444
    %5249 = vmatpush1.bf16.msra.mxu0 %v4443
    %5250 = vmatprep.subr.bf16.mxu0 %v4451
    %5251 = vmatpush1.bf16.msra.mxu0 %v4450
    %5252 = vmatprep.subr.bf16.mxu0 %v4458
    %5253 = vmatpush1.bf16.msra.mxu0 %v4457
    %5254 = vmatprep.subr.bf16.mxu0 %v4465
    %5255 = vmatpush1.bf16.msra.mxu0 %v4464
    %5256 = vmatprep.subr.bf16.mxu0 %v4472
    %5257 = vmatpush1.bf16.msra.mxu0 %v4471
    %5258 = vmatprep.subr.bf16.mxu0 %v4479
    %5259 = vmatpush1.bf16.msra.mxu0 %v4478
    %5260 = vmatprep.subr.bf16.mxu0 %v4486
    %5261 = vmatpush1.bf16.msra.mxu0 %v4485
    %5262 = vmatprep.subr.bf16.mxu0 %v4493
    %5263 = vmatpush1.bf16.msra.mxu0 %v4492
    %5264 = vmatprep.mubr.bf16.mxu0 %v2091
    %5265 = vmatmul.mubr.bf16.gmra.mrb[0].mxu0 %v2090
    %v5266 = vpop.f32.mrb[0].mxu0
    %v5267 = vadd.f32 %v5226, %v5266
    %v5268 = vpop.f32.mrb[0].mxu0
    %v5269 = vadd.f32 %v5228, %v5268
    %v5270 = vpop.f32.mrb[0].mxu0
    %v5271 = vpop.f32.mrb[0].mxu0
    %5272 = vdwg.mxu0
    %5273 = vmatprep.subr.bf16.mxu0 %v4054
    %5274 = vmatpush1.bf16.msra.mxu0 %v4053
    %5275 = vmatprep.subr.bf16.mxu0 %v4061
    %5276 = vmatpush1.bf16.msra.mxu0 %v4060
    %5277 = vmatprep.subr.bf16.mxu0 %v4068
    %5278 = vmatpush1.bf16.msra.mxu0 %v4067
    %5279 = vmatprep.subr.bf16.mxu0 %v4075
    %5280 = vmatpush1.bf16.msra.mxu0 %v4074
    %5281 = vmatprep.subr.bf16.mxu0 %v4082
    %5282 = vmatpush1.bf16.msra.mxu0 %v4081
    %5283 = vmatprep.subr.bf16.mxu0 %v4089
    %5284 = vmatpush1.bf16.msra.mxu0 %v4088
    %5285 = vmatprep.subr.bf16.mxu0 %v4096
    %5286 = vmatpush1.bf16.msra.mxu0 %v4095
    %5287 = vmatprep.subr.bf16.mxu0 %v4103
    %5288 = vmatpush1.bf16.msra.mxu0 %v4102
    %5289 = vmatprep.subr.bf16.mxu0 %v4110
    %5290 = vmatpush1.bf16.msra.mxu0 %v4109
    %5291 = vmatprep.subr.bf16.mxu0 %v4117
    %5292 = vmatpush1.bf16.msra.mxu0 %v4116
    %5293 = vmatprep.subr.bf16.mxu0 %v4124
    %5294 = vmatpush1.bf16.msra.mxu0 %v4123
    %5295 = vmatprep.subr.bf16.mxu0 %v4131
    %5296 = vmatpush1.bf16.msra.mxu0 %v4130
    %5297 = vmatprep.subr.bf16.mxu0 %v4138
    %5298 = vmatpush1.bf16.msra.mxu0 %v4137
    %5299 = vmatprep.subr.bf16.mxu0 %v4145
    %5300 = vmatpush1.bf16.msra.mxu0 %v4144
    %5301 = vmatprep.subr.bf16.mxu0 %v4152
    %5302 = vmatpush1.bf16.msra.mxu0 %v4151
    %5303 = vmatprep.subr.bf16.mxu0 %v4159
    %5304 = vmatpush1.bf16.msra.mxu0 %v4158
    %5305 = vmatprep.mubr.bf16.mxu0 %v2085
    %5306 = vmatmul.mubr.bf16.gmra.mrb[0].mxu0 %v2084
    %v5307 = vpop.f32.mrb[0].mxu0
    %v5308 = vadd.f32 %v2625, %v5307
    %v5309 = vpop.f32.mrb[0].mxu0
    %v5310 = vadd.f32 %v2629, %v5309
    %v5311 = vpop.f32.mrb[0].mxu0
    %v5312 = vpop.f32.mrb[0].mxu0
    %5313 = vdwg.mxu0
    %5314 = vmatprep.subr.bf16.mxu0 %v4166
    %5315 = vmatpush1.bf16.msra.mxu0 %v4165
    %5316 = vmatprep.subr.bf16.mxu0 %v4173
    %5317 = vmatpush1.bf16.msra.mxu0 %v4172
    %5318 = vmatprep.subr.bf16.mxu0 %v4180
    %5319 = vmatpush1.bf16.msra.mxu0 %v4179
    %5320 = vmatprep.subr.bf16.mxu0 %v4187
    %5321 = vmatpush1.bf16.msra.mxu0 %v4186
    %5322 = vmatprep.subr.bf16.mxu0 %v4194
    %5323 = vmatpush1.bf16.msra.mxu0 %v4193
    %5324 = vmatprep.subr.bf16.mxu0 %v4201
    %5325 = vmatpush1.bf16.msra.mxu0 %v4200
    %5326 = vmatprep.subr.bf16.mxu0 %v4208
    %5327 = vmatpush1.bf16.msra.mxu0 %v4207
    %5328 = vmatprep.subr.bf16.mxu0 %v4215
    %5329 = vmatpush1.bf16.msra.mxu0 %v4214
    %5330 = vmatprep.subr.bf16.mxu0 %v4222
    %5331 = vmatpush1.bf16.msra.mxu0 %v4221
    %5332 = vmatprep.subr.bf16.mxu0 %v4229
    %5333 = vmatpush1.bf16.msra.mxu0 %v4228
    %5334 = vmatprep.subr.bf16.mxu0 %v4236
    %5335 = vmatpush1.bf16.msra.mxu0 %v4235
    %5336 = vmatprep.subr.bf16.mxu0 %v4243
    %5337 = vmatpush1.bf16.msra.mxu0 %v4242
    %5338 = vmatprep.subr.bf16.mxu0 %v4250
    %5339 = vmatpush1.bf16.msra.mxu0 %v4249
    %5340 = vmatprep.subr.bf16.mxu0 %v4257
    %5341 = vmatpush1.bf16.msra.mxu0 %v4256
    %5342 = vmatprep.subr.bf16.mxu0 %v4264
    %5343 = vmatpush1.bf16.msra.mxu0 %v4263
    %5344 = vmatprep.subr.bf16.mxu0 %v4271
    %5345 = vmatpush1.bf16.msra.mxu0 %v4270
    %5346 = vmatprep.mubr.bf16.mxu0 %v2087
    %5347 = vmatmul.mubr.bf16.gmra.mrb[0].mxu0 %v2086
    %v5348 = vpop.f32.mrb[0].mxu0
    %v5349 = vadd.f32 %v5308, %v5348
    %v5350 = vpop.f32.mrb[0].mxu0
    %v5351 = vadd.f32 %v5310, %v5350
    %v5352 = vpop.f32.mrb[0].mxu0
    %v5353 = vpop.f32.mrb[0].mxu0
    %5354 = vdwg.mxu0
    %5355 = vmatprep.subr.bf16.mxu0 %v4278
    %5356 = vmatpush1.bf16.msra.mxu0 %v4277
    %5357 = vmatprep.subr.bf16.mxu0 %v4285
    %5358 = vmatpush1.bf16.msra.mxu0 %v4284
    %5359 = vmatprep.subr.bf16.mxu0 %v4292
    %5360 = vmatpush1.bf16.msra.mxu0 %v4291
    %5361 = vmatprep.subr.bf16.mxu0 %v4299
    %5362 = vmatpush1.bf16.msra.mxu0 %v4298
    %5363 = vmatprep.subr.bf16.mxu0 %v4306
    %5364 = vmatpush1.bf16.msra.mxu0 %v4305
    %5365 = vmatprep.subr.bf16.mxu0 %v4313
    %5366 = vmatpush1.bf16.msra.mxu0 %v4312
    %5367 = vmatprep.subr.bf16.mxu0 %v4320
    %5368 = vmatpush1.bf16.msra.mxu0 %v4319
    %5369 = vmatprep.subr.bf16.mxu0 %v4327
    %5370 = vmatpush1.bf16.msra.mxu0 %v4326
    %5371 = vmatprep.subr.bf16.mxu0 %v4334
    %5372 = vmatpush1.bf16.msra.mxu0 %v4333
    %5373 = vmatprep.subr.bf16.mxu0 %v4341
    %5374 = vmatpush1.bf16.msra.mxu0 %v4340
    %5375 = vmatprep.subr.bf16.mxu0 %v4348
    %5376 = vmatpush1.bf16.msra.mxu0 %v4347
    %5377 = vmatprep.subr.bf16.mxu0 %v4355
    %5378 = vmatpush1.bf16.msra.mxu0 %v4354
    %5379 = vmatprep.subr.bf16.mxu0 %v4362
    %5380 = vmatpush1.bf16.msra.mxu0 %v4361
    %5381 = vmatprep.subr.bf16.mxu0 %v4369
    %5382 = vmatpush1.bf16.msra.mxu0 %v4368
    %5383 = vmatprep.subr.bf16.mxu0 %v4376
    %5384 = vmatpush1.bf16.msra.mxu0 %v4375
    %5385 = vmatprep.subr.bf16.mxu0 %v4383
    %5386 = vmatpush1.bf16.msra.mxu0 %v4382
    %5387 = vmatprep.mubr.bf16.mxu0 %v2089
    %5388 = vmatmul.mubr.bf16.gmra.mrb[0].mxu0 %v2088
    %v5389 = vpop.f32.mrb[0].mxu0
    %v5390 = vadd.f32 %v5349, %v5389
    %v5391 = vpop.f32.mrb[0].mxu0
    %v5392 = vadd.f32 %v5351, %v5391
    %v5393 = vpop.f32.mrb[0].mxu0
    %v5394 = vpop.f32.mrb[0].mxu0
    %5395 = vdwg.mxu0
    %5396 = vmatprep.subr.bf16.mxu0 %v4390
    %5397 = vmatpush1.bf16.msra.mxu0 %v4389
    %5398 = vmatprep.subr.bf16.mxu0 %v4397
    %5399 = vmatpush1.bf16.msra.mxu0 %v4396
    %5400 = vmatprep.subr.bf16.mxu0 %v4404
    %5401 = vmatpush1.bf16.msra.mxu0 %v4403
    %5402 = vmatprep.subr.bf16.mxu0 %v4411
    %5403 = vmatpush1.bf16.msra.mxu0 %v4410
    %5404 = vmatprep.subr.bf16.mxu0 %v4418
    %5405 = vmatpush1.bf16.msra.mxu0 %v4417
    %5406 = vmatprep.subr.bf16.mxu0 %v4425
    %5407 = vmatpush1.bf16.msra.mxu0 %v4424
    %5408 = vmatprep.subr.bf16.mxu0 %v4432
    %5409 = vmatpush1.bf16.msra.mxu0 %v4431
    %5410 = vmatprep.subr.bf16.mxu0 %v4439
    %5411 = vmatpush1.bf16.msra.mxu0 %v4438
    %5412 = vmatprep.subr.bf16.mxu0 %v4446
    %5413 = vmatpush1.bf16.msra.mxu0 %v4445
    %5414 = vmatprep.subr.bf16.mxu0 %v4453
    %5415 = vmatpush1.bf16.msra.mxu0 %v4452
    %5416 = vmatprep.subr.bf16.mxu0 %v4460
    %5417 = vmatpush1.bf16.msra.mxu0 %v4459
    %5418 = vmatprep.subr.bf16.mxu0 %v4467
    %5419 = vmatpush1.bf16.msra.mxu0 %v4466
    %5420 = vmatprep.subr.bf16.mxu0 %v4474
    %5421 = vmatpush1.bf16.msra.mxu0 %v4473
    %5422 = vmatprep.subr.bf16.mxu0 %v4481
    %5423 = vmatpush1.bf16.msra.mxu0 %v4480
    %5424 = vmatprep.subr.bf16.mxu0 %v4488
    %5425 = vmatpush1.bf16.msra.mxu0 %v4487
    %5426 = vmatprep.subr.bf16.mxu0 %v4495
    %5427 = vmatpush1.bf16.msra.mxu0 %v4494
    %5428 = vmatprep.mubr.bf16.mxu0 %v2091
    %5429 = vmatmul.mubr.bf16.gmra.mrb[0].mxu0 %v2090
    %v5430 = vpop.f32.mrb[0].mxu0
    %v5431 = vadd.f32 %v5390, %v5430
    %v5432 = vpop.f32.mrb[0].mxu0
    %v5433 = vadd.f32 %v5392, %v5432
    %v5434 = vpop.f32.mrb[0].mxu0
    %v5435 = vpop.f32.mrb[0].mxu0
    %5436 = vdwg.mxu0
    %5437 = vmatprep.subr.bf16.mxu0 0
    %5438 = vmatpush1.bf16.msra.mxu0 %v4055
    %5439 = vmatprep.subr.bf16.mxu0 0
    %5440 = vmatpush1.bf16.msra.mxu0 %v4062
    %5441 = vmatprep.subr.bf16.mxu0 0
    %5442 = vmatpush1.bf16.msra.mxu0 %v4069
    %5443 = vmatprep.subr.bf16.mxu0 0
    %5444 = vmatpush1.bf16.msra.mxu0 %v4076
    %5445 = vmatprep.subr.bf16.mxu0 0
    %5446 = vmatpush1.bf16.msra.mxu0 %v4083
    %5447 = vmatprep.subr.bf16.mxu0 0
    %5448 = vmatpush1.bf16.msra.mxu0 %v4090
    %5449 = vmatprep.subr.bf16.mxu0 0
    %5450 = vmatpush1.bf16.msra.mxu0 %v4097
    %5451 = vmatprep.subr.bf16.mxu0 0
    %5452 = vmatpush1.bf16.msra.mxu0 %v4104
    %5453 = vmatprep.subr.bf16.mxu0 0
    %5454 = vmatpush1.bf16.msra.mxu0 %v4111
    %5455 = vmatprep.subr.bf16.mxu0 0
    %5456 = vmatpush1.bf16.msra.mxu0 %v4118
    %5457 = vmatprep.subr.bf16.mxu0 0
    %5458 = vmatpush1.bf16.msra.mxu0 %v4125
    %5459 = vmatprep.subr.bf16.mxu0 0
    %5460 = vmatpush1.bf16.msra.mxu0 %v4132
    %5461 = vmatprep.subr.bf16.mxu0 0
    %5462 = vmatpush1.bf16.msra.mxu0 %v4139
    %5463 = vmatprep.subr.bf16.mxu0 0
    %5464 = vmatpush1.bf16.msra.mxu0 %v4146
    %5465 = vmatprep.subr.bf16.mxu0 0
    %5466 = vmatpush1.bf16.msra.mxu0 %v4153
    %5467 = vmatprep.subr.bf16.mxu0 0
    %5468 = vmatpush1.bf16.msra.mxu0 %v4160
    %5469 = vmatprep.mubr.bf16.mxu0 %v2085
    %5470 = vmatmul.mubr.bf16.gmra.mrb[0].mxu0 %v2084
    %v5471 = vpop.f32.mrb[0].mxu0
    %v5472 = vadd.f32 %v2633, %v5471
    %v5473 = vpop.f32.mrb[0].mxu0
    %v5474 = vpop.f32.mrb[0].mxu0
    %v5475 = vpop.f32.mrb[0].mxu0
    %5476 = vdwg.mxu0
    %5477 = vmatprep.subr.bf16.mxu0 0
    %5478 = vmatpush1.bf16.msra.mxu0 %v4167
    %5479 = vmatprep.subr.bf16.mxu0 0
    %5480 = vmatpush1.bf16.msra.mxu0 %v4174
    %5481 = vmatprep.subr.bf16.mxu0 0
    %5482 = vmatpush1.bf16.msra.mxu0 %v4181
    %5483 = vmatprep.subr.bf16.mxu0 0
    %5484 = vmatpush1.bf16.msra.mxu0 %v4188
    %5485 = vmatprep.subr.bf16.mxu0 0
    %5486 = vmatpush1.bf16.msra.mxu0 %v4195
    %5487 = vmatprep.subr.bf16.mxu0 0
    %5488 = vmatpush1.bf16.msra.mxu0 %v4202
    %5489 = vmatprep.subr.bf16.mxu0 0
    %5490 = vmatpush1.bf16.msra.mxu0 %v4209
    %5491 = vmatprep.subr.bf16.mxu0 0
    %5492 = vmatpush1.bf16.msra.mxu0 %v4216
    %5493 = vmatprep.subr.bf16.mxu0 0
    %5494 = vmatpush1.bf16.msra.mxu0 %v4223
    %5495 = vmatprep.subr.bf16.mxu0 0
    %5496 = vmatpush1.bf16.msra.mxu0 %v4230
    %5497 = vmatprep.subr.bf16.mxu0 0
    %5498 = vmatpush1.bf16.msra.mxu0 %v4237
    %5499 = vmatprep.subr.bf16.mxu0 0
    %5500 = vmatpush1.bf16.msra.mxu0 %v4244
    %5501 = vmatprep.subr.bf16.mxu0 0
    %5502 = vmatpush1.bf16.msra.mxu0 %v4251
    %5503 = vmatprep.subr.bf16.mxu0 0
    %5504 = vmatpush1.bf16.msra.mxu0 %v4258
    %5505 = vmatprep.subr.bf16.mxu0 0
    %5506 = vmatpush1.bf16.msra.mxu0 %v4265
    %5507 = vmatprep.subr.bf16.mxu0 0
    %5508 = vmatpush1.bf16.msra.mxu0 %v4272
    %5509 = vmatprep.mubr.bf16.mxu0 %v2087
    %5510 = vmatmul.mubr.bf16.gmra.mrb[0].mxu0 %v2086
    %v5511 = vpop.f32.mrb[0].mxu0
    %v5512 = vadd.f32 %v5472, %v5511
    %v5513 = vpop.f32.mrb[0].mxu0
    %v5514 = vpop.f32.mrb[0].mxu0
    %v5515 = vpop.f32.mrb[0].mxu0
    %5516 = vdwg.mxu0
    %5517 = vmatprep.subr.bf16.mxu0 0
    %5518 = vmatpush1.bf16.msra.mxu0 %v4279
    %5519 = vmatprep.subr.bf16.mxu0 0
    %5520 = vmatpush1.bf16.msra.mxu0 %v4286
    %5521 = vmatprep.subr.bf16.mxu0 0
    %5522 = vmatpush1.bf16.msra.mxu0 %v4293
    %5523 = vmatprep.subr.bf16.mxu0 0
    %5524 = vmatpush1.bf16.msra.mxu0 %v4300
    %5525 = vmatprep.subr.bf16.mxu0 0
    %5526 = vmatpush1.bf16.msra.mxu0 %v4307
    %5527 = vmatprep.subr.bf16.mxu0 0
    %5528 = vmatpush1.bf16.msra.mxu0 %v4314
    %5529 = vmatprep.subr.bf16.mxu0 0
    %5530 = vmatpush1.bf16.msra.mxu0 %v4321
    %5531 = vmatprep.subr.bf16.mxu0 0
    %5532 = vmatpush1.bf16.msra.mxu0 %v4328
    %5533 = vmatprep.subr.bf16.mxu0 0
    %5534 = vmatpush1.bf16.msra.mxu0 %v4335
    %5535 = vmatprep.subr.bf16.mxu0 0
    %5536 = vmatpush1.bf16.msra.mxu0 %v4342
    %5537 = vmatprep.subr.bf16.mxu0 0
    %5538 = vmatpush1.bf16.msra.mxu0 %v4349
    %5539 = vmatprep.subr.bf16.mxu0 0
    %5540 = vmatpush1.bf16.msra.mxu0 %v4356
    %5541 = vmatprep.subr.bf16.mxu0 0
    %5542 = vmatpush1.bf16.msra.mxu0 %v4363
    %5543 = vmatprep.subr.bf16.mxu0 0
    %5544 = vmatpush1.bf16.msra.mxu0 %v4370
    %5545 = vmatprep.subr.bf16.mxu0 0
    %5546 = vmatpush1.bf16.msra.mxu0 %v4377
    %5547 = vmatprep.subr.bf16.mxu0 0
    %5548 = vmatpush1.bf16.msra.mxu0 %v4384
    %5549 = vmatprep.mubr.bf16.mxu0 %v2089
    %5550 = vmatmul.mubr.bf16.gmra.mrb[0].mxu0 %v2088
    %v5551 = vpop.f32.mrb[0].mxu0
    %v5552 = vadd.f32 %v5512, %v5551
    %v5553 = vpop.f32.mrb[0].mxu0
    %v5554 = vpop.f32.mrb[0].mxu0
    %v5555 = vpop.f32.mrb[0].mxu0
    %5556 = vdwg.mxu0
    %5557 = vmatprep.subr.bf16.mxu0 0
    %5558 = vmatpush1.bf16.msra.mxu0 %v4391
    %5559 = vmatprep.subr.bf16.mxu0 0
    %5560 = vmatpush1.bf16.msra.mxu0 %v4398
    %5561 = vmatprep.subr.bf16.mxu0 0
    %5562 = vmatpush1.bf16.msra.mxu0 %v4405
    %5563 = vmatprep.subr.bf16.mxu0 0
    %5564 = vmatpush1.bf16.msra.mxu0 %v4412
    %5565 = vmatprep.subr.bf16.mxu0 0
    %5566 = vmatpush1.bf16.msra.mxu0 %v4419
    %5567 = vmatprep.subr.bf16.mxu0 0
    %5568 = vmatpush1.bf16.msra.mxu0 %v4426
    %5569 = vmatprep.subr.bf16.mxu0 0
    %5570 = vmatpush1.bf16.msra.mxu0 %v4433
    %5571 = vmatprep.subr.bf16.mxu0 0
    %5572 = vmatpush1.bf16.msra.mxu0 %v4440
    %5573 = vmatprep.subr.bf16.mxu0 0
    %5574 = vmatpush1.bf16.msra.mxu0 %v4447
    %5575 = vmatprep.subr.bf16.mxu0 0
    %5576 = vmatpush1.bf16.msra.mxu0 %v4454
    %5577 = vmatprep.subr.bf16.mxu0 0
    %5578 = vmatpush1.bf16.msra.mxu0 %v4461
    %5579 = vmatprep.subr.bf16.mxu0 0
    %5580 = vmatpush1.bf16.msra.mxu0 %v4468
    %5581 = vmatprep.subr.bf16.mxu0 0
    %5582 = vmatpush1.bf16.msra.mxu0 %v4475
    %5583 = vmatprep.subr.bf16.mxu0 0
    %5584 = vmatpush1.bf16.msra.mxu0 %v4482
    %5585 = vmatprep.subr.bf16.mxu0 0
    %5586 = vmatpush1.bf16.msra.mxu0 %v4489
    %5587 = vmatprep.subr.bf16.mxu0 0
    %5588 = vmatpush1.bf16.msra.mxu0 %v4496
    %5589 = vmatprep.mubr.bf16.mxu0 %v2091
    %5590 = vmatmul.mubr.bf16.gmra.mrb[0].mxu0 %v2090
    %v5591 = vpop.f32.mrb[0].mxu0
    %v5592 = vadd.f32 %v5552, %v5591
    %v5593 = vpop.f32.mrb[0].mxu0
    %v5594 = vpop.f32.mrb[0].mxu0
    %v5595 = vpop.f32.mrb[0].mxu0
    %5596 = vdwg.mxu0
    %v5597 = vmul.f32 %v5103, 0.5
    %v5598 = vmul.f32 %v5105, 0.5
    %v5599 = vmul.f32 %v5267, 0.5
    %v5600 = vmul.f32 %v5269, 0.5
    %v5601 = vmul.f32 %v5431, 0.5
    %v5602 = vmul.f32 %v5433, 0.5
    %v5603 = vmul.f32 %v5592, 0.5
    %v5604 = vtanh.pop %v5597
    %v5605 = vtanh.pop %v5598
    %v5606 = vtanh.pop %v5599
    %v5607 = vtanh.pop %v5600
    %v5608 = vtanh.pop %v5601
    %v5609 = vtanh.pop %v5602
    %v5610 = vtanh.pop %v5603
    %v5611 = vadd.f32 %v5604, 1.0
    %v5612 = vadd.f32 %v5605, 1.0
    %v5613 = vadd.f32 %v5606, 1.0
    %v5614 = vadd.f32 %v5607, 1.0
    %v5615 = vadd.f32 %v5608, 1.0
    %v5616 = vadd.f32 %v5609, 1.0
    %v5617 = vadd.f32 %v5610, 1.0
    %v5618 = vmul.f32 %v5611, 0.5
    %v5619 = vmul.f32 %v5612, 0.5
    %v5620 = vmul.f32 %v5613, 0.5
    %v5621 = vmul.f32 %v5614, 0.5
    %v5622 = vmul.f32 %v5615, 0.5
    %v5623 = vmul.f32 %v5616, 0.5
    %v5624 = vmul.f32 %v5617, 0.5
    %5625 = vst [vmem:[#allocation2] sm:$0xff] %v5618
    %5626 = vst [vmem:[#allocation2 + $0x8] sm:$0xff] %v5619
    %5627 = vst [vmem:[#allocation2 + $0x10] sm:$0xff] %v5620
    %5628 = vst [vmem:[#allocation2 + $0x18] sm:$0xff] %v5621
    %5629 = vst [vmem:[#allocation2 + $0x20] sm:$0xff] %v5622
    %5630 = vst [vmem:[#allocation2 + $0x28] sm:$0xff] %v5623
    %5631 = vst.msk [vmem:[#allocation2 + $0x30] sm:$0xff] %vm76, %v5624
    // Predicated region
    $region30: #{recons_forward.1} parent=1 // pred_check
      _
    $region31: #{recons_forward.1} parent=1 // pred_check_branch
      %5633 = sbr.rel (0) target = $region33
    $region32: #{recons_forward.1} parent=1 // pred_region
      %s5635 = ssub.s32 896, 896
      %5636 = vsyncadd [#allocation3], %s5635
      %s5638 = sshll.u32 [#allocation2], 4
      %s5639 = int_to_ptr.vmem [resolvable:$true] %s5638
      %5641 = dma.vmem_to_hbm [thread:$0]  %s5639, 896, %s7, [#allocation3]
    $region33: #{recons_forward.1} parent=1 // pred_fallthru
      _
    // Predicated region
    $region34: #{recons_forward.1} parent=1 // pred_check
      _
    $region35: #{recons_forward.1} parent=1 // pred_check_branch
      %5643 = sbr.rel (0) target = $region37
    $region36: #{recons_forward.1} parent=1 // pred_region
      %5644 = dma.done [#allocation3], 896
    $region37: #{recons_forward.1} parent=1 // pred_fallthru
      _
    %5645 = vsyncpa [#allocation3], 1

</llo_original>
